<compile_context>
chip_gen: v6e
topology: v6e:2x2x1
jax: 0.10.0
libtpu: 0.0.40
codegen_flags: <defaults>
</compile_context>

<pallas_src>
import functools

import jax
import jax.numpy as jnp
from jax.experimental import pallas as pl
from jax.experimental.pallas import tpu as pltpu


def _convblock1_kernel(x_ref, w1_ref, b1_ref, w2_ref, b2_ref,
                       w3_ref, b3_ref, w4t_ref, b4_ref, o_ref, *, H, W):
    """Fused ReplPad+Conv3x3 x4 (+ReLU after 1&2) for one batch element.

    x_ref  : (1, H, W, Cin)      NHWC input tile (VMEM)
    wX_ref : (9*Cin_l, Cout_l)   im2col weights, layers 1..3 (VMEM, whole array)
    bX_ref : (1, Cout_l)         biases, layers 1..3 (VMEM)
    w4t_ref: (Cout4, 9*Cin4)     layer-4 weights, transposed (VMEM)
    b4_ref : (Cout4, 1)          layer-4 bias (VMEM)
    o_ref  : (1, Cout4, H*W)     NCHW-flat, lane-dense output tile (VMEM)
    """
    HW = H * W

    def repl_pad(a):  # (H, W, C) -> (H+2, W+2, C), edge replication in VMEM
        a = jnp.concatenate([a[:1], a, a[-1:]], axis=0)
        a = jnp.concatenate([a[:, :1], a, a[:, -1:]], axis=1)
        return a

    def im2col(a):  # (H, W, C) -> (H*W, 9*C); columns ordered (dy, dx, c)
        c = a.shape[-1]
        p = repl_pad(a)
        cols = [p[dy:dy + H, dx:dx + W, :].reshape(HW, c)
                for dy in range(3) for dx in range(3)]
        return jnp.concatenate(cols, axis=1)

    h = x_ref[0].astype(jnp.float32)                         # (H, W, Cin)

    # conv1 + ReLU
    h = jnp.dot(im2col(h), w1_ref[...],
                preferred_element_type=jnp.float32) + b1_ref[...]
    h = jnp.maximum(h, 0.0).reshape(H, W, -1)
    # conv2 + ReLU
    h = jnp.dot(im2col(h), w2_ref[...],
                preferred_element_type=jnp.float32) + b2_ref[...]
    h = jnp.maximum(h, 0.0).reshape(H, W, -1)
    # conv3 (no ReLU)
    h = jnp.dot(im2col(h), w3_ref[...],
                preferred_element_type=jnp.float32) + b3_ref[...]
    h = h.reshape(H, W, -1)
    # conv4 (no ReLU), computed as W4 @ patches^T so the result is
    # (Cout, H*W): lane-dense unmasked stores, already NCHW-flat.
    p4 = im2col(h)                                           # (H*W, 9*C)
    out = jax.lax.dot_general(
        w4t_ref[...], p4, (((1,), (1,)), ((), ())),
        preferred_element_type=jnp.float32) + b4_ref[...]    # (Cout, H*W)
    o_ref[0] = out.astype(o_ref.dtype)


def convblock1_forward(x_nchw, kernel_params):
    """Fused _ConvBlock1 forward. x: (N, Cin, H, W) NCHW -> (N, Cout, H, W)."""
    N, Cin, H, W = x_nchw.shape
    w4t = kernel_params[6]
    Cout = w4t.shape[0]

    # Only wrapper-side data-movement op: tiny NCHW -> NHWC for the input.
    x_nhwc = jnp.transpose(x_nchw, (0, 2, 3, 1))

    vmem_whole = pl.BlockSpec(memory_space=pltpu.MemorySpace.VMEM)
    kernel = functools.partial(_convblock1_kernel, H=H, W=W)
    out = pl.pallas_call(
        kernel,
        out_shape=jax.ShapeDtypeStruct((N, Cout, H * W), x_nchw.dtype),
        grid=(N,),
        in_specs=[pl.BlockSpec((1, H, W, Cin), lambda n: (n, 0, 0, 0))]
                 + [vmem_whole] * 8,
        out_specs=pl.BlockSpec((1, Cout, H * W), lambda n: (n, 0, 0)),
        compiler_params=pltpu.CompilerParams(
            dimension_semantics=("parallel",)),
    )(x_nhwc, *kernel_params)
    # Free row-major reshape: (N, Cout, H*W) is already NCHW-contiguous.
    return out.reshape(N, Cout, H, W)


def init_conv_params(key, cin, cout, dtype=jnp.float32):
    """Deterministic Conv2d-style init, OIHW layout (like PyTorch)."""
    kw, kb = jax.random.split(key)
    fan_in = cin * 9
    bound = float(1.0 / (fan_in ** 0.5))
    w = jax.random.uniform(kw, (cout, cin, 3, 3), dtype, -bound, bound)
    b = jax.random.uniform(kb, (cout,), dtype, -bound, bound)
    return w, b


class ConvBlock1:
    """Pallas port of _ConvBlock1 (dropout=False)."""
    # TODO(synk): dropout=True path (nn.Dropout before conv4) not implemented;
    # the module default is dropout=False and eval-mode dropout is identity.

    def __init__(self, in_channels, mid1_channels, mid2_channels,
                 out_channels, key):
        keys = jax.random.split(key, 4)
        plan = [(in_channels, mid1_channels), (mid1_channels, mid2_channels),
                (mid2_channels, mid1_channels), (mid1_channels, out_channels)]
        self.layers_oihw = [init_conv_params(k, ci, co)
                            for k, (ci, co) in zip(keys, plan)]

        # Pre-bake kernel-side layouts once (not per forward call).
        def wmat(w):  # OIHW -> (9*Cin, Cout); rows ordered (dy, dx, cin)
            co, ci, kh, kw_ = w.shape
            return jnp.transpose(w, (2, 3, 1, 0)).reshape(kh * kw_ * ci, co)

        (w1, b1), (w2, b2), (w3, b3), (w4, b4) = self.layers_oihw
        co4, ci4 = w4.shape[0], w4.shape[1]
        w4t = jnp.transpose(w4, (0, 2, 3, 1)).reshape(co4, 9 * ci4)
        self.kernel_params = (
            wmat(w1), b1.reshape(1, -1),
            wmat(w2), b2.reshape(1, -1),
            wmat(w3), b3.reshape(1, -1),
            w4t, b4.reshape(-1, 1),
        )

    def __call__(self, x_nchw):
        return convblock1_forward(x_nchw, self.kernel_params)


def reference_forward(block, x_nchw):
    """Pure-JAX reference (lax.conv with edge padding) for a sanity check."""
    h = x_nchw
    relus = [True, True, False, False]
    for (w, b), relu in zip(block.layers_oihw, relus):
        hp = jnp.pad(h, ((0, 0), (0, 0), (1, 1), (1, 1)), mode="edge")
        h = jax.lax.conv_general_dilated(
            hp, w, window_strides=(1, 1), padding="VALID",
            dimension_numbers=("NCHW", "OIHW", "NCHW"))
        h = h + b.reshape(1, -1, 1, 1)
        if relu:
            h = jnp.maximum(h, 0.0)
    return h


if __name__ == "__main__":
    key = jax.random.PRNGKey(0)
    k_x, k_params = jax.random.split(key)

    batch, in_ch, mid1, mid2, out_ch, spatial = 2, 4, 16, 32, 4, 16
    x = jax.random.normal(k_x, (batch, in_ch, spatial, spatial), jnp.float32)

    block = ConvBlock1(in_ch, mid1, mid2, out_ch, k_params)

    y = jax.block_until_ready(block(x))
    assert y.shape == (batch, out_ch, spatial, spatial), y.shape

    y_ref = jax.block_until_ready(reference_forward(block, x))
    assert jnp.allclose(y, y_ref, atol=1e-4, rtol=1e-4), (
        float(jnp.max(jnp.abs(y - y_ref))))

    print("KERNEL_OK")
</pallas_src>

<mosaic_0001>
module attributes {stable_mosaic.version = 11 : i64} {
  func.func @_convblock1_kernel(%arg0: i32, %arg1: memref<1x16x16x4xf32, #tpu.memory_space<vmem>>, %arg2: memref<36x16xf32, #tpu.memory_space<vmem>>, %arg3: memref<1x16xf32, #tpu.memory_space<vmem>>, %arg4: memref<144x32xf32, #tpu.memory_space<vmem>>, %arg5: memref<1x32xf32, #tpu.memory_space<vmem>>, %arg6: memref<288x16xf32, #tpu.memory_space<vmem>>, %arg7: memref<1x16xf32, #tpu.memory_space<vmem>>, %arg8: memref<4x144xf32, #tpu.memory_space<vmem>>, %arg9: memref<4x1xf32, #tpu.memory_space<vmem>>, %arg10: memref<1x4x256xf32, #tpu.memory_space<vmem>>) attributes {dimension_semantics = [#tpu.dimension_semantics<parallel>], iteration_bounds = array<i64: 2>, scalar_prefetch = 0 : i64, scratch_operands = 0 : i64, tpu.core_type = #tpu.core_type<tc>, window_params = [{transform_indices = @transform_0, window_bounds = array<i64: 1, 16, 16, 4>}, {pipeline_mode = #tpu.pipeline_mode<synchronous>, transform_indices = @transform_1, window_bounds = array<i64: 36, 16>}, {pipeline_mode = #tpu.pipeline_mode<synchronous>, transform_indices = @transform_2, window_bounds = array<i64: 1, 16>}, {pipeline_mode = #tpu.pipeline_mode<synchronous>, transform_indices = @transform_3, window_bounds = array<i64: 144, 32>}, {pipeline_mode = #tpu.pipeline_mode<synchronous>, transform_indices = @transform_4, window_bounds = array<i64: 1, 32>}, {pipeline_mode = #tpu.pipeline_mode<synchronous>, transform_indices = @transform_5, window_bounds = array<i64: 288, 16>}, {pipeline_mode = #tpu.pipeline_mode<synchronous>, transform_indices = @transform_6, window_bounds = array<i64: 1, 16>}, {pipeline_mode = #tpu.pipeline_mode<synchronous>, transform_indices = @transform_7, window_bounds = array<i64: 4, 144>}, {pipeline_mode = #tpu.pipeline_mode<synchronous>, transform_indices = @transform_8, window_bounds = array<i64: 4, 1>}, {transform_indices = @transform_9, window_bounds = array<i64: 1, 4, 256>}]} {
    %c0 = arith.constant 0 : index
    %c0_0 = arith.constant 0 : index
    %c0_1 = arith.constant 0 : index
    %c0_2 = arith.constant 0 : index
    %0 = vector.load %arg1[%c0, %c0_0, %c0_1, %c0_2] : memref<1x16x16x4xf32, #tpu.memory_space<vmem>>, vector<1x16x16x4xf32>
    %1 = vector.shape_cast %0 : vector<1x16x16x4xf32> to vector<16x16x4xf32>
    %2 = vector.extract_strided_slice %1 {offsets = [0, 0, 0], sizes = [1, 16, 4], strides = [1, 1, 1]} : vector<16x16x4xf32> to vector<1x16x4xf32>
    %3 = vector.extract_strided_slice %1 {offsets = [15, 0, 0], sizes = [1, 16, 4], strides = [1, 1, 1]} : vector<16x16x4xf32> to vector<1x16x4xf32>
    %4 = tpu.concatenate %2, %1, %3 in 0 : vector<1x16x4xf32>, vector<16x16x4xf32>, vector<1x16x4xf32> -> vector<18x16x4xf32>
    %5 = vector.extract_strided_slice %4 {offsets = [0, 0, 0], sizes = [18, 1, 4], strides = [1, 1, 1]} : vector<18x16x4xf32> to vector<18x1x4xf32>
    %6 = vector.extract_strided_slice %4 {offsets = [0, 15, 0], sizes = [18, 1, 4], strides = [1, 1, 1]} : vector<18x16x4xf32> to vector<18x1x4xf32>
    %7 = tpu.concatenate %5, %4, %6 in 1 : vector<18x1x4xf32>, vector<18x16x4xf32>, vector<18x1x4xf32> -> vector<18x18x4xf32>
    %8 = vector.extract_strided_slice %7 {offsets = [0, 0, 0], sizes = [16, 16, 4], strides = [1, 1, 1]} : vector<18x18x4xf32> to vector<16x16x4xf32>
    %9 = vector.shape_cast %8 : vector<16x16x4xf32> to vector<256x4xf32>
    %10 = vector.extract_strided_slice %7 {offsets = [0, 1, 0], sizes = [16, 16, 4], strides = [1, 1, 1]} : vector<18x18x4xf32> to vector<16x16x4xf32>
    %11 = vector.shape_cast %10 : vector<16x16x4xf32> to vector<256x4xf32>
    %12 = vector.extract_strided_slice %7 {offsets = [0, 2, 0], sizes = [16, 16, 4], strides = [1, 1, 1]} : vector<18x18x4xf32> to vector<16x16x4xf32>
    %13 = vector.shape_cast %12 : vector<16x16x4xf32> to vector<256x4xf32>
    %14 = vector.extract_strided_slice %7 {offsets = [1, 0, 0], sizes = [16, 16, 4], strides = [1, 1, 1]} : vector<18x18x4xf32> to vector<16x16x4xf32>
    %15 = vector.shape_cast %14 : vector<16x16x4xf32> to vector<256x4xf32>
    %16 = vector.extract_strided_slice %7 {offsets = [1, 1, 0], sizes = [16, 16, 4], strides = [1, 1, 1]} : vector<18x18x4xf32> to vector<16x16x4xf32>
    %17 = vector.shape_cast %16 : vector<16x16x4xf32> to vector<256x4xf32>
    %18 = vector.extract_strided_slice %7 {offsets = [1, 2, 0], sizes = [16, 16, 4], strides = [1, 1, 1]} : vector<18x18x4xf32> to vector<16x16x4xf32>
    %19 = vector.shape_cast %18 : vector<16x16x4xf32> to vector<256x4xf32>
    %20 = vector.extract_strided_slice %7 {offsets = [2, 0, 0], sizes = [16, 16, 4], strides = [1, 1, 1]} : vector<18x18x4xf32> to vector<16x16x4xf32>
    %21 = vector.shape_cast %20 : vector<16x16x4xf32> to vector<256x4xf32>
    %22 = vector.extract_strided_slice %7 {offsets = [2, 1, 0], sizes = [16, 16, 4], strides = [1, 1, 1]} : vector<18x18x4xf32> to vector<16x16x4xf32>
    %23 = vector.shape_cast %22 : vector<16x16x4xf32> to vector<256x4xf32>
    %24 = vector.extract_strided_slice %7 {offsets = [2, 2, 0], sizes = [16, 16, 4], strides = [1, 1, 1]} : vector<18x18x4xf32> to vector<16x16x4xf32>
    %25 = vector.shape_cast %24 : vector<16x16x4xf32> to vector<256x4xf32>
    %26 = tpu.concatenate %9, %11, %13, %15, %17, %19, %21, %23, %25 in 1 : vector<256x4xf32>, vector<256x4xf32>, vector<256x4xf32>, vector<256x4xf32>, vector<256x4xf32>, vector<256x4xf32>, vector<256x4xf32>, vector<256x4xf32>, vector<256x4xf32> -> vector<256x36xf32>
    %c0_3 = arith.constant 0 : index
    %c0_4 = arith.constant 0 : index
    %27 = vector.load %arg2[%c0_3, %c0_4] : memref<36x16xf32, #tpu.memory_space<vmem>>, vector<36x16xf32>
    %cst = arith.constant dense<0.000000e+00> : vector<256x16xf32>
    %28 = tpu.matmul %26, %27, %cst {dimension_numbers = #tpu.dot_dimension_numbers<[1], [0], [0], [1], [0, 0, 1, 1], [], []>} : vector<256x36xf32>, vector<36x16xf32>, vector<256x16xf32> -> vector<256x16xf32>
    %c0_5 = arith.constant 0 : index
    %c0_6 = arith.constant 0 : index
    %29 = vector.load %arg3[%c0_5, %c0_6] : memref<1x16xf32, #tpu.memory_space<vmem>>, vector<1x16xf32>
    %30 = vector.broadcast %29 : vector<1x16xf32> to vector<256x16xf32>
    %31 = arith.addf %28, %30 : vector<256x16xf32>
    %cst_7 = arith.constant 0.000000e+00 : f32
    %32 = vector.broadcast %cst_7 : f32 to vector<256x16xf32>
    %33 = arith.maximumf %31, %32 : vector<256x16xf32>
    %34 = vector.shape_cast %33 : vector<256x16xf32> to vector<16x16x16xf32>
    %35 = vector.extract_strided_slice %34 {offsets = [0, 0, 0], sizes = [1, 16, 16], strides = [1, 1, 1]} : vector<16x16x16xf32> to vector<1x16x16xf32>
    %36 = vector.extract_strided_slice %34 {offsets = [15, 0, 0], sizes = [1, 16, 16], strides = [1, 1, 1]} : vector<16x16x16xf32> to vector<1x16x16xf32>
    %37 = tpu.concatenate %35, %34, %36 in 0 : vector<1x16x16xf32>, vector<16x16x16xf32>, vector<1x16x16xf32> -> vector<18x16x16xf32>
    %38 = vector.extract_strided_slice %37 {offsets = [0, 0, 0], sizes = [18, 1, 16], strides = [1, 1, 1]} : vector<18x16x16xf32> to vector<18x1x16xf32>
    %39 = vector.extract_strided_slice %37 {offsets = [0, 15, 0], sizes = [18, 1, 16], strides = [1, 1, 1]} : vector<18x16x16xf32> to vector<18x1x16xf32>
    %40 = tpu.concatenate %38, %37, %39 in 1 : vector<18x1x16xf32>, vector<18x16x16xf32>, vector<18x1x16xf32> -> vector<18x18x16xf32>
    %41 = vector.extract_strided_slice %40 {offsets = [0, 0, 0], sizes = [16, 16, 16], strides = [1, 1, 1]} : vector<18x18x16xf32> to vector<16x16x16xf32>
    %42 = vector.shape_cast %41 : vector<16x16x16xf32> to vector<256x16xf32>
    %43 = vector.extract_strided_slice %40 {offsets = [0, 1, 0], sizes = [16, 16, 16], strides = [1, 1, 1]} : vector<18x18x16xf32> to vector<16x16x16xf32>
    %44 = vector.shape_cast %43 : vector<16x16x16xf32> to vector<256x16xf32>
    %45 = vector.extract_strided_slice %40 {offsets = [0, 2, 0], sizes = [16, 16, 16], strides = [1, 1, 1]} : vector<18x18x16xf32> to vector<16x16x16xf32>
    %46 = vector.shape_cast %45 : vector<16x16x16xf32> to vector<256x16xf32>
    %47 = vector.extract_strided_slice %40 {offsets = [1, 0, 0], sizes = [16, 16, 16], strides = [1, 1, 1]} : vector<18x18x16xf32> to vector<16x16x16xf32>
    %48 = vector.shape_cast %47 : vector<16x16x16xf32> to vector<256x16xf32>
    %49 = vector.extract_strided_slice %40 {offsets = [1, 1, 0], sizes = [16, 16, 16], strides = [1, 1, 1]} : vector<18x18x16xf32> to vector<16x16x16xf32>
    %50 = vector.shape_cast %49 : vector<16x16x16xf32> to vector<256x16xf32>
    %51 = vector.extract_strided_slice %40 {offsets = [1, 2, 0], sizes = [16, 16, 16], strides = [1, 1, 1]} : vector<18x18x16xf32> to vector<16x16x16xf32>
    %52 = vector.shape_cast %51 : vector<16x16x16xf32> to vector<256x16xf32>
    %53 = vector.extract_strided_slice %40 {offsets = [2, 0, 0], sizes = [16, 16, 16], strides = [1, 1, 1]} : vector<18x18x16xf32> to vector<16x16x16xf32>
    %54 = vector.shape_cast %53 : vector<16x16x16xf32> to vector<256x16xf32>
    %55 = vector.extract_strided_slice %40 {offsets = [2, 1, 0], sizes = [16, 16, 16], strides = [1, 1, 1]} : vector<18x18x16xf32> to vector<16x16x16xf32>
    %56 = vector.shape_cast %55 : vector<16x16x16xf32> to vector<256x16xf32>
    %57 = vector.extract_strided_slice %40 {offsets = [2, 2, 0], sizes = [16, 16, 16], strides = [1, 1, 1]} : vector<18x18x16xf32> to vector<16x16x16xf32>
    %58 = vector.shape_cast %57 : vector<16x16x16xf32> to vector<256x16xf32>
    %59 = tpu.concatenate %42, %44, %46, %48, %50, %52, %54, %56, %58 in 1 : vector<256x16xf32>, vector<256x16xf32>, vector<256x16xf32>, vector<256x16xf32>, vector<256x16xf32>, vector<256x16xf32>, vector<256x16xf32>, vector<256x16xf32>, vector<256x16xf32> -> vector<256x144xf32>
    %c0_8 = arith.constant 0 : index
    %c0_9 = arith.constant 0 : index
    %60 = vector.load %arg4[%c0_8, %c0_9] : memref<144x32xf32, #tpu.memory_space<vmem>>, vector<144x32xf32>
    %cst_10 = arith.constant dense<0.000000e+00> : vector<256x32xf32>
    %61 = tpu.matmul %59, %60, %cst_10 {dimension_numbers = #tpu.dot_dimension_numbers<[1], [0], [0], [1], [0, 0, 1, 1], [], []>} : vector<256x144xf32>, vector<144x32xf32>, vector<256x32xf32> -> vector<256x32xf32>
    %c0_11 = arith.constant 0 : index
    %c0_12 = arith.constant 0 : index
    %62 = vector.load %arg5[%c0_11, %c0_12] : memref<1x32xf32, #tpu.memory_space<vmem>>, vector<1x32xf32>
    %63 = vector.broadcast %62 : vector<1x32xf32> to vector<256x32xf32>
    %64 = arith.addf %61, %63 : vector<256x32xf32>
    %cst_13 = arith.constant 0.000000e+00 : f32
    %65 = vector.broadcast %cst_13 : f32 to vector<256x32xf32>
    %66 = arith.maximumf %64, %65 : vector<256x32xf32>
    %67 = vector.shape_cast %66 : vector<256x32xf32> to vector<16x16x32xf32>
    %68 = vector.extract_strided_slice %67 {offsets = [0, 0, 0], sizes = [1, 16, 32], strides = [1, 1, 1]} : vector<16x16x32xf32> to vector<1x16x32xf32>
    %69 = vector.extract_strided_slice %67 {offsets = [15, 0, 0], sizes = [1, 16, 32], strides = [1, 1, 1]} : vector<16x16x32xf32> to vector<1x16x32xf32>
    %70 = tpu.concatenate %68, %67, %69 in 0 : vector<1x16x32xf32>, vector<16x16x32xf32>, vector<1x16x32xf32> -> vector<18x16x32xf32>
    %71 = vector.extract_strided_slice %70 {offsets = [0, 0, 0], sizes = [18, 1, 32], strides = [1, 1, 1]} : vector<18x16x32xf32> to vector<18x1x32xf32>
    %72 = vector.extract_strided_slice %70 {offsets = [0, 15, 0], sizes = [18, 1, 32], strides = [1, 1, 1]} : vector<18x16x32xf32> to vector<18x1x32xf32>
    %73 = tpu.concatenate %71, %70, %72 in 1 : vector<18x1x32xf32>, vector<18x16x32xf32>, vector<18x1x32xf32> -> vector<18x18x32xf32>
    %74 = vector.extract_strided_slice %73 {offsets = [0, 0, 0], sizes = [16, 16, 32], strides = [1, 1, 1]} : vector<18x18x32xf32> to vector<16x16x32xf32>
    %75 = vector.shape_cast %74 : vector<16x16x32xf32> to vector<256x32xf32>
    %76 = vector.extract_strided_slice %73 {offsets = [0, 1, 0], sizes = [16, 16, 32], strides = [1, 1, 1]} : vector<18x18x32xf32> to vector<16x16x32xf32>
    %77 = vector.shape_cast %76 : vector<16x16x32xf32> to vector<256x32xf32>
    %78 = vector.extract_strided_slice %73 {offsets = [0, 2, 0], sizes = [16, 16, 32], strides = [1, 1, 1]} : vector<18x18x32xf32> to vector<16x16x32xf32>
    %79 = vector.shape_cast %78 : vector<16x16x32xf32> to vector<256x32xf32>
    %80 = vector.extract_strided_slice %73 {offsets = [1, 0, 0], sizes = [16, 16, 32], strides = [1, 1, 1]} : vector<18x18x32xf32> to vector<16x16x32xf32>
    %81 = vector.shape_cast %80 : vector<16x16x32xf32> to vector<256x32xf32>
    %82 = vector.extract_strided_slice %73 {offsets = [1, 1, 0], sizes = [16, 16, 32], strides = [1, 1, 1]} : vector<18x18x32xf32> to vector<16x16x32xf32>
    %83 = vector.shape_cast %82 : vector<16x16x32xf32> to vector<256x32xf32>
    %84 = vector.extract_strided_slice %73 {offsets = [1, 2, 0], sizes = [16, 16, 32], strides = [1, 1, 1]} : vector<18x18x32xf32> to vector<16x16x32xf32>
    %85 = vector.shape_cast %84 : vector<16x16x32xf32> to vector<256x32xf32>
    %86 = vector.extract_strided_slice %73 {offsets = [2, 0, 0], sizes = [16, 16, 32], strides = [1, 1, 1]} : vector<18x18x32xf32> to vector<16x16x32xf32>
    %87 = vector.shape_cast %86 : vector<16x16x32xf32> to vector<256x32xf32>
    %88 = vector.extract_strided_slice %73 {offsets = [2, 1, 0], sizes = [16, 16, 32], strides = [1, 1, 1]} : vector<18x18x32xf32> to vector<16x16x32xf32>
    %89 = vector.shape_cast %88 : vector<16x16x32xf32> to vector<256x32xf32>
    %90 = vector.extract_strided_slice %73 {offsets = [2, 2, 0], sizes = [16, 16, 32], strides = [1, 1, 1]} : vector<18x18x32xf32> to vector<16x16x32xf32>
    %91 = vector.shape_cast %90 : vector<16x16x32xf32> to vector<256x32xf32>
    %92 = tpu.concatenate %75, %77, %79, %81, %83, %85, %87, %89, %91 in 1 : vector<256x32xf32>, vector<256x32xf32>, vector<256x32xf32>, vector<256x32xf32>, vector<256x32xf32>, vector<256x32xf32>, vector<256x32xf32>, vector<256x32xf32>, vector<256x32xf32> -> vector<256x288xf32>
    %c0_14 = arith.constant 0 : index
    %c0_15 = arith.constant 0 : index
    %93 = vector.load %arg6[%c0_14, %c0_15] : memref<288x16xf32, #tpu.memory_space<vmem>>, vector<288x16xf32>
    %cst_16 = arith.constant dense<0.000000e+00> : vector<256x16xf32>
    %94 = tpu.matmul %92, %93, %cst_16 {dimension_numbers = #tpu.dot_dimension_numbers<[1], [0], [0], [1], [0, 0, 1, 1], [], []>} : vector<256x288xf32>, vector<288x16xf32>, vector<256x16xf32> -> vector<256x16xf32>
    %c0_17 = arith.constant 0 : index
    %c0_18 = arith.constant 0 : index
    %95 = vector.load %arg7[%c0_17, %c0_18] : memref<1x16xf32, #tpu.memory_space<vmem>>, vector<1x16xf32>
    %96 = vector.broadcast %95 : vector<1x16xf32> to vector<256x16xf32>
    %97 = arith.addf %94, %96 : vector<256x16xf32>
    %98 = vector.shape_cast %97 : vector<256x16xf32> to vector<16x16x16xf32>
    %99 = vector.extract_strided_slice %98 {offsets = [0, 0, 0], sizes = [1, 16, 16], strides = [1, 1, 1]} : vector<16x16x16xf32> to vector<1x16x16xf32>
    %100 = vector.extract_strided_slice %98 {offsets = [15, 0, 0], sizes = [1, 16, 16], strides = [1, 1, 1]} : vector<16x16x16xf32> to vector<1x16x16xf32>
    %101 = tpu.concatenate %99, %98, %100 in 0 : vector<1x16x16xf32>, vector<16x16x16xf32>, vector<1x16x16xf32> -> vector<18x16x16xf32>
    %102 = vector.extract_strided_slice %101 {offsets = [0, 0, 0], sizes = [18, 1, 16], strides = [1, 1, 1]} : vector<18x16x16xf32> to vector<18x1x16xf32>
    %103 = vector.extract_strided_slice %101 {offsets = [0, 15, 0], sizes = [18, 1, 16], strides = [1, 1, 1]} : vector<18x16x16xf32> to vector<18x1x16xf32>
    %104 = tpu.concatenate %102, %101, %103 in 1 : vector<18x1x16xf32>, vector<18x16x16xf32>, vector<18x1x16xf32> -> vector<18x18x16xf32>
    %105 = vector.extract_strided_slice %104 {offsets = [0, 0, 0], sizes = [16, 16, 16], strides = [1, 1, 1]} : vector<18x18x16xf32> to vector<16x16x16xf32>
    %106 = vector.shape_cast %105 : vector<16x16x16xf32> to vector<256x16xf32>
    %107 = vector.extract_strided_slice %104 {offsets = [0, 1, 0], sizes = [16, 16, 16], strides = [1, 1, 1]} : vector<18x18x16xf32> to vector<16x16x16xf32>
    %108 = vector.shape_cast %107 : vector<16x16x16xf32> to vector<256x16xf32>
    %109 = vector.extract_strided_slice %104 {offsets = [0, 2, 0], sizes = [16, 16, 16], strides = [1, 1, 1]} : vector<18x18x16xf32> to vector<16x16x16xf32>
    %110 = vector.shape_cast %109 : vector<16x16x16xf32> to vector<256x16xf32>
    %111 = vector.extract_strided_slice %104 {offsets = [1, 0, 0], sizes = [16, 16, 16], strides = [1, 1, 1]} : vector<18x18x16xf32> to vector<16x16x16xf32>
    %112 = vector.shape_cast %111 : vector<16x16x16xf32> to vector<256x16xf32>
    %113 = vector.extract_strided_slice %104 {offsets = [1, 1, 0], sizes = [16, 16, 16], strides = [1, 1, 1]} : vector<18x18x16xf32> to vector<16x16x16xf32>
    %114 = vector.shape_cast %113 : vector<16x16x16xf32> to vector<256x16xf32>
    %115 = vector.extract_strided_slice %104 {offsets = [1, 2, 0], sizes = [16, 16, 16], strides = [1, 1, 1]} : vector<18x18x16xf32> to vector<16x16x16xf32>
    %116 = vector.shape_cast %115 : vector<16x16x16xf32> to vector<256x16xf32>
    %117 = vector.extract_strided_slice %104 {offsets = [2, 0, 0], sizes = [16, 16, 16], strides = [1, 1, 1]} : vector<18x18x16xf32> to vector<16x16x16xf32>
    %118 = vector.shape_cast %117 : vector<16x16x16xf32> to vector<256x16xf32>
    %119 = vector.extract_strided_slice %104 {offsets = [2, 1, 0], sizes = [16, 16, 16], strides = [1, 1, 1]} : vector<18x18x16xf32> to vector<16x16x16xf32>
    %120 = vector.shape_cast %119 : vector<16x16x16xf32> to vector<256x16xf32>
    %121 = vector.extract_strided_slice %104 {offsets = [2, 2, 0], sizes = [16, 16, 16], strides = [1, 1, 1]} : vector<18x18x16xf32> to vector<16x16x16xf32>
    %122 = vector.shape_cast %121 : vector<16x16x16xf32> to vector<256x16xf32>
    %123 = tpu.concatenate %106, %108, %110, %112, %114, %116, %118, %120, %122 in 1 : vector<256x16xf32>, vector<256x16xf32>, vector<256x16xf32>, vector<256x16xf32>, vector<256x16xf32>, vector<256x16xf32>, vector<256x16xf32>, vector<256x16xf32>, vector<256x16xf32> -> vector<256x144xf32>
    %c0_19 = arith.constant 0 : index
    %c0_20 = arith.constant 0 : index
    %124 = vector.load %arg8[%c0_19, %c0_20] : memref<4x144xf32, #tpu.memory_space<vmem>>, vector<4x144xf32>
    %cst_21 = arith.constant dense<0.000000e+00> : vector<4x256xf32>
    %125 = tpu.matmul %124, %123, %cst_21 {dimension_numbers = #tpu.dot_dimension_numbers<[1], [1], [0], [0], [0, 0, 1, 0], [], []>} : vector<4x144xf32>, vector<256x144xf32>, vector<4x256xf32> -> vector<4x256xf32>
    %c0_22 = arith.constant 0 : index
    %c0_23 = arith.constant 0 : index
    %126 = vector.load %arg9[%c0_22, %c0_23] : memref<4x1xf32, #tpu.memory_space<vmem>>, vector<4x1xf32>
    %127 = vector.broadcast %126 : vector<4x1xf32> to vector<4x256xf32>
    %128 = arith.addf %125, %127 : vector<4x256xf32>
    %c0_24 = arith.constant 0 : index
    %c0_25 = arith.constant 0 : index
    %c0_26 = arith.constant 0 : index
    %129 = vector.load %arg10[%c0_24, %c0_25, %c0_26] : memref<1x4x256xf32, #tpu.memory_space<vmem>>, vector<1x4x256xf32>
    %130 = vector.shape_cast %129 : vector<1x4x256xf32> to vector<4x256xf32>
    %131 = vector.shape_cast %128 : vector<4x256xf32> to vector<1x4x256xf32>
    tpu.vector_store %arg10[%c0_24, %c0_25, %c0_26], %131 {strides = array<i32>} : memref<1x4x256xf32, #tpu.memory_space<vmem>>, vector<1x4x256xf32>,
    return
  }
  func.func @transform_0(%arg0: i32) -> (i32, i32, i32, i32) {
    %c0_i32 = arith.constant 0 : i32
    %c0_i32_0 = arith.constant 0 : i32
    %c0_i32_1 = arith.constant 0 : i32
    %c0_i32_2 = arith.constant 0 : i32
    return %arg0, %c0_i32, %c0_i32_0, %c0_i32_1 : i32, i32, i32, i32
  }
  func.func @transform_1(%arg0: i32) -> (i32, i32) {
    %c0_i32 = arith.constant 0 : i32
    %c0_i32_0 = arith.constant 0 : i32
    %c0_i32_1 = arith.constant 0 : i32
    return %c0_i32, %c0_i32_0 : i32, i32
  }
  func.func @transform_2(%arg0: i32) -> (i32, i32) {
    %c0_i32 = arith.constant 0 : i32
    %c0_i32_0 = arith.constant 0 : i32
    %c0_i32_1 = arith.constant 0 : i32
    return %c0_i32, %c0_i32_0 : i32, i32
  }
  func.func @transform_3(%arg0: i32) -> (i32, i32) {
    %c0_i32 = arith.constant 0 : i32
    %c0_i32_0 = arith.constant 0 : i32
    %c0_i32_1 = arith.constant 0 : i32
    return %c0_i32, %c0_i32_0 : i32, i32
  }
  func.func @transform_4(%arg0: i32) -> (i32, i32) {
    %c0_i32 = arith.constant 0 : i32
    %c0_i32_0 = arith.constant 0 : i32
    %c0_i32_1 = arith.constant 0 : i32
    return %c0_i32, %c0_i32_0 : i32, i32
  }
  func.func @transform_5(%arg0: i32) -> (i32, i32) {
    %c0_i32 = arith.constant 0 : i32
    %c0_i32_0 = arith.constant 0 : i32
    %c0_i32_1 = arith.constant 0 : i32
    return %c0_i32, %c0_i32_0 : i32, i32
  }
  func.func @transform_6(%arg0: i32) -> (i32, i32) {
    %c0_i32 = arith.constant 0 : i32
    %c0_i32_0 = arith.constant 0 : i32
    %c0_i32_1 = arith.constant 0 : i32
    return %c0_i32, %c0_i32_0 : i32, i32
  }
  func.func @transform_7(%arg0: i32) -> (i32, i32) {
    %c0_i32 = arith.constant 0 : i32
    %c0_i32_0 = arith.constant 0 : i32
    %c0_i32_1 = arith.constant 0 : i32
    return %c0_i32, %c0_i32_0 : i32, i32
  }
  func.func @transform_8(%arg0: i32) -> (i32, i32) {
    %c0_i32 = arith.constant 0 : i32
    %c0_i32_0 = arith.constant 0 : i32
    %c0_i32_1 = arith.constant 0 : i32
    return %c0_i32, %c0_i32_0 : i32, i32
  }
  func.func @transform_9(%arg0: i32) -> (i32, i32, i32) {
    %c0_i32 = arith.constant 0 : i32
    %c0_i32_0 = arith.constant 0 : i32
    %c0_i32_1 = arith.constant 0 : i32
    return %arg0, %c0_i32, %c0_i32_0 : i32, i32, i32
  }
}

</mosaic_0001>

<llo_original>
// kernel: tpu_custom_call.1
$region0: #{tpu_custom_call.1}
  #allocation0 [shape = 'u32[]', space=smem, size = 0x4, offset = 0x4, fixed_abs, tag = 'smem constant byte address 0x4 - core index']
  #allocation1 [shape = 'u32[144,128]{1,0:T(1,128)}', space=vmem, size = 0x12000, scoped, tag = 'internal scratch']
  %s0 = inlined_call_operand.vmem [shape: f32[2,16,16,4], index: 0, kind: input, shape index: {}]
  %s1 = inlined_call_operand.vmem [shape: f32[36,16], index: 1, kind: input, shape index: {}]
  %s2 = inlined_call_operand.vmem [shape: f32[1,16], index: 2, kind: input, shape index: {}]
  %s3 = inlined_call_operand.vmem [shape: f32[144,32], index: 3, kind: input, shape index: {}]
  %s4 = inlined_call_operand.vmem [shape: f32[1,32], index: 4, kind: input, shape index: {}]
  %s5 = inlined_call_operand.vmem [shape: f32[288,16], index: 5, kind: input, shape index: {}]
  %s6 = inlined_call_operand.vmem [shape: f32[1,16], index: 6, kind: input, shape index: {}]
  %s7 = inlined_call_operand.vmem [shape: f32[4,144], index: 7, kind: input, shape index: {}]
  %s8 = inlined_call_operand.vmem [shape: f32[4,1], index: 8, kind: input, shape index: {}]
  %s9 = inlined_call_operand.hbm [shape: f32[2,4,256], index: 9, kind: output, shape index: {}]
  %s10 = sld [smem:[#allocation0]]
  $region69: #{tpu_custom_call.1} parent=0
    _
  %s12 = ssub.s32 1, %s10
  %s13 = scalar_select 0, %s12, %s10
  $region1: #{tpu_custom_call.1} parent=0
    #allocation2 [shape = 'u8[8192]{0}', space=vmem, size = 0x2000, scoped, tag = 'output window, operand 0']
    #allocation3 [shape = 's32[2]{0}', space=sflag, size = 0x8, scoped, tag = 'scoped memory for tpu_custom_call.1']
    %14 = vsyncpa [#allocation3], 0
    %s15 = scalar_lea.sflag [#allocation3], 1
    %16 = vsyncpa %s15, 0
    loop: start=0, step=1, limit=4
    $region2: #{tpu_custom_call.1} parent=1 // loop_pre_header
      _
    $region3: #{tpu_custom_call.1} parent=1 // loop_header
      %s18 = sphi 0, %s22
      %p19 = scmp.ge.s32.totalorder %s18, 4
      %s28 = sphi 0, %s30
      %s31 = sphi 0, %s28
      %s32 = sphi 0, %s31
      %s48 = sphi 0, %s32
      %s52 = sphi 0, %s52
      %s54 = sphi 0, %s52
      %s55 = sphi 0, %s54
      %s69 = sphi 0, %s55
      %s73 = sphi 0, %s73
      %s75 = sphi 0, %s73
      %s76 = sphi 0, %s75
      %s90 = sphi 0, %s76
      %s94 = sphi 0, %s94
      %s96 = sphi 0, %s94
      %s97 = sphi 0, %s96
      %s111 = sphi 0, %s97
      %s115 = sphi 0, %s115
      %s117 = sphi 0, %s115
      %s118 = sphi 0, %s117
      %s132 = sphi 0, %s118
      %s136 = sphi 0, %s136
      %s138 = sphi 0, %s136
      %s139 = sphi 0, %s138
      %s153 = sphi 0, %s139
      %s157 = sphi 0, %s157
      %s159 = sphi 0, %s157
      %s160 = sphi 0, %s159
      %s174 = sphi 0, %s160
      %s178 = sphi 0, %s178
      %s180 = sphi 0, %s178
      %s181 = sphi 0, %s180
      %s195 = sphi 0, %s181
      %s199 = sphi 0, %s199
      %s201 = sphi 0, %s199
      %s202 = sphi 0, %s201
      %s216 = sphi 0, %s202
      %s222 = sphi 0, %s224
      %s225 = sphi 0, %s222
      %s226 = sphi 0, %s225
      %s242 = sphi 0, %s226
    $region4: #{tpu_custom_call.1} parent=1 // loop_header_branch
      %21 = sbr.rel (%p19) target = $region8
    $region5: #{tpu_custom_call.1} parent=1 // loop_body
      %s23 = ssub.s32 %s18, 1
      %s24 = ssub.s32 %s18, 2
      %s25 = sadd.s32 %s18, 1
      %s26 = ssub.s32 %s18, %s25
      %p27 = scmp.eq.s32.totalorder %s26, 0
      %s29 = sadd.s32 %s28, 1
      %s30 = scalar_select %p27, %s28, %s29
      %p33 = pneg %p27
      %p34 = scmp.eq.s32.totalorder %s18, 1
      %p35 = por %p33, %p34
      %p36 = scmp.ne.s32.totalorder %s28, %s31
      %p37 = scmp.eq.s32.totalorder %s18, 0
      %p38 = por %p36, %p37
      %p39 = scmp.ne.s32.totalorder %s28, %s31
      %p40 = scmp.eq.s32.totalorder %s23, 1
      %p41 = por %p39, %p40
      %p42 = scmp.ne.s32.totalorder %s31, %s32
      %p43 = scmp.eq.s32.totalorder %s23, 0
      %p44 = por %p42, %p43
      %p45 = scmp.ne.s32.totalorder %s31, %s32
      %p46 = scmp.eq.s32.totalorder %s24, 1
      %p47 = por %p45, %p46
      %p49 = scmp.ne.s32.totalorder %s32, %s48
      %p50 = scmp.eq.s32.totalorder %s24, 0
      %p51 = por %p49, %p50
      %s53 = sadd.s32 %s52, 1
      %p56 = scmp.eq.s32.totalorder %s18, 1
      %p57 = scmp.ne.s32.totalorder %s52, %s54
      %p58 = scmp.eq.s32.totalorder %s18, 0
      %p59 = por %p57, %p58
      %p60 = scmp.ne.s32.totalorder %s52, %s54
      %p61 = scmp.eq.s32.totalorder %s23, 1
      %p62 = por %p60, %p61
      %p63 = scmp.ne.s32.totalorder %s54, %s55
      %p64 = scmp.eq.s32.totalorder %s23, 0
      %p65 = por %p63, %p64
      %p66 = scmp.ne.s32.totalorder %s54, %s55
      %p67 = scmp.eq.s32.totalorder %s24, 1
      %p68 = por %p66, %p67
      %p70 = scmp.ne.s32.totalorder %s55, %s69
      %p71 = scmp.eq.s32.totalorder %s24, 0
      %p72 = por %p70, %p71
      %s74 = sadd.s32 %s73, 1
      %p77 = scmp.eq.s32.totalorder %s18, 1
      %p78 = scmp.ne.s32.totalorder %s73, %s75
      %p79 = scmp.eq.s32.totalorder %s18, 0
      %p80 = por %p78, %p79
      %p81 = scmp.ne.s32.totalorder %s73, %s75
      %p82 = scmp.eq.s32.totalorder %s23, 1
      %p83 = por %p81, %p82
      %p84 = scmp.ne.s32.totalorder %s75, %s76
      %p85 = scmp.eq.s32.totalorder %s23, 0
      %p86 = por %p84, %p85
      %p87 = scmp.ne.s32.totalorder %s75, %s76
      %p88 = scmp.eq.s32.totalorder %s24, 1
      %p89 = por %p87, %p88
      %p91 = scmp.ne.s32.totalorder %s76, %s90
      %p92 = scmp.eq.s32.totalorder %s24, 0
      %p93 = por %p91, %p92
      %s95 = sadd.s32 %s94, 1
      %p98 = scmp.eq.s32.totalorder %s18, 1
      %p99 = scmp.ne.s32.totalorder %s94, %s96
      %p100 = scmp.eq.s32.totalorder %s18, 0
      %p101 = por %p99, %p100
      %p102 = scmp.ne.s32.totalorder %s94, %s96
      %p103 = scmp.eq.s32.totalorder %s23, 1
      %p104 = por %p102, %p103
      %p105 = scmp.ne.s32.totalorder %s96, %s97
      %p106 = scmp.eq.s32.totalorder %s23, 0
      %p107 = por %p105, %p106
      %p108 = scmp.ne.s32.totalorder %s96, %s97
      %p109 = scmp.eq.s32.totalorder %s24, 1
      %p110 = por %p108, %p109
      %p112 = scmp.ne.s32.totalorder %s97, %s111
      %p113 = scmp.eq.s32.totalorder %s24, 0
      %p114 = por %p112, %p113
      %s116 = sadd.s32 %s115, 1
      %p119 = scmp.eq.s32.totalorder %s18, 1
      %p120 = scmp.ne.s32.totalorder %s115, %s117
      %p121 = scmp.eq.s32.totalorder %s18, 0
      %p122 = por %p120, %p121
      %p123 = scmp.ne.s32.totalorder %s115, %s117
      %p124 = scmp.eq.s32.totalorder %s23, 1
      %p125 = por %p123, %p124
      %p126 = scmp.ne.s32.totalorder %s117, %s118
      %p127 = scmp.eq.s32.totalorder %s23, 0
      %p128 = por %p126, %p127
      %p129 = scmp.ne.s32.totalorder %s117, %s118
      %p130 = scmp.eq.s32.totalorder %s24, 1
      %p131 = por %p129, %p130
      %p133 = scmp.ne.s32.totalorder %s118, %s132
      %p134 = scmp.eq.s32.totalorder %s24, 0
      %p135 = por %p133, %p134
      %s137 = sadd.s32 %s136, 1
      %p140 = scmp.eq.s32.totalorder %s18, 1
      %p141 = scmp.ne.s32.totalorder %s136, %s138
      %p142 = scmp.eq.s32.totalorder %s18, 0
      %p143 = por %p141, %p142
      %p144 = scmp.ne.s32.totalorder %s136, %s138
      %p145 = scmp.eq.s32.totalorder %s23, 1
      %p146 = por %p144, %p145
      %p147 = scmp.ne.s32.totalorder %s138, %s139
      %p148 = scmp.eq.s32.totalorder %s23, 0
      %p149 = por %p147, %p148
      %p150 = scmp.ne.s32.totalorder %s138, %s139
      %p151 = scmp.eq.s32.totalorder %s24, 1
      %p152 = por %p150, %p151
      %p154 = scmp.ne.s32.totalorder %s139, %s153
      %p155 = scmp.eq.s32.totalorder %s24, 0
      %p156 = por %p154, %p155
      %s158 = sadd.s32 %s157, 1
      %p161 = scmp.eq.s32.totalorder %s18, 1
      %p162 = scmp.ne.s32.totalorder %s157, %s159
      %p163 = scmp.eq.s32.totalorder %s18, 0
      %p164 = por %p162, %p163
      %p165 = scmp.ne.s32.totalorder %s157, %s159
      %p166 = scmp.eq.s32.totalorder %s23, 1
      %p167 = por %p165, %p166
      %p168 = scmp.ne.s32.totalorder %s159, %s160
      %p169 = scmp.eq.s32.totalorder %s23, 0
      %p170 = por %p168, %p169
      %p171 = scmp.ne.s32.totalorder %s159, %s160
      %p172 = scmp.eq.s32.totalorder %s24, 1
      %p173 = por %p171, %p172
      %p175 = scmp.ne.s32.totalorder %s160, %s174
      %p176 = scmp.eq.s32.totalorder %s24, 0
      %p177 = por %p175, %p176
      %s179 = sadd.s32 %s178, 1
      %p182 = scmp.eq.s32.totalorder %s18, 1
      %p183 = scmp.ne.s32.totalorder %s178, %s180
      %p184 = scmp.eq.s32.totalorder %s18, 0
      %p185 = por %p183, %p184
      %p186 = scmp.ne.s32.totalorder %s178, %s180
      %p187 = scmp.eq.s32.totalorder %s23, 1
      %p188 = por %p186, %p187
      %p189 = scmp.ne.s32.totalorder %s180, %s181
      %p190 = scmp.eq.s32.totalorder %s23, 0
      %p191 = por %p189, %p190
      %p192 = scmp.ne.s32.totalorder %s180, %s181
      %p193 = scmp.eq.s32.totalorder %s24, 1
      %p194 = por %p192, %p193
      %p196 = scmp.ne.s32.totalorder %s181, %s195
      %p197 = scmp.eq.s32.totalorder %s24, 0
      %p198 = por %p196, %p197
      %s200 = sadd.s32 %s199, 1
      %p203 = scmp.eq.s32.totalorder %s18, 1
      %p204 = scmp.ne.s32.totalorder %s199, %s201
      %p205 = scmp.eq.s32.totalorder %s18, 0
      %p206 = por %p204, %p205
      %p207 = scmp.ne.s32.totalorder %s199, %s201
      %p208 = scmp.eq.s32.totalorder %s23, 1
      %p209 = por %p207, %p208
      %p210 = scmp.ne.s32.totalorder %s201, %s202
      %p211 = scmp.eq.s32.totalorder %s23, 0
      %p212 = por %p210, %p211
      %p213 = scmp.ne.s32.totalorder %s201, %s202
      %p214 = scmp.eq.s32.totalorder %s24, 1
      %p215 = por %p213, %p214
      %p217 = scmp.ne.s32.totalorder %s202, %s216
      %p218 = scmp.eq.s32.totalorder %s24, 0
      %p219 = por %p217, %p218
      %s220 = ssub.s32 %s18, %s25
      %p221 = scmp.eq.s32.totalorder %s220, 0
      %s223 = sadd.s32 %s222, 1
      %s224 = scalar_select %p221, %s222, %s223
      %p227 = pneg %p221
      %p228 = scmp.eq.s32.totalorder %s18, 1
      %p229 = por %p227, %p228
      %p230 = scmp.ne.s32.totalorder %s222, %s225
      %p231 = scmp.eq.s32.totalorder %s18, 0
      %p232 = por %p230, %p231
      %p233 = scmp.ne.s32.totalorder %s222, %s225
      %p234 = scmp.eq.s32.totalorder %s23, 1
      %p235 = por %p233, %p234
      %p236 = scmp.ne.s32.totalorder %s225, %s226
      %p237 = scmp.eq.s32.totalorder %s23, 0
      %p238 = por %p236, %p237
      %p239 = scmp.ne.s32.totalorder %s225, %s226
      %p240 = scmp.eq.s32.totalorder %s24, 1
      %p241 = por %p239, %p240
      %p243 = scmp.ne.s32.totalorder %s226, %s242
      %p244 = scmp.eq.s32.totalorder %s24, 0
      %p245 = por %p243, %p244
      %p246 = scmp.le.s32.totalorder 1, %s18
      %p247 = scmp.lt.s32.totalorder %s18, 3
      %p248 = pnand %p246, %p247
      %p249 = pneg %p248
      // Predicated region
      $region9: #{tpu_custom_call.1} parent=5 // pred_check
        _
      $region10: #{tpu_custom_call.1} parent=5 // pred_check_branch
        %251 = sbr.rel (%p248) target = $region12
      $region11: #{tpu_custom_call.1} parent=5 // pred_region
        %s252 = ssub.s32 %s18, 1
        // Predicated region
        $region13: #{tpu_custom_call.1} parent=11 // pred_check
          %p253 = pneg %p65
        $region14: #{tpu_custom_call.1} parent=11 // pred_check_branch
          %255 = sbr.rel (%p253) target = $region16
        $region15: #{tpu_custom_call.1} parent=11 // pred_region
          _
        $region16: #{tpu_custom_call.1} parent=11 // pred_fallthru
          _
        // Predicated region
        $region17: #{tpu_custom_call.1} parent=11 // pred_check
          %p256 = pneg %p86
        $region18: #{tpu_custom_call.1} parent=11 // pred_check_branch
          %258 = sbr.rel (%p256) target = $region20
        $region19: #{tpu_custom_call.1} parent=11 // pred_region
          _
        $region20: #{tpu_custom_call.1} parent=11 // pred_fallthru
          _
        // Predicated region
        $region21: #{tpu_custom_call.1} parent=11 // pred_check
          %p259 = pneg %p107
        $region22: #{tpu_custom_call.1} parent=11 // pred_check_branch
          %261 = sbr.rel (%p259) target = $region24
        $region23: #{tpu_custom_call.1} parent=11 // pred_region
          _
        $region24: #{tpu_custom_call.1} parent=11 // pred_fallthru
          _
        // Predicated region
        $region25: #{tpu_custom_call.1} parent=11 // pred_check
          %p262 = pneg %p128
        $region26: #{tpu_custom_call.1} parent=11 // pred_check_branch
          %264 = sbr.rel (%p262) target = $region28
        $region27: #{tpu_custom_call.1} parent=11 // pred_region
          _
        $region28: #{tpu_custom_call.1} parent=11 // pred_fallthru
          _
        // Predicated region
        $region29: #{tpu_custom_call.1} parent=11 // pred_check
          %p265 = pneg %p149
        $region30: #{tpu_custom_call.1} parent=11 // pred_check_branch
          %267 = sbr.rel (%p265) target = $region32
        $region31: #{tpu_custom_call.1} parent=11 // pred_region
          _
        $region32: #{tpu_custom_call.1} parent=11 // pred_fallthru
          _
        // Predicated region
        $region33: #{tpu_custom_call.1} parent=11 // pred_check
          %p268 = pneg %p170
        $region34: #{tpu_custom_call.1} parent=11 // pred_check_branch
          %270 = sbr.rel (%p268) target = $region36
        $region35: #{tpu_custom_call.1} parent=11 // pred_region
          _
        $region36: #{tpu_custom_call.1} parent=11 // pred_fallthru
          _
        // Predicated region
        $region37: #{tpu_custom_call.1} parent=11 // pred_check
          %p271 = pneg %p191
        $region38: #{tpu_custom_call.1} parent=11 // pred_check_branch
          %273 = sbr.rel (%p271) target = $region40
        $region39: #{tpu_custom_call.1} parent=11 // pred_region
          _
        $region40: #{tpu_custom_call.1} parent=11 // pred_fallthru
          _
        // Predicated region
        $region41: #{tpu_custom_call.1} parent=11 // pred_check
          %p274 = pneg %p212
        $region42: #{tpu_custom_call.1} parent=11 // pred_check_branch
          %276 = sbr.rel (%p274) target = $region44
        $region43: #{tpu_custom_call.1} parent=11 // pred_region
          _
        $region44: #{tpu_custom_call.1} parent=11 // pred_fallthru
          _
      $region12: #{tpu_custom_call.1} parent=5 // pred_fallthru
        _
      %p277 = scmp.lt.s32.totalorder %s18, 2
      // Predicated region
      $region45: #{tpu_custom_call.1} parent=5 // pred_check
        %p278 = pneg %p277
      $region46: #{tpu_custom_call.1} parent=5 // pred_check_branch
        %280 = sbr.rel (%p278) target = $region48
      $region47: #{tpu_custom_call.1} parent=5 // pred_region
        // Predicated region
        $region49: #{tpu_custom_call.1} parent=47 // pred_check
          %p281 = pneg %p38
        $region50: #{tpu_custom_call.1} parent=47 // pred_check_branch
          %283 = sbr.rel (%p281) target = $region52
        $region51: #{tpu_custom_call.1} parent=47 // pred_region
          %p284 = scmp.lt.s32.totalorder %s18, 1
          %s285 = scalar_select %p284, %s18, 1
          %s286 = smul.addr %s285, 32
          %s287 = smul.addr %s286, 8
          %s288 = scalar_lea.vmem %s0, %s287
        $region52: #{tpu_custom_call.1} parent=47 // pred_fallthru
          _
      $region48: #{tpu_custom_call.1} parent=5 // pred_fallthru
        _
      %p289 = scmp.le.s32.totalorder 1, %s18
      %p290 = scmp.lt.s32.totalorder %s18, 3
      %p291 = pnand %p289, %p290
      %p292 = pneg %p291
      // Predicated region
      $region53: #{tpu_custom_call.1} parent=5 // pred_check
        _
      $region54: #{tpu_custom_call.1} parent=5 // pred_check_branch
        %294 = sbr.rel (%p291) target = $region56
      $region55: #{tpu_custom_call.1} parent=5 // pred_region
        %s295 = ssub.s32 %s18, 1
        %p296 = scmp.lt.s32.totalorder %s23, 1
        %s297 = scalar_select %p296, %s23, 1
        %s298 = smul.addr %s297, 32
        %s299 = smul.addr %s298, 8
        %s300 = scalar_lea.vmem %s0, %s299
        %p301 = pneg %p44
        %p302 = pneg %p41
        %p303 = pneg %p65
        %p304 = pneg %p62
        %p305 = pneg %p86
        %p306 = pneg %p83
        %p307 = pneg %p107
        %p308 = pneg %p104
        %p309 = pneg %p128
        %p310 = pneg %p125
        %p311 = pneg %p149
        %p312 = pneg %p146
        %p313 = pneg %p170
        %p314 = pneg %p167
        %p315 = pneg %p191
        %p316 = pneg %p188
        %p317 = pneg %p212
        %p318 = pneg %p209
        %p319 = pneg %p238
        %p320 = pneg %p235
        %s321 = sand.u32 %s225, 1
        %s322 = scalar_lea.sflag [#allocation3], %s321
        %s323 = sand.u32 %s225, 1
        %s324 = smul.addr %s323, 8
        %s325 = scalar_lea.vmem [#allocation2], %s324
        %p326 = scmp.lt.s32.totalorder %s23, 1
        %s327 = scalar_select %p326, %s23, 1
        %s328 = smul.addr %s327, 32
        %s329 = smul.addr %s328, 8
        %s330 = scalar_lea.vmem %s0, %s329
        %v331 = vld [vmem:[%s330] sm:$0xff]
        %v332 = vld [vmem:[%s330 + $0x8] sm:$0xff]
        %v333 = vld [vmem:[%s330 + $0x10] sm:$0xff]
        %v334 = vld [vmem:[%s330 + $0x18] sm:$0xff]
        %v335 = vld [vmem:[%s330 + $0x20] sm:$0xff]
        %v336 = vld [vmem:[%s330 + $0x28] sm:$0xff]
        %v337 = vld [vmem:[%s330 + $0x30] sm:$0xff]
        %v338 = vld [vmem:[%s330 + $0x38] sm:$0xff]
        %v339 = vld [vmem:[%s330 + $0x40] sm:$0xff]
        %v340 = vld [vmem:[%s330 + $0x48] sm:$0xff]
        %v341 = vld [vmem:[%s330 + $0x50] sm:$0xff]
        %v342 = vld [vmem:[%s330 + $0x58] sm:$0xff]
        %v343 = vld [vmem:[%s330 + $0x60] sm:$0xff]
        %v344 = vld [vmem:[%s330 + $0x68] sm:$0xff]
        %v345 = vld [vmem:[%s330 + $0x70] sm:$0xff]
        %v346 = vld [vmem:[%s330 + $0x78] sm:$0xff]
        %v347 = vld [vmem:[%s330 + $0x80] sm:$0xff]
        %v348 = vld [vmem:[%s330 + $0x88] sm:$0xff]
        %v349 = vld [vmem:[%s330 + $0x90] sm:$0xff]
        %v350 = vld [vmem:[%s330 + $0x98] sm:$0xff]
        %v351 = vld [vmem:[%s330 + $0xa0] sm:$0xff]
        %v352 = vld [vmem:[%s330 + $0xa8] sm:$0xff]
        %v353 = vld [vmem:[%s330 + $0xb0] sm:$0xff]
        %v354 = vld [vmem:[%s330 + $0xb8] sm:$0xff]
        %v355 = vld [vmem:[%s330 + $0xc0] sm:$0xff]
        %v356 = vld [vmem:[%s330 + $0xc8] sm:$0xff]
        %v357 = vld [vmem:[%s330 + $0xd0] sm:$0xff]
        %v358 = vld [vmem:[%s330 + $0xd8] sm:$0xff]
        %v359 = vld [vmem:[%s330 + $0xe0] sm:$0xff]
        %v360 = vld [vmem:[%s330 + $0xe8] sm:$0xff]
        %v361 = vld [vmem:[%s330 + $0xf0] sm:$0xff]
        %v362 = vld [vmem:[%s330 + $0xf8] sm:$0xff]
        %vm395 = vcmask 1040384
        %v396 = vrot.slane %v331, 7
        %v397 = vrot.slane %v332, 7
        %v398 = vsel %vm395, %v396, %v397
        %v399 = vrot.slane %v333, 7
        %v400 = vrot.slane %v334, 7
        %v401 = vsel %vm395, %v399, %v400
        %v402 = vrot.slane %v335, 7
        %v403 = vrot.slane %v336, 7
        %v404 = vsel %vm395, %v402, %v403
        %v405 = vrot.slane %v337, 7
        %v406 = vrot.slane %v338, 7
        %v407 = vsel %vm395, %v405, %v406
        %v408 = vrot.slane %v339, 7
        %v409 = vrot.slane %v340, 7
        %v410 = vsel %vm395, %v408, %v409
        %v411 = vrot.slane %v341, 7
        %v412 = vrot.slane %v342, 7
        %v413 = vsel %vm395, %v411, %v412
        %v414 = vrot.slane %v343, 7
        %v415 = vrot.slane %v344, 7
        %v416 = vsel %vm395, %v414, %v415
        %v417 = vrot.slane %v345, 7
        %v418 = vrot.slane %v346, 7
        %v419 = vsel %vm395, %v417, %v418
        %v420 = vrot.slane %v347, 7
        %v421 = vrot.slane %v348, 7
        %v422 = vsel %vm395, %v420, %v421
        %v423 = vrot.slane %v349, 7
        %v424 = vrot.slane %v350, 7
        %v425 = vsel %vm395, %v423, %v424
        %v426 = vrot.slane %v351, 7
        %v427 = vrot.slane %v352, 7
        %v428 = vsel %vm395, %v426, %v427
        %v429 = vrot.slane %v353, 7
        %v430 = vrot.slane %v354, 7
        %v431 = vsel %vm395, %v429, %v430
        %v432 = vrot.slane %v355, 7
        %v433 = vrot.slane %v356, 7
        %v434 = vsel %vm395, %v432, %v433
        %v435 = vrot.slane %v357, 7
        %v436 = vrot.slane %v358, 7
        %v437 = vsel %vm395, %v435, %v436
        %v438 = vrot.slane %v359, 7
        %v439 = vrot.slane %v360, 7
        %v440 = vsel %vm395, %v438, %v439
        %v441 = vrot.slane %v361, 7
        %v442 = vrot.slane %v362, 7
        %v443 = vsel %vm395, %v441, %v442
        %v491 = vrot.slane %v332, 6
        %v492 = vrot.slane %v334, 6
        %v493 = vrot.slane %v336, 6
        %v494 = vrot.slane %v338, 6
        %v495 = vrot.slane %v340, 6
        %v496 = vrot.slane %v342, 6
        %v497 = vrot.slane %v344, 6
        %v498 = vrot.slane %v346, 6
        %v499 = vrot.slane %v348, 6
        %v500 = vrot.slane %v350, 6
        %v501 = vrot.slane %v352, 6
        %v502 = vrot.slane %v354, 6
        %v503 = vrot.slane %v356, 6
        %v504 = vrot.slane %v358, 6
        %v505 = vrot.slane %v360, 6
        %v506 = vrot.slane %v362, 6
        %v523 = vsel %vm395, %v331, %v396
        %v524 = vsel %vm395, %v333, %v399
        %v525 = vsel %vm395, %v335, %v402
        %v526 = vsel %vm395, %v337, %v405
        %v527 = vsel %vm395, %v339, %v408
        %v528 = vsel %vm395, %v341, %v411
        %v529 = vsel %vm395, %v343, %v414
        %v530 = vsel %vm395, %v345, %v417
        %v531 = vsel %vm395, %v347, %v420
        %v532 = vsel %vm395, %v349, %v423
        %v533 = vsel %vm395, %v351, %v426
        %v534 = vsel %vm395, %v353, %v429
        %v535 = vsel %vm395, %v355, %v432
        %v536 = vsel %vm395, %v357, %v435
        %v537 = vsel %vm395, %v359, %v438
        %v538 = vsel %vm395, %v361, %v441
        %v539 = vsel %vm395, %v397, %v491
        %v540 = vsel %vm395, %v400, %v492
        %v541 = vsel %vm395, %v403, %v493
        %v542 = vsel %vm395, %v406, %v494
        %v543 = vsel %vm395, %v409, %v495
        %v544 = vsel %vm395, %v412, %v496
        %v545 = vsel %vm395, %v415, %v497
        %v546 = vsel %vm395, %v418, %v498
        %v547 = vsel %vm395, %v421, %v499
        %v548 = vsel %vm395, %v424, %v500
        %v549 = vsel %vm395, %v427, %v501
        %v550 = vsel %vm395, %v430, %v502
        %v551 = vsel %vm395, %v433, %v503
        %v552 = vsel %vm395, %v436, %v504
        %v553 = vsel %vm395, %v439, %v505
        %v554 = vsel %vm395, %v442, %v506
        %vm585 = vcmask 1046528
        %v586 = vrot.slane %v523, 1
        %v587 = vrot.slane %v398, 1
        %v588 = vsel %vm585, %v586, %v587
        %v589 = vrot.slane %v539, 1
        %v590 = vsel %vm585, %v587, %v589
        %v591 = vrot.slane %v524, 1
        %v592 = vrot.slane %v401, 1
        %v593 = vsel %vm585, %v591, %v592
        %v594 = vrot.slane %v540, 1
        %v595 = vsel %vm585, %v592, %v594
        %v596 = vrot.slane %v525, 1
        %v597 = vrot.slane %v404, 1
        %v598 = vsel %vm585, %v596, %v597
        %v599 = vrot.slane %v541, 1
        %v600 = vsel %vm585, %v597, %v599
        %v601 = vrot.slane %v526, 1
        %v602 = vrot.slane %v407, 1
        %v603 = vsel %vm585, %v601, %v602
        %v604 = vrot.slane %v542, 1
        %v605 = vsel %vm585, %v602, %v604
        %v606 = vrot.slane %v527, 1
        %v607 = vrot.slane %v410, 1
        %v608 = vsel %vm585, %v606, %v607
        %v609 = vrot.slane %v543, 1
        %v610 = vsel %vm585, %v607, %v609
        %v611 = vrot.slane %v528, 1
        %v612 = vrot.slane %v413, 1
        %v613 = vsel %vm585, %v611, %v612
        %v614 = vrot.slane %v544, 1
        %v615 = vsel %vm585, %v612, %v614
        %v616 = vrot.slane %v529, 1
        %v617 = vrot.slane %v416, 1
        %v618 = vsel %vm585, %v616, %v617
        %v619 = vrot.slane %v545, 1
        %v620 = vsel %vm585, %v617, %v619
        %v621 = vrot.slane %v530, 1
        %v622 = vrot.slane %v419, 1
        %v623 = vsel %vm585, %v621, %v622
        %v624 = vrot.slane %v546, 1
        %v625 = vsel %vm585, %v622, %v624
        %v626 = vrot.slane %v531, 1
        %v627 = vrot.slane %v422, 1
        %v628 = vsel %vm585, %v626, %v627
        %v629 = vrot.slane %v547, 1
        %v630 = vsel %vm585, %v627, %v629
        %v631 = vrot.slane %v532, 1
        %v632 = vrot.slane %v425, 1
        %v633 = vsel %vm585, %v631, %v632
        %v634 = vrot.slane %v548, 1
        %v635 = vsel %vm585, %v632, %v634
        %v636 = vrot.slane %v533, 1
        %v637 = vrot.slane %v428, 1
        %v638 = vsel %vm585, %v636, %v637
        %v639 = vrot.slane %v549, 1
        %v640 = vsel %vm585, %v637, %v639
        %v641 = vrot.slane %v534, 1
        %v642 = vrot.slane %v431, 1
        %v643 = vsel %vm585, %v641, %v642
        %v644 = vrot.slane %v550, 1
        %v645 = vsel %vm585, %v642, %v644
        %v646 = vrot.slane %v535, 1
        %v647 = vrot.slane %v434, 1
        %v648 = vsel %vm585, %v646, %v647
        %v649 = vrot.slane %v551, 1
        %v650 = vsel %vm585, %v647, %v649
        %v651 = vrot.slane %v536, 1
        %v652 = vrot.slane %v437, 1
        %v653 = vsel %vm585, %v651, %v652
        %v654 = vrot.slane %v552, 1
        %v655 = vsel %vm585, %v652, %v654
        %v656 = vrot.slane %v537, 1
        %v657 = vrot.slane %v440, 1
        %v658 = vsel %vm585, %v656, %v657
        %v659 = vrot.slane %v553, 1
        %v660 = vsel %vm585, %v657, %v659
        %vm661 = vcmask 1045504
        %v662 = vrot.slane %v523, 2
        %v663 = vrot.slane %v398, 2
        %v664 = vsel %vm661, %v662, %v663
        %v665 = vrot.slane %v539, 2
        %v666 = vsel %vm661, %v663, %v665
        %v667 = vrot.slane %v524, 2
        %v668 = vrot.slane %v401, 2
        %v669 = vsel %vm661, %v667, %v668
        %v670 = vrot.slane %v540, 2
        %v671 = vsel %vm661, %v668, %v670
        %v672 = vrot.slane %v525, 2
        %v673 = vrot.slane %v404, 2
        %v674 = vsel %vm661, %v672, %v673
        %v675 = vrot.slane %v541, 2
        %v676 = vsel %vm661, %v673, %v675
        %v677 = vrot.slane %v526, 2
        %v678 = vrot.slane %v407, 2
        %v679 = vsel %vm661, %v677, %v678
        %v680 = vrot.slane %v542, 2
        %v681 = vsel %vm661, %v678, %v680
        %v682 = vrot.slane %v527, 2
        %v683 = vrot.slane %v410, 2
        %v684 = vsel %vm661, %v682, %v683
        %v685 = vrot.slane %v543, 2
        %v686 = vsel %vm661, %v683, %v685
        %v687 = vrot.slane %v528, 2
        %v688 = vrot.slane %v413, 2
        %v689 = vsel %vm661, %v687, %v688
        %v690 = vrot.slane %v544, 2
        %v691 = vsel %vm661, %v688, %v690
        %v692 = vrot.slane %v529, 2
        %v693 = vrot.slane %v416, 2
        %v694 = vsel %vm661, %v692, %v693
        %v695 = vrot.slane %v545, 2
        %v696 = vsel %vm661, %v693, %v695
        %v697 = vrot.slane %v530, 2
        %v698 = vrot.slane %v419, 2
        %v699 = vsel %vm661, %v697, %v698
        %v700 = vrot.slane %v546, 2
        %v701 = vsel %vm661, %v698, %v700
        %v702 = vrot.slane %v531, 2
        %v703 = vrot.slane %v422, 2
        %v704 = vsel %vm661, %v702, %v703
        %v705 = vrot.slane %v547, 2
        %v706 = vsel %vm661, %v703, %v705
        %v707 = vrot.slane %v532, 2
        %v708 = vrot.slane %v425, 2
        %v709 = vsel %vm661, %v707, %v708
        %v710 = vrot.slane %v548, 2
        %v711 = vsel %vm661, %v708, %v710
        %v712 = vrot.slane %v533, 2
        %v713 = vrot.slane %v428, 2
        %v714 = vsel %vm661, %v712, %v713
        %v715 = vrot.slane %v549, 2
        %v716 = vsel %vm661, %v713, %v715
        %v717 = vrot.slane %v534, 2
        %v718 = vrot.slane %v431, 2
        %v719 = vsel %vm661, %v717, %v718
        %v720 = vrot.slane %v550, 2
        %v721 = vsel %vm661, %v718, %v720
        %v722 = vrot.slane %v535, 2
        %v723 = vrot.slane %v434, 2
        %v724 = vsel %vm661, %v722, %v723
        %v725 = vrot.slane %v551, 2
        %v726 = vsel %vm661, %v723, %v725
        %v727 = vrot.slane %v536, 2
        %v728 = vrot.slane %v437, 2
        %v729 = vsel %vm661, %v727, %v728
        %v730 = vrot.slane %v552, 2
        %v731 = vsel %vm661, %v728, %v730
        %v732 = vrot.slane %v537, 2
        %v733 = vrot.slane %v440, 2
        %v734 = vsel %vm661, %v732, %v733
        %v735 = vrot.slane %v553, 2
        %v736 = vsel %vm661, %v733, %v735
        %v739 = vrot.slane %v538, 1
        %v740 = vrot.slane %v443, 1
        %v741 = vsel %vm585, %v739, %v740
        %v742 = vrot.slane %v554, 1
        %v743 = vsel %vm585, %v740, %v742
        %v744 = vrot.slane %v538, 2
        %v745 = vrot.slane %v443, 2
        %v746 = vsel %vm661, %v744, %v745
        %v747 = vrot.slane %v554, 2
        %v748 = vsel %vm661, %v745, %v747
        %749 = vrot.lane.b32.xlu0 %v588, 4
        %v750 = vpop.permute.xlu0 %749
        %751 = vrot.lane.b32.xlu0 %v590, 4
        %v752 = vpop.permute.xlu0 %751
        %753 = vrot.lane.b32.xlu0 %v593, 4
        %v754 = vpop.permute.xlu0 %753
        %755 = vrot.lane.b32.xlu0 %v595, 4
        %v756 = vpop.permute.xlu0 %755
        %757 = vrot.lane.b32.xlu0 %v598, 4
        %v758 = vpop.permute.xlu0 %757
        %759 = vrot.lane.b32.xlu0 %v600, 4
        %v760 = vpop.permute.xlu0 %759
        %761 = vrot.lane.b32.xlu0 %v603, 4
        %v762 = vpop.permute.xlu0 %761
        %763 = vrot.lane.b32.xlu0 %v605, 4
        %v764 = vpop.permute.xlu0 %763
        %765 = vrot.lane.b32.xlu0 %v608, 4
        %v766 = vpop.permute.xlu0 %765
        %767 = vrot.lane.b32.xlu0 %v610, 4
        %v768 = vpop.permute.xlu0 %767
        %769 = vrot.lane.b32.xlu0 %v613, 4
        %v770 = vpop.permute.xlu0 %769
        %771 = vrot.lane.b32.xlu0 %v615, 4
        %v772 = vpop.permute.xlu0 %771
        %773 = vrot.lane.b32.xlu0 %v618, 4
        %v774 = vpop.permute.xlu0 %773
        %775 = vrot.lane.b32.xlu0 %v620, 4
        %v776 = vpop.permute.xlu0 %775
        %777 = vrot.lane.b32.xlu0 %v623, 4
        %v778 = vpop.permute.xlu0 %777
        %779 = vrot.lane.b32.xlu0 %v625, 4
        %v780 = vpop.permute.xlu0 %779
        %781 = vrot.lane.b32.xlu0 %v628, 4
        %v782 = vpop.permute.xlu0 %781
        %783 = vrot.lane.b32.xlu0 %v630, 4
        %v784 = vpop.permute.xlu0 %783
        %785 = vrot.lane.b32.xlu0 %v633, 4
        %v786 = vpop.permute.xlu0 %785
        %787 = vrot.lane.b32.xlu0 %v635, 4
        %v788 = vpop.permute.xlu0 %787
        %789 = vrot.lane.b32.xlu0 %v638, 4
        %v790 = vpop.permute.xlu0 %789
        %791 = vrot.lane.b32.xlu0 %v640, 4
        %v792 = vpop.permute.xlu0 %791
        %793 = vrot.lane.b32.xlu0 %v643, 4
        %v794 = vpop.permute.xlu0 %793
        %795 = vrot.lane.b32.xlu0 %v645, 4
        %v796 = vpop.permute.xlu0 %795
        %797 = vrot.lane.b32.xlu0 %v648, 4
        %v798 = vpop.permute.xlu0 %797
        %799 = vrot.lane.b32.xlu0 %v650, 4
        %v800 = vpop.permute.xlu0 %799
        %801 = vrot.lane.b32.xlu0 %v653, 4
        %v802 = vpop.permute.xlu0 %801
        %803 = vrot.lane.b32.xlu0 %v655, 4
        %v804 = vpop.permute.xlu0 %803
        %805 = vrot.lane.b32.xlu0 %v658, 4
        %v806 = vpop.permute.xlu0 %805
        %807 = vrot.lane.b32.xlu0 %v660, 4
        %v808 = vpop.permute.xlu0 %807
        %839 = vrot.lane.b32.xlu0 %v664, 8
        %v840 = vpop.permute.xlu0 %839
        %841 = vrot.lane.b32.xlu0 %v666, 8
        %v842 = vpop.permute.xlu0 %841
        %843 = vrot.lane.b32.xlu0 %v669, 8
        %v844 = vpop.permute.xlu0 %843
        %845 = vrot.lane.b32.xlu0 %v671, 8
        %v846 = vpop.permute.xlu0 %845
        %847 = vrot.lane.b32.xlu0 %v674, 8
        %v848 = vpop.permute.xlu0 %847
        %849 = vrot.lane.b32.xlu0 %v676, 8
        %v850 = vpop.permute.xlu0 %849
        %851 = vrot.lane.b32.xlu0 %v679, 8
        %v852 = vpop.permute.xlu0 %851
        %853 = vrot.lane.b32.xlu0 %v681, 8
        %v854 = vpop.permute.xlu0 %853
        %855 = vrot.lane.b32.xlu0 %v684, 8
        %v856 = vpop.permute.xlu0 %855
        %857 = vrot.lane.b32.xlu0 %v686, 8
        %v858 = vpop.permute.xlu0 %857
        %859 = vrot.lane.b32.xlu0 %v689, 8
        %v860 = vpop.permute.xlu0 %859
        %861 = vrot.lane.b32.xlu0 %v691, 8
        %v862 = vpop.permute.xlu0 %861
        %863 = vrot.lane.b32.xlu0 %v694, 8
        %v864 = vpop.permute.xlu0 %863
        %865 = vrot.lane.b32.xlu0 %v696, 8
        %v866 = vpop.permute.xlu0 %865
        %867 = vrot.lane.b32.xlu0 %v699, 8
        %v868 = vpop.permute.xlu0 %867
        %869 = vrot.lane.b32.xlu0 %v701, 8
        %v870 = vpop.permute.xlu0 %869
        %871 = vrot.lane.b32.xlu0 %v704, 8
        %v872 = vpop.permute.xlu0 %871
        %873 = vrot.lane.b32.xlu0 %v706, 8
        %v874 = vpop.permute.xlu0 %873
        %875 = vrot.lane.b32.xlu0 %v709, 8
        %v876 = vpop.permute.xlu0 %875
        %877 = vrot.lane.b32.xlu0 %v711, 8
        %v878 = vpop.permute.xlu0 %877
        %879 = vrot.lane.b32.xlu0 %v714, 8
        %v880 = vpop.permute.xlu0 %879
        %881 = vrot.lane.b32.xlu0 %v716, 8
        %v882 = vpop.permute.xlu0 %881
        %883 = vrot.lane.b32.xlu0 %v719, 8
        %v884 = vpop.permute.xlu0 %883
        %885 = vrot.lane.b32.xlu0 %v721, 8
        %v886 = vpop.permute.xlu0 %885
        %887 = vrot.lane.b32.xlu0 %v724, 8
        %v888 = vpop.permute.xlu0 %887
        %889 = vrot.lane.b32.xlu0 %v726, 8
        %v890 = vpop.permute.xlu0 %889
        %891 = vrot.lane.b32.xlu0 %v729, 8
        %v892 = vpop.permute.xlu0 %891
        %893 = vrot.lane.b32.xlu0 %v731, 8
        %v894 = vpop.permute.xlu0 %893
        %895 = vrot.lane.b32.xlu0 %v734, 8
        %v896 = vpop.permute.xlu0 %895
        %897 = vrot.lane.b32.xlu0 %v736, 8
        %v898 = vpop.permute.xlu0 %897
        %929 = vrot.lane.b32.xlu0 %v523, 12
        %v930 = vpop.permute.xlu0 %929
        %931 = vrot.lane.b32.xlu0 %v398, 12
        %v932 = vpop.permute.xlu0 %931
        %933 = vrot.lane.b32.xlu0 %v524, 12
        %v934 = vpop.permute.xlu0 %933
        %935 = vrot.lane.b32.xlu0 %v401, 12
        %v936 = vpop.permute.xlu0 %935
        %937 = vrot.lane.b32.xlu0 %v525, 12
        %v938 = vpop.permute.xlu0 %937
        %939 = vrot.lane.b32.xlu0 %v404, 12
        %v940 = vpop.permute.xlu0 %939
        %941 = vrot.lane.b32.xlu0 %v526, 12
        %v942 = vpop.permute.xlu0 %941
        %943 = vrot.lane.b32.xlu0 %v407, 12
        %v944 = vpop.permute.xlu0 %943
        %945 = vrot.lane.b32.xlu0 %v527, 12
        %v946 = vpop.permute.xlu0 %945
        %947 = vrot.lane.b32.xlu0 %v410, 12
        %v948 = vpop.permute.xlu0 %947
        %949 = vrot.lane.b32.xlu0 %v528, 12
        %v950 = vpop.permute.xlu0 %949
        %951 = vrot.lane.b32.xlu0 %v413, 12
        %v952 = vpop.permute.xlu0 %951
        %953 = vrot.lane.b32.xlu0 %v529, 12
        %v954 = vpop.permute.xlu0 %953
        %955 = vrot.lane.b32.xlu0 %v416, 12
        %v956 = vpop.permute.xlu0 %955
        %957 = vrot.lane.b32.xlu0 %v530, 12
        %v958 = vpop.permute.xlu0 %957
        %959 = vrot.lane.b32.xlu0 %v419, 12
        %v960 = vpop.permute.xlu0 %959
        %961 = vrot.lane.b32.xlu0 %v531, 12
        %v962 = vpop.permute.xlu0 %961
        %963 = vrot.lane.b32.xlu0 %v422, 12
        %v964 = vpop.permute.xlu0 %963
        %965 = vrot.lane.b32.xlu0 %v532, 12
        %v966 = vpop.permute.xlu0 %965
        %967 = vrot.lane.b32.xlu0 %v425, 12
        %v968 = vpop.permute.xlu0 %967
        %969 = vrot.lane.b32.xlu0 %v533, 12
        %v970 = vpop.permute.xlu0 %969
        %971 = vrot.lane.b32.xlu0 %v428, 12
        %v972 = vpop.permute.xlu0 %971
        %973 = vrot.lane.b32.xlu0 %v534, 12
        %v974 = vpop.permute.xlu0 %973
        %975 = vrot.lane.b32.xlu0 %v431, 12
        %v976 = vpop.permute.xlu0 %975
        %977 = vrot.lane.b32.xlu0 %v535, 12
        %v978 = vpop.permute.xlu0 %977
        %979 = vrot.lane.b32.xlu0 %v434, 12
        %v980 = vpop.permute.xlu0 %979
        %981 = vrot.lane.b32.xlu0 %v536, 12
        %v982 = vpop.permute.xlu0 %981
        %983 = vrot.lane.b32.xlu0 %v437, 12
        %v984 = vpop.permute.xlu0 %983
        %985 = vrot.lane.b32.xlu0 %v537, 12
        %v986 = vpop.permute.xlu0 %985
        %987 = vrot.lane.b32.xlu0 %v440, 12
        %v988 = vpop.permute.xlu0 %987
        %989 = vrot.lane.b32.xlu0 %v538, 12
        %v990 = vpop.permute.xlu0 %989
        %991 = vrot.lane.b32.xlu0 %v443, 12
        %v992 = vpop.permute.xlu0 %991
        %1025 = vrot.lane.b32.xlu0 %v588, 16
        %v1026 = vpop.permute.xlu0 %1025
        %1027 = vrot.lane.b32.xlu0 %v590, 16
        %v1028 = vpop.permute.xlu0 %1027
        %1029 = vrot.lane.b32.xlu0 %v593, 16
        %v1030 = vpop.permute.xlu0 %1029
        %1031 = vrot.lane.b32.xlu0 %v595, 16
        %v1032 = vpop.permute.xlu0 %1031
        %1033 = vrot.lane.b32.xlu0 %v598, 16
        %v1034 = vpop.permute.xlu0 %1033
        %1035 = vrot.lane.b32.xlu0 %v600, 16
        %v1036 = vpop.permute.xlu0 %1035
        %1037 = vrot.lane.b32.xlu0 %v603, 16
        %v1038 = vpop.permute.xlu0 %1037
        %1039 = vrot.lane.b32.xlu0 %v605, 16
        %v1040 = vpop.permute.xlu0 %1039
        %1041 = vrot.lane.b32.xlu0 %v608, 16
        %v1042 = vpop.permute.xlu0 %1041
        %1043 = vrot.lane.b32.xlu0 %v610, 16
        %v1044 = vpop.permute.xlu0 %1043
        %1045 = vrot.lane.b32.xlu0 %v613, 16
        %v1046 = vpop.permute.xlu0 %1045
        %1047 = vrot.lane.b32.xlu0 %v615, 16
        %v1048 = vpop.permute.xlu0 %1047
        %1049 = vrot.lane.b32.xlu0 %v618, 16
        %v1050 = vpop.permute.xlu0 %1049
        %1051 = vrot.lane.b32.xlu0 %v620, 16
        %v1052 = vpop.permute.xlu0 %1051
        %1053 = vrot.lane.b32.xlu0 %v623, 16
        %v1054 = vpop.permute.xlu0 %1053
        %1055 = vrot.lane.b32.xlu0 %v625, 16
        %v1056 = vpop.permute.xlu0 %1055
        %1057 = vrot.lane.b32.xlu0 %v628, 16
        %v1058 = vpop.permute.xlu0 %1057
        %1059 = vrot.lane.b32.xlu0 %v630, 16
        %v1060 = vpop.permute.xlu0 %1059
        %1061 = vrot.lane.b32.xlu0 %v633, 16
        %v1062 = vpop.permute.xlu0 %1061
        %1063 = vrot.lane.b32.xlu0 %v635, 16
        %v1064 = vpop.permute.xlu0 %1063
        %1065 = vrot.lane.b32.xlu0 %v638, 16
        %v1066 = vpop.permute.xlu0 %1065
        %1067 = vrot.lane.b32.xlu0 %v640, 16
        %v1068 = vpop.permute.xlu0 %1067
        %1069 = vrot.lane.b32.xlu0 %v643, 16
        %v1070 = vpop.permute.xlu0 %1069
        %1071 = vrot.lane.b32.xlu0 %v645, 16
        %v1072 = vpop.permute.xlu0 %1071
        %1073 = vrot.lane.b32.xlu0 %v648, 16
        %v1074 = vpop.permute.xlu0 %1073
        %1075 = vrot.lane.b32.xlu0 %v650, 16
        %v1076 = vpop.permute.xlu0 %1075
        %1077 = vrot.lane.b32.xlu0 %v653, 16
        %v1078 = vpop.permute.xlu0 %1077
        %1079 = vrot.lane.b32.xlu0 %v655, 16
        %v1080 = vpop.permute.xlu0 %1079
        %1081 = vrot.lane.b32.xlu0 %v658, 16
        %v1082 = vpop.permute.xlu0 %1081
        %1083 = vrot.lane.b32.xlu0 %v660, 16
        %v1084 = vpop.permute.xlu0 %1083
        %1085 = vrot.lane.b32.xlu0 %v741, 16
        %v1086 = vpop.permute.xlu0 %1085
        %1087 = vrot.lane.b32.xlu0 %v743, 16
        %v1088 = vpop.permute.xlu0 %1087
        %1121 = vrot.lane.b32.xlu0 %v664, 20
        %v1122 = vpop.permute.xlu0 %1121
        %1123 = vrot.lane.b32.xlu0 %v666, 20
        %v1124 = vpop.permute.xlu0 %1123
        %1125 = vrot.lane.b32.xlu0 %v669, 20
        %v1126 = vpop.permute.xlu0 %1125
        %1127 = vrot.lane.b32.xlu0 %v671, 20
        %v1128 = vpop.permute.xlu0 %1127
        %1129 = vrot.lane.b32.xlu0 %v674, 20
        %v1130 = vpop.permute.xlu0 %1129
        %1131 = vrot.lane.b32.xlu0 %v676, 20
        %v1132 = vpop.permute.xlu0 %1131
        %1133 = vrot.lane.b32.xlu0 %v679, 20
        %v1134 = vpop.permute.xlu0 %1133
        %1135 = vrot.lane.b32.xlu0 %v681, 20
        %v1136 = vpop.permute.xlu0 %1135
        %1137 = vrot.lane.b32.xlu0 %v684, 20
        %v1138 = vpop.permute.xlu0 %1137
        %1139 = vrot.lane.b32.xlu0 %v686, 20
        %v1140 = vpop.permute.xlu0 %1139
        %1141 = vrot.lane.b32.xlu0 %v689, 20
        %v1142 = vpop.permute.xlu0 %1141
        %1143 = vrot.lane.b32.xlu0 %v691, 20
        %v1144 = vpop.permute.xlu0 %1143
        %1145 = vrot.lane.b32.xlu0 %v694, 20
        %v1146 = vpop.permute.xlu0 %1145
        %1147 = vrot.lane.b32.xlu0 %v696, 20
        %v1148 = vpop.permute.xlu0 %1147
        %1149 = vrot.lane.b32.xlu0 %v699, 20
        %v1150 = vpop.permute.xlu0 %1149
        %1151 = vrot.lane.b32.xlu0 %v701, 20
        %v1152 = vpop.permute.xlu0 %1151
        %1153 = vrot.lane.b32.xlu0 %v704, 20
        %v1154 = vpop.permute.xlu0 %1153
        %1155 = vrot.lane.b32.xlu0 %v706, 20
        %v1156 = vpop.permute.xlu0 %1155
        %1157 = vrot.lane.b32.xlu0 %v709, 20
        %v1158 = vpop.permute.xlu0 %1157
        %1159 = vrot.lane.b32.xlu0 %v711, 20
        %v1160 = vpop.permute.xlu0 %1159
        %1161 = vrot.lane.b32.xlu0 %v714, 20
        %v1162 = vpop.permute.xlu0 %1161
        %1163 = vrot.lane.b32.xlu0 %v716, 20
        %v1164 = vpop.permute.xlu0 %1163
        %1165 = vrot.lane.b32.xlu0 %v719, 20
        %v1166 = vpop.permute.xlu0 %1165
        %1167 = vrot.lane.b32.xlu0 %v721, 20
        %v1168 = vpop.permute.xlu0 %1167
        %1169 = vrot.lane.b32.xlu0 %v724, 20
        %v1170 = vpop.permute.xlu0 %1169
        %1171 = vrot.lane.b32.xlu0 %v726, 20
        %v1172 = vpop.permute.xlu0 %1171
        %1173 = vrot.lane.b32.xlu0 %v729, 20
        %v1174 = vpop.permute.xlu0 %1173
        %1175 = vrot.lane.b32.xlu0 %v731, 20
        %v1176 = vpop.permute.xlu0 %1175
        %1177 = vrot.lane.b32.xlu0 %v734, 20
        %v1178 = vpop.permute.xlu0 %1177
        %1179 = vrot.lane.b32.xlu0 %v736, 20
        %v1180 = vpop.permute.xlu0 %1179
        %1181 = vrot.lane.b32.xlu0 %v746, 20
        %v1182 = vpop.permute.xlu0 %1181
        %1183 = vrot.lane.b32.xlu0 %v748, 20
        %v1184 = vpop.permute.xlu0 %1183
        %1217 = vrot.lane.b32.xlu0 %v524, 24
        %v1218 = vpop.permute.xlu0 %1217
        %1219 = vrot.lane.b32.xlu0 %v401, 24
        %v1220 = vpop.permute.xlu0 %1219
        %1221 = vrot.lane.b32.xlu0 %v525, 24
        %v1222 = vpop.permute.xlu0 %1221
        %1223 = vrot.lane.b32.xlu0 %v404, 24
        %v1224 = vpop.permute.xlu0 %1223
        %1225 = vrot.lane.b32.xlu0 %v526, 24
        %v1226 = vpop.permute.xlu0 %1225
        %1227 = vrot.lane.b32.xlu0 %v407, 24
        %v1228 = vpop.permute.xlu0 %1227
        %1229 = vrot.lane.b32.xlu0 %v527, 24
        %v1230 = vpop.permute.xlu0 %1229
        %1231 = vrot.lane.b32.xlu0 %v410, 24
        %v1232 = vpop.permute.xlu0 %1231
        %1233 = vrot.lane.b32.xlu0 %v528, 24
        %v1234 = vpop.permute.xlu0 %1233
        %1235 = vrot.lane.b32.xlu0 %v413, 24
        %v1236 = vpop.permute.xlu0 %1235
        %1237 = vrot.lane.b32.xlu0 %v529, 24
        %v1238 = vpop.permute.xlu0 %1237
        %1239 = vrot.lane.b32.xlu0 %v416, 24
        %v1240 = vpop.permute.xlu0 %1239
        %1241 = vrot.lane.b32.xlu0 %v530, 24
        %v1242 = vpop.permute.xlu0 %1241
        %1243 = vrot.lane.b32.xlu0 %v419, 24
        %v1244 = vpop.permute.xlu0 %1243
        %1245 = vrot.lane.b32.xlu0 %v531, 24
        %v1246 = vpop.permute.xlu0 %1245
        %1247 = vrot.lane.b32.xlu0 %v422, 24
        %v1248 = vpop.permute.xlu0 %1247
        %1249 = vrot.lane.b32.xlu0 %v532, 24
        %v1250 = vpop.permute.xlu0 %1249
        %1251 = vrot.lane.b32.xlu0 %v425, 24
        %v1252 = vpop.permute.xlu0 %1251
        %1253 = vrot.lane.b32.xlu0 %v533, 24
        %v1254 = vpop.permute.xlu0 %1253
        %1255 = vrot.lane.b32.xlu0 %v428, 24
        %v1256 = vpop.permute.xlu0 %1255
        %1257 = vrot.lane.b32.xlu0 %v534, 24
        %v1258 = vpop.permute.xlu0 %1257
        %1259 = vrot.lane.b32.xlu0 %v431, 24
        %v1260 = vpop.permute.xlu0 %1259
        %1261 = vrot.lane.b32.xlu0 %v535, 24
        %v1262 = vpop.permute.xlu0 %1261
        %1263 = vrot.lane.b32.xlu0 %v434, 24
        %v1264 = vpop.permute.xlu0 %1263
        %1265 = vrot.lane.b32.xlu0 %v536, 24
        %v1266 = vpop.permute.xlu0 %1265
        %1267 = vrot.lane.b32.xlu0 %v437, 24
        %v1268 = vpop.permute.xlu0 %1267
        %1269 = vrot.lane.b32.xlu0 %v537, 24
        %v1270 = vpop.permute.xlu0 %1269
        %1271 = vrot.lane.b32.xlu0 %v440, 24
        %v1272 = vpop.permute.xlu0 %1271
        %1273 = vrot.lane.b32.xlu0 %v538, 24
        %v1274 = vpop.permute.xlu0 %1273
        %1275 = vrot.lane.b32.xlu0 %v443, 24
        %v1276 = vpop.permute.xlu0 %1275
        %1307 = vrot.lane.b32.xlu0 %v593, 28
        %v1308 = vpop.permute.xlu0 %1307
        %1309 = vrot.lane.b32.xlu0 %v595, 28
        %v1310 = vpop.permute.xlu0 %1309
        %1311 = vrot.lane.b32.xlu0 %v598, 28
        %v1312 = vpop.permute.xlu0 %1311
        %1313 = vrot.lane.b32.xlu0 %v600, 28
        %v1314 = vpop.permute.xlu0 %1313
        %1315 = vrot.lane.b32.xlu0 %v603, 28
        %v1316 = vpop.permute.xlu0 %1315
        %1317 = vrot.lane.b32.xlu0 %v605, 28
        %v1318 = vpop.permute.xlu0 %1317
        %1319 = vrot.lane.b32.xlu0 %v608, 28
        %v1320 = vpop.permute.xlu0 %1319
        %1321 = vrot.lane.b32.xlu0 %v610, 28
        %v1322 = vpop.permute.xlu0 %1321
        %1323 = vrot.lane.b32.xlu0 %v613, 28
        %v1324 = vpop.permute.xlu0 %1323
        %1325 = vrot.lane.b32.xlu0 %v615, 28
        %v1326 = vpop.permute.xlu0 %1325
        %1327 = vrot.lane.b32.xlu0 %v618, 28
        %v1328 = vpop.permute.xlu0 %1327
        %1329 = vrot.lane.b32.xlu0 %v620, 28
        %v1330 = vpop.permute.xlu0 %1329
        %1331 = vrot.lane.b32.xlu0 %v623, 28
        %v1332 = vpop.permute.xlu0 %1331
        %1333 = vrot.lane.b32.xlu0 %v625, 28
        %v1334 = vpop.permute.xlu0 %1333
        %1335 = vrot.lane.b32.xlu0 %v628, 28
        %v1336 = vpop.permute.xlu0 %1335
        %1337 = vrot.lane.b32.xlu0 %v630, 28
        %v1338 = vpop.permute.xlu0 %1337
        %1339 = vrot.lane.b32.xlu0 %v633, 28
        %v1340 = vpop.permute.xlu0 %1339
        %1341 = vrot.lane.b32.xlu0 %v635, 28
        %v1342 = vpop.permute.xlu0 %1341
        %1343 = vrot.lane.b32.xlu0 %v638, 28
        %v1344 = vpop.permute.xlu0 %1343
        %1345 = vrot.lane.b32.xlu0 %v640, 28
        %v1346 = vpop.permute.xlu0 %1345
        %1347 = vrot.lane.b32.xlu0 %v643, 28
        %v1348 = vpop.permute.xlu0 %1347
        %1349 = vrot.lane.b32.xlu0 %v645, 28
        %v1350 = vpop.permute.xlu0 %1349
        %1351 = vrot.lane.b32.xlu0 %v648, 28
        %v1352 = vpop.permute.xlu0 %1351
        %1353 = vrot.lane.b32.xlu0 %v650, 28
        %v1354 = vpop.permute.xlu0 %1353
        %1355 = vrot.lane.b32.xlu0 %v653, 28
        %v1356 = vpop.permute.xlu0 %1355
        %1357 = vrot.lane.b32.xlu0 %v655, 28
        %v1358 = vpop.permute.xlu0 %1357
        %1359 = vrot.lane.b32.xlu0 %v658, 28
        %v1360 = vpop.permute.xlu0 %1359
        %1361 = vrot.lane.b32.xlu0 %v660, 28
        %v1362 = vpop.permute.xlu0 %1361
        %1363 = vrot.lane.b32.xlu0 %v741, 28
        %v1364 = vpop.permute.xlu0 %1363
        %1365 = vrot.lane.b32.xlu0 %v743, 28
        %v1366 = vpop.permute.xlu0 %1365
        %1397 = vrot.lane.b32.xlu0 %v669, 32
        %v1398 = vpop.permute.xlu0 %1397
        %1399 = vrot.lane.b32.xlu0 %v671, 32
        %v1400 = vpop.permute.xlu0 %1399
        %1401 = vrot.lane.b32.xlu0 %v674, 32
        %v1402 = vpop.permute.xlu0 %1401
        %1403 = vrot.lane.b32.xlu0 %v676, 32
        %v1404 = vpop.permute.xlu0 %1403
        %1405 = vrot.lane.b32.xlu0 %v679, 32
        %v1406 = vpop.permute.xlu0 %1405
        %1407 = vrot.lane.b32.xlu0 %v681, 32
        %v1408 = vpop.permute.xlu0 %1407
        %1409 = vrot.lane.b32.xlu0 %v684, 32
        %v1410 = vpop.permute.xlu0 %1409
        %1411 = vrot.lane.b32.xlu0 %v686, 32
        %v1412 = vpop.permute.xlu0 %1411
        %1413 = vrot.lane.b32.xlu0 %v689, 32
        %v1414 = vpop.permute.xlu0 %1413
        %1415 = vrot.lane.b32.xlu0 %v691, 32
        %v1416 = vpop.permute.xlu0 %1415
        %1417 = vrot.lane.b32.xlu0 %v694, 32
        %v1418 = vpop.permute.xlu0 %1417
        %1419 = vrot.lane.b32.xlu0 %v696, 32
        %v1420 = vpop.permute.xlu0 %1419
        %1421 = vrot.lane.b32.xlu0 %v699, 32
        %v1422 = vpop.permute.xlu0 %1421
        %1423 = vrot.lane.b32.xlu0 %v701, 32
        %v1424 = vpop.permute.xlu0 %1423
        %1425 = vrot.lane.b32.xlu0 %v704, 32
        %v1426 = vpop.permute.xlu0 %1425
        %1427 = vrot.lane.b32.xlu0 %v706, 32
        %v1428 = vpop.permute.xlu0 %1427
        %1429 = vrot.lane.b32.xlu0 %v709, 32
        %v1430 = vpop.permute.xlu0 %1429
        %1431 = vrot.lane.b32.xlu0 %v711, 32
        %v1432 = vpop.permute.xlu0 %1431
        %1433 = vrot.lane.b32.xlu0 %v714, 32
        %v1434 = vpop.permute.xlu0 %1433
        %1435 = vrot.lane.b32.xlu0 %v716, 32
        %v1436 = vpop.permute.xlu0 %1435
        %1437 = vrot.lane.b32.xlu0 %v719, 32
        %v1438 = vpop.permute.xlu0 %1437
        %1439 = vrot.lane.b32.xlu0 %v721, 32
        %v1440 = vpop.permute.xlu0 %1439
        %1441 = vrot.lane.b32.xlu0 %v724, 32
        %v1442 = vpop.permute.xlu0 %1441
        %1443 = vrot.lane.b32.xlu0 %v726, 32
        %v1444 = vpop.permute.xlu0 %1443
        %1445 = vrot.lane.b32.xlu0 %v729, 32
        %v1446 = vpop.permute.xlu0 %1445
        %1447 = vrot.lane.b32.xlu0 %v731, 32
        %v1448 = vpop.permute.xlu0 %1447
        %1449 = vrot.lane.b32.xlu0 %v734, 32
        %v1450 = vpop.permute.xlu0 %1449
        %1451 = vrot.lane.b32.xlu0 %v736, 32
        %v1452 = vpop.permute.xlu0 %1451
        %1453 = vrot.lane.b32.xlu0 %v746, 32
        %v1454 = vpop.permute.xlu0 %1453
        %1455 = vrot.lane.b32.xlu0 %v748, 32
        %v1456 = vpop.permute.xlu0 %1455
        %vm1487 = vcmask 31744
        %v1488 = vsel %vm1487, %v523, %v750
        %v1489 = vsel %vm1487, %v398, %v752
        %v1490 = vsel %vm1487, %v524, %v754
        %v1491 = vsel %vm1487, %v401, %v756
        %v1492 = vsel %vm1487, %v525, %v758
        %v1493 = vsel %vm1487, %v404, %v760
        %v1494 = vsel %vm1487, %v526, %v762
        %v1495 = vsel %vm1487, %v407, %v764
        %v1496 = vsel %vm1487, %v527, %v766
        %v1497 = vsel %vm1487, %v410, %v768
        %v1498 = vsel %vm1487, %v528, %v770
        %v1499 = vsel %vm1487, %v413, %v772
        %v1500 = vsel %vm1487, %v529, %v774
        %v1501 = vsel %vm1487, %v416, %v776
        %v1502 = vsel %vm1487, %v530, %v778
        %v1503 = vsel %vm1487, %v419, %v780
        %v1504 = vsel %vm1487, %v531, %v782
        %v1505 = vsel %vm1487, %v422, %v784
        %v1506 = vsel %vm1487, %v532, %v786
        %v1507 = vsel %vm1487, %v425, %v788
        %v1508 = vsel %vm1487, %v533, %v790
        %v1509 = vsel %vm1487, %v428, %v792
        %v1510 = vsel %vm1487, %v534, %v794
        %v1511 = vsel %vm1487, %v431, %v796
        %v1512 = vsel %vm1487, %v535, %v798
        %v1513 = vsel %vm1487, %v434, %v800
        %v1514 = vsel %vm1487, %v536, %v802
        %v1515 = vsel %vm1487, %v437, %v804
        %v1516 = vsel %vm1487, %v537, %v806
        %v1517 = vsel %vm1487, %v440, %v808
        %vm1518 = vcmask 64512
        %v1519 = vsel %vm1518, %v1488, %v840
        %v1520 = vsel %vm1518, %v1489, %v842
        %v1521 = vsel %vm1518, %v1490, %v844
        %v1522 = vsel %vm1518, %v1491, %v846
        %v1523 = vsel %vm1518, %v1492, %v848
        %v1524 = vsel %vm1518, %v1493, %v850
        %v1525 = vsel %vm1518, %v1494, %v852
        %v1526 = vsel %vm1518, %v1495, %v854
        %v1527 = vsel %vm1518, %v1496, %v856
        %v1528 = vsel %vm1518, %v1497, %v858
        %v1529 = vsel %vm1518, %v1498, %v860
        %v1530 = vsel %vm1518, %v1499, %v862
        %v1531 = vsel %vm1518, %v1500, %v864
        %v1532 = vsel %vm1518, %v1501, %v866
        %v1533 = vsel %vm1518, %v1502, %v868
        %v1534 = vsel %vm1518, %v1503, %v870
        %v1535 = vsel %vm1518, %v1504, %v872
        %v1536 = vsel %vm1518, %v1505, %v874
        %v1537 = vsel %vm1518, %v1506, %v876
        %v1538 = vsel %vm1518, %v1507, %v878
        %v1539 = vsel %vm1518, %v1508, %v880
        %v1540 = vsel %vm1518, %v1509, %v882
        %v1541 = vsel %vm1518, %v1510, %v884
        %v1542 = vsel %vm1518, %v1511, %v886
        %v1543 = vsel %vm1518, %v1512, %v888
        %v1544 = vsel %vm1518, %v1513, %v890
        %v1545 = vsel %vm1518, %v1514, %v892
        %v1546 = vsel %vm1518, %v1515, %v894
        %v1547 = vsel %vm1518, %v1516, %v896
        %v1548 = vsel %vm1518, %v1517, %v898
        %vm1549 = vcmask 97280
        %v1550 = vsel %vm1549, %v1519, %v930
        %v1551 = vsel %vm1549, %v1520, %v932
        %v1552 = vsel %vm1549, %v1519, %v934
        %v1553 = vsel %vm1549, %v1520, %v936
        %v1554 = vsel %vm1549, %v1521, %v938
        %v1555 = vsel %vm1549, %v1522, %v940
        %v1556 = vsel %vm1549, %v1523, %v942
        %v1557 = vsel %vm1549, %v1524, %v944
        %v1558 = vsel %vm1549, %v1525, %v946
        %v1559 = vsel %vm1549, %v1526, %v948
        %v1560 = vsel %vm1549, %v1527, %v950
        %v1561 = vsel %vm1549, %v1528, %v952
        %v1562 = vsel %vm1549, %v1529, %v954
        %v1563 = vsel %vm1549, %v1530, %v956
        %v1564 = vsel %vm1549, %v1531, %v958
        %v1565 = vsel %vm1549, %v1532, %v960
        %v1566 = vsel %vm1549, %v1533, %v962
        %v1567 = vsel %vm1549, %v1534, %v964
        %v1568 = vsel %vm1549, %v1535, %v966
        %v1569 = vsel %vm1549, %v1536, %v968
        %v1570 = vsel %vm1549, %v1537, %v970
        %v1571 = vsel %vm1549, %v1538, %v972
        %v1572 = vsel %vm1549, %v1539, %v974
        %v1573 = vsel %vm1549, %v1540, %v976
        %v1574 = vsel %vm1549, %v1541, %v978
        %v1575 = vsel %vm1549, %v1542, %v980
        %v1576 = vsel %vm1549, %v1543, %v982
        %v1577 = vsel %vm1549, %v1544, %v984
        %v1578 = vsel %vm1549, %v1545, %v986
        %v1579 = vsel %vm1549, %v1546, %v988
        %v1580 = vsel %vm1549, %v1547, %v990
        %v1581 = vsel %vm1549, %v1548, %v992
        %vm1582 = vcmask 130048
        %v1583 = vsel %vm1582, %v1550, %v1026
        %v1584 = vsel %vm1582, %v1551, %v1028
        %v1585 = vsel %vm1582, %v1552, %v1030
        %v1586 = vsel %vm1582, %v1553, %v1032
        %v1587 = vsel %vm1582, %v1554, %v1034
        %v1588 = vsel %vm1582, %v1555, %v1036
        %v1589 = vsel %vm1582, %v1556, %v1038
        %v1590 = vsel %vm1582, %v1557, %v1040
        %v1591 = vsel %vm1582, %v1558, %v1042
        %v1592 = vsel %vm1582, %v1559, %v1044
        %v1593 = vsel %vm1582, %v1560, %v1046
        %v1594 = vsel %vm1582, %v1561, %v1048
        %v1595 = vsel %vm1582, %v1562, %v1050
        %v1596 = vsel %vm1582, %v1563, %v1052
        %v1597 = vsel %vm1582, %v1564, %v1054
        %v1598 = vsel %vm1582, %v1565, %v1056
        %v1599 = vsel %vm1582, %v1566, %v1058
        %v1600 = vsel %vm1582, %v1567, %v1060
        %v1601 = vsel %vm1582, %v1568, %v1062
        %v1602 = vsel %vm1582, %v1569, %v1064
        %v1603 = vsel %vm1582, %v1570, %v1066
        %v1604 = vsel %vm1582, %v1571, %v1068
        %v1605 = vsel %vm1582, %v1572, %v1070
        %v1606 = vsel %vm1582, %v1573, %v1072
        %v1607 = vsel %vm1582, %v1574, %v1074
        %v1608 = vsel %vm1582, %v1575, %v1076
        %v1609 = vsel %vm1582, %v1576, %v1078
        %v1610 = vsel %vm1582, %v1577, %v1080
        %v1611 = vsel %vm1582, %v1578, %v1082
        %v1612 = vsel %vm1582, %v1579, %v1084
        %v1613 = vsel %vm1582, %v1580, %v1086
        %v1614 = vsel %vm1582, %v1581, %v1088
        %vm1615 = vcmask 162816
        %v1616 = vsel %vm1615, %v1583, %v1122
        %v1617 = vsel %vm1615, %v1584, %v1124
        %v1618 = vsel %vm1615, %v1585, %v1126
        %v1619 = vsel %vm1615, %v1586, %v1128
        %v1620 = vsel %vm1615, %v1587, %v1130
        %v1621 = vsel %vm1615, %v1588, %v1132
        %v1622 = vsel %vm1615, %v1589, %v1134
        %v1623 = vsel %vm1615, %v1590, %v1136
        %v1624 = vsel %vm1615, %v1591, %v1138
        %v1625 = vsel %vm1615, %v1592, %v1140
        %v1626 = vsel %vm1615, %v1593, %v1142
        %v1627 = vsel %vm1615, %v1594, %v1144
        %v1628 = vsel %vm1615, %v1595, %v1146
        %v1629 = vsel %vm1615, %v1596, %v1148
        %v1630 = vsel %vm1615, %v1597, %v1150
        %v1631 = vsel %vm1615, %v1598, %v1152
        %v1632 = vsel %vm1615, %v1599, %v1154
        %v1633 = vsel %vm1615, %v1600, %v1156
        %v1634 = vsel %vm1615, %v1601, %v1158
        %v1635 = vsel %vm1615, %v1602, %v1160
        %v1636 = vsel %vm1615, %v1603, %v1162
        %v1637 = vsel %vm1615, %v1604, %v1164
        %v1638 = vsel %vm1615, %v1605, %v1166
        %v1639 = vsel %vm1615, %v1606, %v1168
        %v1640 = vsel %vm1615, %v1607, %v1170
        %v1641 = vsel %vm1615, %v1608, %v1172
        %v1642 = vsel %vm1615, %v1609, %v1174
        %v1643 = vsel %vm1615, %v1610, %v1176
        %v1644 = vsel %vm1615, %v1611, %v1178
        %v1645 = vsel %vm1615, %v1612, %v1180
        %v1646 = vsel %vm1615, %v1613, %v1182
        %v1647 = vsel %vm1615, %v1614, %v1184
        %vm1648 = vcmask 195584
        %v1649 = vsel %vm1648, %v1616, %v1218
        %v1650 = vsel %vm1648, %v1617, %v1220
        %v1651 = vsel %vm1648, %v1618, %v1222
        %v1652 = vsel %vm1648, %v1619, %v1224
        %v1653 = vsel %vm1648, %v1620, %v1226
        %v1654 = vsel %vm1648, %v1621, %v1228
        %v1655 = vsel %vm1648, %v1622, %v1230
        %v1656 = vsel %vm1648, %v1623, %v1232
        %v1657 = vsel %vm1648, %v1624, %v1234
        %v1658 = vsel %vm1648, %v1625, %v1236
        %v1659 = vsel %vm1648, %v1626, %v1238
        %v1660 = vsel %vm1648, %v1627, %v1240
        %v1661 = vsel %vm1648, %v1628, %v1242
        %v1662 = vsel %vm1648, %v1629, %v1244
        %v1663 = vsel %vm1648, %v1630, %v1246
        %v1664 = vsel %vm1648, %v1631, %v1248
        %v1665 = vsel %vm1648, %v1632, %v1250
        %v1666 = vsel %vm1648, %v1633, %v1252
        %v1667 = vsel %vm1648, %v1634, %v1254
        %v1668 = vsel %vm1648, %v1635, %v1256
        %v1669 = vsel %vm1648, %v1636, %v1258
        %v1670 = vsel %vm1648, %v1637, %v1260
        %v1671 = vsel %vm1648, %v1638, %v1262
        %v1672 = vsel %vm1648, %v1639, %v1264
        %v1673 = vsel %vm1648, %v1640, %v1266
        %v1674 = vsel %vm1648, %v1641, %v1268
        %v1675 = vsel %vm1648, %v1642, %v1270
        %v1676 = vsel %vm1648, %v1643, %v1272
        %v1677 = vsel %vm1648, %v1644, %v1274
        %v1678 = vsel %vm1648, %v1645, %v1276
        %v1679 = vsel %vm1648, %v1646, %v1274
        %v1680 = vsel %vm1648, %v1647, %v1276
        %vm1681 = vcmask 228352
        %v1682 = vsel %vm1681, %v1649, %v1308
        %v1683 = vsel %vm1681, %v1650, %v1310
        %v1684 = vsel %vm1681, %v1651, %v1312
        %v1685 = vsel %vm1681, %v1652, %v1314
        %v1686 = vsel %vm1681, %v1653, %v1316
        %v1687 = vsel %vm1681, %v1654, %v1318
        %v1688 = vsel %vm1681, %v1655, %v1320
        %v1689 = vsel %vm1681, %v1656, %v1322
        %v1690 = vsel %vm1681, %v1657, %v1324
        %v1691 = vsel %vm1681, %v1658, %v1326
        %v1692 = vsel %vm1681, %v1659, %v1328
        %v1693 = vsel %vm1681, %v1660, %v1330
        %v1694 = vsel %vm1681, %v1661, %v1332
        %v1695 = vsel %vm1681, %v1662, %v1334
        %v1696 = vsel %vm1681, %v1663, %v1336
        %v1697 = vsel %vm1681, %v1664, %v1338
        %v1698 = vsel %vm1681, %v1665, %v1340
        %v1699 = vsel %vm1681, %v1666, %v1342
        %v1700 = vsel %vm1681, %v1667, %v1344
        %v1701 = vsel %vm1681, %v1668, %v1346
        %v1702 = vsel %vm1681, %v1669, %v1348
        %v1703 = vsel %vm1681, %v1670, %v1350
        %v1704 = vsel %vm1681, %v1671, %v1352
        %v1705 = vsel %vm1681, %v1672, %v1354
        %v1706 = vsel %vm1681, %v1673, %v1356
        %v1707 = vsel %vm1681, %v1674, %v1358
        %v1708 = vsel %vm1681, %v1675, %v1360
        %v1709 = vsel %vm1681, %v1676, %v1362
        %v1710 = vsel %vm1681, %v1677, %v1364
        %v1711 = vsel %vm1681, %v1678, %v1366
        %v1712 = vsel %vm1681, %v1679, %v1364
        %v1713 = vsel %vm1681, %v1680, %v1366
        %vm1714 = vcmask 261120
        %v1715 = vsel %vm1714, %v1682, %v1398
        %v1716 = vsel %vm1714, %v1683, %v1400
        %v1717 = vsel %vm1714, %v1684, %v1402
        %v1718 = vsel %vm1714, %v1685, %v1404
        %v1719 = vsel %vm1714, %v1686, %v1406
        %v1720 = vsel %vm1714, %v1687, %v1408
        %v1721 = vsel %vm1714, %v1688, %v1410
        %v1722 = vsel %vm1714, %v1689, %v1412
        %v1723 = vsel %vm1714, %v1690, %v1414
        %v1724 = vsel %vm1714, %v1691, %v1416
        %v1725 = vsel %vm1714, %v1692, %v1418
        %v1726 = vsel %vm1714, %v1693, %v1420
        %v1727 = vsel %vm1714, %v1694, %v1422
        %v1728 = vsel %vm1714, %v1695, %v1424
        %v1729 = vsel %vm1714, %v1696, %v1426
        %v1730 = vsel %vm1714, %v1697, %v1428
        %v1731 = vsel %vm1714, %v1698, %v1430
        %v1732 = vsel %vm1714, %v1699, %v1432
        %v1733 = vsel %vm1714, %v1700, %v1434
        %v1734 = vsel %vm1714, %v1701, %v1436
        %v1735 = vsel %vm1714, %v1702, %v1438
        %v1736 = vsel %vm1714, %v1703, %v1440
        %v1737 = vsel %vm1714, %v1704, %v1442
        %v1738 = vsel %vm1714, %v1705, %v1444
        %v1739 = vsel %vm1714, %v1706, %v1446
        %v1740 = vsel %vm1714, %v1707, %v1448
        %v1741 = vsel %vm1714, %v1708, %v1450
        %v1742 = vsel %vm1714, %v1709, %v1452
        %v1743 = vsel %vm1714, %v1710, %v1454
        %v1744 = vsel %vm1714, %v1711, %v1456
        %v1745 = vsel %vm1714, %v1712, %v1454
        %v1746 = vsel %vm1714, %v1713, %v1456
        %v1747 = vld [vmem:[%s1] sm:$0xff]
        %v1748 = vld [vmem:[%s1 + $0x8] sm:$0xff]
        %v1749 = vld [vmem:[%s1 + $0x10] sm:$0xff]
        %v1750 = vld [vmem:[%s1 + $0x18] sm:$0xff]
        %v1751 = vld [vmem:[%s1 + $0x20] sm:$0xf]
        %v1752 = vld [vmem:[%s2] sm:$0x1]
        %v1754 = vlaneseq
        %v1755 = vshrl.u32 %v1754, 7
        %v1756 = vsub.s32 0, %v1755
        %v1757 = vrot.slane %v1752, %v1756
        %vm1759 = vcmask 293888
        %v1761 = vsel %vm1759, %v1715, 0
        %v1764 = vsel %vm1759, %v1716, 0
        %v1767 = vsel %vm1759, %v1717, 0
        %v1770 = vsel %vm1759, %v1718, 0
        %v1773 = vsel %vm1759, %v1719, 0
        %v1776 = vsel %vm1759, %v1720, 0
        %v1779 = vsel %vm1759, %v1721, 0
        %v1782 = vsel %vm1759, %v1722, 0
        %v1785 = vsel %vm1759, %v1723, 0
        %v1788 = vsel %vm1759, %v1724, 0
        %v1791 = vsel %vm1759, %v1725, 0
        %v1794 = vsel %vm1759, %v1726, 0
        %v1797 = vsel %vm1759, %v1727, 0
        %v1800 = vsel %vm1759, %v1728, 0
        %v1803 = vsel %vm1759, %v1729, 0
        %v1806 = vsel %vm1759, %v1730, 0
        %v1809 = vsel %vm1759, %v1731, 0
        %v1812 = vsel %vm1759, %v1732, 0
        %v1815 = vsel %vm1759, %v1733, 0
        %v1818 = vsel %vm1759, %v1734, 0
        %v1821 = vsel %vm1759, %v1735, 0
        %v1824 = vsel %vm1759, %v1736, 0
        %v1827 = vsel %vm1759, %v1737, 0
        %v1830 = vsel %vm1759, %v1738, 0
        %v1833 = vsel %vm1759, %v1739, 0
        %v1836 = vsel %vm1759, %v1740, 0
        %v1839 = vsel %vm1759, %v1741, 0
        %v1842 = vsel %vm1759, %v1742, 0
        %v1845 = vsel %vm1759, %v1743, 0
        %v1848 = vsel %vm1759, %v1744, 0
        %v1851 = vsel %vm1759, %v1745, 0
        %v1854 = vsel %vm1759, %v1746, 0
        %vm1856 = vcmask 1043456
        %v1858 = vsel %vm1856, %v1751, 0
        %1860 = vmatprep.subr.mxu0 0.0
        %1861 = vmatpush1.msra.mxu0 0.0
        %1862 = vmatprep.subr.mxu0 0.0
        %1863 = vmatpush1.msra.mxu0 0.0
        %1864 = vmatprep.subr.mxu0 0.0
        %1865 = vmatpush1.msra.mxu0 0.0
        %1866 = vmatprep.subr.mxu0 0.0
        %1867 = vmatpush1.msra.mxu0 0.0
        %1868 = vmatprep.subr.mxu0 0.0
        %1869 = vmatpush1.msra.mxu0 0.0
        %1870 = vmatprep.subr.mxu0 0.0
        %1871 = vmatpush1.msra.mxu0 0.0
        %1872 = vmatprep.subr.mxu0 0.0
        %1873 = vmatpush1.msra.mxu0 0.0
        %1874 = vmatprep.subr.mxu0 0.0
        %1875 = vmatpush1.msra.mxu0 0.0
        %1876 = vmatprep.subr.mxu0 0.0
        %1877 = vmatpush1.msra.mxu0 0.0
        %1878 = vmatprep.subr.mxu0 0.0
        %1879 = vmatpush1.msra.mxu0 0.0
        %1880 = vmatprep.subr.mxu0 0.0
        %1881 = vmatpush1.msra.mxu0 0.0
        %1882 = vmatprep.subr.mxu0 0.0
        %1883 = vmatpush1.msra.mxu0 %v1858
        %1884 = vmatprep.subr.mxu0 0.0
        %1885 = vmatpush1.msra.mxu0 %v1750
        %1886 = vmatprep.subr.mxu0 0.0
        %1887 = vmatpush1.msra.mxu0 %v1749
        %1888 = vmatprep.subr.mxu0 0.0
        %1889 = vmatpush1.msra.mxu0 %v1748
        %1890 = vmatprep.subr.mxu0 0.0
        %1891 = vmatpush1.msra.mxu0 %v1747
        %1892 = vmatprep.subr.mxu0 0.0
        %1893 = vmatpush2.msra.mxu0 0.0
        %1894 = vmatprep.subr.mxu0 0.0
        %1895 = vmatpush2.msra.mxu0 0.0
        %1896 = vmatprep.subr.mxu0 0.0
        %1897 = vmatpush2.msra.mxu0 0.0
        %1898 = vmatprep.subr.mxu0 0.0
        %1899 = vmatpush2.msra.mxu0 0.0
        %1900 = vmatprep.subr.mxu0 0.0
        %1901 = vmatpush2.msra.mxu0 0.0
        %1902 = vmatprep.subr.mxu0 0.0
        %1903 = vmatpush2.msra.mxu0 0.0
        %1904 = vmatprep.subr.mxu0 0.0
        %1905 = vmatpush2.msra.mxu0 0.0
        %1906 = vmatprep.subr.mxu0 0.0
        %1907 = vmatpush2.msra.mxu0 0.0
        %1908 = vmatprep.subr.mxu0 0.0
        %1909 = vmatpush2.msra.mxu0 0.0
        %1910 = vmatprep.subr.mxu0 0.0
        %1911 = vmatpush2.msra.mxu0 0.0
        %1912 = vmatprep.subr.mxu0 0.0
        %1913 = vmatpush2.msra.mxu0 0.0
        %1914 = vmatprep.subr.mxu0 0.0
        %1915 = vmatpush2.msra.mxu0 0.0
        %1916 = vmatprep.subr.mxu0 0.0
        %1917 = vmatpush2.msra.mxu0 0.0
        %1918 = vmatprep.subr.mxu0 0.0
        %1919 = vmatpush2.msra.mxu0 0.0
        %1920 = vmatprep.subr.mxu0 0.0
        %1921 = vmatpush2.msra.mxu0 0.0
        %1922 = vmatprep.subr.mxu0 0.0
        %1923 = vmatpush2.msra.mxu0 0.0
        %1924 = vmatprep.mubr.f32.mxu0 0.0
        %1925 = vmatmul.mubr.f32.gmra.mxu0 %v1761
        %v1926 = vpop.f32.mrf.mxu0
        %v1927 = vadd.f32 %v1757, %v1926
        %v1928 = vpop.f32.mrf.mxu0
        %1929 = vmatprep.mubr.f32.mxu0 0.0
        %1930 = vmatmul.mubr.f32.gmra.mxu0 %v1764
        %v1931 = vpop.f32.mrf.mxu0
        %v1932 = vadd.f32 %v1757, %v1931
        %v1933 = vpop.f32.mrf.mxu0
        %1934 = vmatprep.mubr.f32.mxu0 0.0
        %1935 = vmatmul.mubr.f32.gmra.mxu0 %v1767
        %v1936 = vpop.f32.mrf.mxu0
        %v1937 = vadd.f32 %v1757, %v1936
        %v1938 = vpop.f32.mrf.mxu0
        %1939 = vmatprep.mubr.f32.mxu0 0.0
        %1940 = vmatmul.mubr.f32.gmra.mxu0 %v1770
        %v1941 = vpop.f32.mrf.mxu0
        %v1942 = vadd.f32 %v1757, %v1941
        %v1943 = vpop.f32.mrf.mxu0
        %1944 = vmatprep.mubr.f32.mxu0 0.0
        %1945 = vmatmul.mubr.f32.gmra.mxu0 %v1773
        %v1946 = vpop.f32.mrf.mxu0
        %v1947 = vadd.f32 %v1757, %v1946
        %v1948 = vpop.f32.mrf.mxu0
        %1949 = vmatprep.mubr.f32.mxu0 0.0
        %1950 = vmatmul.mubr.f32.gmra.mxu0 %v1776
        %v1951 = vpop.f32.mrf.mxu0
        %v1952 = vadd.f32 %v1757, %v1951
        %v1953 = vpop.f32.mrf.mxu0
        %1954 = vmatprep.mubr.f32.mxu0 0.0
        %1955 = vmatmul.mubr.f32.gmra.mxu0 %v1779
        %v1956 = vpop.f32.mrf.mxu0
        %v1957 = vadd.f32 %v1757, %v1956
        %v1958 = vpop.f32.mrf.mxu0
        %1959 = vmatprep.mubr.f32.mxu0 0.0
        %1960 = vmatmul.mubr.f32.gmra.mxu0 %v1782
        %v1961 = vpop.f32.mrf.mxu0
        %v1962 = vadd.f32 %v1757, %v1961
        %v1963 = vpop.f32.mrf.mxu0
        %1964 = vmatprep.mubr.f32.mxu0 0.0
        %1965 = vmatmul.mubr.f32.gmra.mxu0 %v1785
        %v1966 = vpop.f32.mrf.mxu0
        %v1967 = vadd.f32 %v1757, %v1966
        %v1968 = vpop.f32.mrf.mxu0
        %1969 = vmatprep.mubr.f32.mxu0 0.0
        %1970 = vmatmul.mubr.f32.gmra.mxu0 %v1788
        %v1971 = vpop.f32.mrf.mxu0
        %v1972 = vadd.f32 %v1757, %v1971
        %v1973 = vpop.f32.mrf.mxu0
        %1974 = vmatprep.mubr.f32.mxu0 0.0
        %1975 = vmatmul.mubr.f32.gmra.mxu0 %v1791
        %v1976 = vpop.f32.mrf.mxu0
        %v1977 = vadd.f32 %v1757, %v1976
        %v1978 = vpop.f32.mrf.mxu0
        %1979 = vmatprep.mubr.f32.mxu0 0.0
        %1980 = vmatmul.mubr.f32.gmra.mxu0 %v1794
        %v1981 = vpop.f32.mrf.mxu0
        %v1982 = vadd.f32 %v1757, %v1981
        %v1983 = vpop.f32.mrf.mxu0
        %1984 = vmatprep.mubr.f32.mxu0 0.0
        %1985 = vmatmul.mubr.f32.gmra.mxu0 %v1797
        %v1986 = vpop.f32.mrf.mxu0
        %v1987 = vadd.f32 %v1757, %v1986
        %v1988 = vpop.f32.mrf.mxu0
        %1989 = vmatprep.mubr.f32.mxu0 0.0
        %1990 = vmatmul.mubr.f32.gmra.mxu0 %v1800
        %v1991 = vpop.f32.mrf.mxu0
        %v1992 = vadd.f32 %v1757, %v1991
        %v1993 = vpop.f32.mrf.mxu0
        %1994 = vmatprep.mubr.f32.mxu0 0.0
        %1995 = vmatmul.mubr.f32.gmra.mxu0 %v1803
        %v1996 = vpop.f32.mrf.mxu0
        %v1997 = vadd.f32 %v1757, %v1996
        %v1998 = vpop.f32.mrf.mxu0
        %1999 = vmatprep.mubr.f32.mxu0 0.0
        %2000 = vmatmul.mubr.f32.gmra.mxu0 %v1806
        %v2001 = vpop.f32.mrf.mxu0
        %v2002 = vadd.f32 %v1757, %v2001
        %v2003 = vpop.f32.mrf.mxu0
        %2004 = vmatprep.mubr.f32.mxu0 0.0
        %2005 = vmatmul.mubr.f32.gmra.mxu0 %v1809
        %v2006 = vpop.f32.mrf.mxu0
        %v2007 = vadd.f32 %v1757, %v2006
        %v2008 = vpop.f32.mrf.mxu0
        %2009 = vmatprep.mubr.f32.mxu0 0.0
        %2010 = vmatmul.mubr.f32.gmra.mxu0 %v1812
        %v2011 = vpop.f32.mrf.mxu0
        %v2012 = vadd.f32 %v1757, %v2011
        %v2013 = vpop.f32.mrf.mxu0
        %2014 = vmatprep.mubr.f32.mxu0 0.0
        %2015 = vmatmul.mubr.f32.gmra.mxu0 %v1815
        %v2016 = vpop.f32.mrf.mxu0
        %v2017 = vadd.f32 %v1757, %v2016
        %v2018 = vpop.f32.mrf.mxu0
        %2019 = vmatprep.mubr.f32.mxu0 0.0
        %2020 = vmatmul.mubr.f32.gmra.mxu0 %v1818
        %v2021 = vpop.f32.mrf.mxu0
        %v2022 = vadd.f32 %v1757, %v2021
        %v2023 = vpop.f32.mrf.mxu0
        %2024 = vmatprep.mubr.f32.mxu0 0.0
        %2025 = vmatmul.mubr.f32.gmra.mxu0 %v1821
        %v2026 = vpop.f32.mrf.mxu0
        %v2027 = vadd.f32 %v1757, %v2026
        %v2028 = vpop.f32.mrf.mxu0
        %2029 = vmatprep.mubr.f32.mxu0 0.0
        %2030 = vmatmul.mubr.f32.gmra.mxu0 %v1824
        %v2031 = vpop.f32.mrf.mxu0
        %v2032 = vadd.f32 %v1757, %v2031
        %v2033 = vpop.f32.mrf.mxu0
        %2034 = vmatprep.mubr.f32.mxu0 0.0
        %2035 = vmatmul.mubr.f32.gmra.mxu0 %v1827
        %v2036 = vpop.f32.mrf.mxu0
        %v2037 = vadd.f32 %v1757, %v2036
        %v2038 = vpop.f32.mrf.mxu0
        %2039 = vmatprep.mubr.f32.mxu0 0.0
        %2040 = vmatmul.mubr.f32.gmra.mxu0 %v1830
        %v2041 = vpop.f32.mrf.mxu0
        %v2042 = vadd.f32 %v1757, %v2041
        %v2043 = vpop.f32.mrf.mxu0
        %2044 = vmatprep.mubr.f32.mxu0 0.0
        %2045 = vmatmul.mubr.f32.gmra.mxu0 %v1833
        %v2046 = vpop.f32.mrf.mxu0
        %v2047 = vadd.f32 %v1757, %v2046
        %v2048 = vpop.f32.mrf.mxu0
        %2049 = vmatprep.mubr.f32.mxu0 0.0
        %2050 = vmatmul.mubr.f32.gmra.mxu0 %v1836
        %v2051 = vpop.f32.mrf.mxu0
        %v2052 = vadd.f32 %v1757, %v2051
        %v2053 = vpop.f32.mrf.mxu0
        %2054 = vmatprep.mubr.f32.mxu0 0.0
        %2055 = vmatmul.mubr.f32.gmra.mxu0 %v1839
        %v2056 = vpop.f32.mrf.mxu0
        %v2057 = vadd.f32 %v1757, %v2056
        %v2058 = vpop.f32.mrf.mxu0
        %2059 = vmatprep.mubr.f32.mxu0 0.0
        %2060 = vmatmul.mubr.f32.gmra.mxu0 %v1842
        %v2061 = vpop.f32.mrf.mxu0
        %v2062 = vadd.f32 %v1757, %v2061
        %v2063 = vpop.f32.mrf.mxu0
        %2064 = vmatprep.mubr.f32.mxu0 0.0
        %2065 = vmatmul.mubr.f32.gmra.mxu0 %v1845
        %v2066 = vpop.f32.mrf.mxu0
        %v2067 = vadd.f32 %v1757, %v2066
        %v2068 = vpop.f32.mrf.mxu0
        %2069 = vmatprep.mubr.f32.mxu0 0.0
        %2070 = vmatmul.mubr.f32.gmra.mxu0 %v1848
        %v2071 = vpop.f32.mrf.mxu0
        %v2072 = vadd.f32 %v1757, %v2071
        %v2073 = vpop.f32.mrf.mxu0
        %2074 = vmatprep.mubr.f32.mxu0 0.0
        %2075 = vmatmul.mubr.f32.gmra.mxu0 %v1851
        %v2076 = vpop.f32.mrf.mxu0
        %v2077 = vadd.f32 %v1757, %v2076
        %v2078 = vpop.f32.mrf.mxu0
        %2079 = vmatprep.mubr.f32.mxu0 0.0
        %2080 = vmatmul.mubr.f32.gmra.mxu0 %v1854
        %v2081 = vpop.f32.mrf.mxu0
        %v2082 = vadd.f32 %v1757, %v2081
        %v2083 = vpop.f32.mrf.mxu0
        %2084 = vdwg.mxu0
        %v2085 = vmax.f32 %v1927, 0.0
        %v2086 = vmax.f32 %v1932, 0.0
        %v2087 = vmax.f32 %v1937, 0.0
        %v2088 = vmax.f32 %v1942, 0.0
        %v2089 = vmax.f32 %v1947, 0.0
        %v2090 = vmax.f32 %v1952, 0.0
        %v2091 = vmax.f32 %v1957, 0.0
        %v2092 = vmax.f32 %v1962, 0.0
        %v2093 = vmax.f32 %v1967, 0.0
        %v2094 = vmax.f32 %v1972, 0.0
        %v2095 = vmax.f32 %v1977, 0.0
        %v2096 = vmax.f32 %v1982, 0.0
        %v2097 = vmax.f32 %v1987, 0.0
        %v2098 = vmax.f32 %v1992, 0.0
        %v2099 = vmax.f32 %v1997, 0.0
        %v2100 = vmax.f32 %v2002, 0.0
        %v2101 = vmax.f32 %v2007, 0.0
        %v2102 = vmax.f32 %v2012, 0.0
        %v2103 = vmax.f32 %v2017, 0.0
        %v2104 = vmax.f32 %v2022, 0.0
        %v2105 = vmax.f32 %v2027, 0.0
        %v2106 = vmax.f32 %v2032, 0.0
        %v2107 = vmax.f32 %v2037, 0.0
        %v2108 = vmax.f32 %v2042, 0.0
        %v2109 = vmax.f32 %v2047, 0.0
        %v2110 = vmax.f32 %v2052, 0.0
        %v2111 = vmax.f32 %v2057, 0.0
        %v2112 = vmax.f32 %v2062, 0.0
        %v2113 = vmax.f32 %v2067, 0.0
        %v2114 = vmax.f32 %v2072, 0.0
        %v2115 = vmax.f32 %v2077, 0.0
        %v2116 = vmax.f32 %v2082, 0.0
        %v2149 = vrot.slane %v2085, 7
        %v2150 = vrot.slane %v2086, 7
        %v2151 = vsel %vm395, %v2149, %v2150
        %v2152 = vrot.slane %v2087, 7
        %v2153 = vrot.slane %v2088, 7
        %v2154 = vsel %vm395, %v2152, %v2153
        %v2155 = vrot.slane %v2089, 7
        %v2156 = vrot.slane %v2090, 7
        %v2157 = vsel %vm395, %v2155, %v2156
        %v2158 = vrot.slane %v2091, 7
        %v2159 = vrot.slane %v2092, 7
        %v2160 = vsel %vm395, %v2158, %v2159
        %v2161 = vrot.slane %v2093, 7
        %v2162 = vrot.slane %v2094, 7
        %v2163 = vsel %vm395, %v2161, %v2162
        %v2164 = vrot.slane %v2095, 7
        %v2165 = vrot.slane %v2096, 7
        %v2166 = vsel %vm395, %v2164, %v2165
        %v2167 = vrot.slane %v2097, 7
        %v2168 = vrot.slane %v2098, 7
        %v2169 = vsel %vm395, %v2167, %v2168
        %v2170 = vrot.slane %v2099, 7
        %v2171 = vrot.slane %v2100, 7
        %v2172 = vsel %vm395, %v2170, %v2171
        %v2173 = vrot.slane %v2101, 7
        %v2174 = vrot.slane %v2102, 7
        %v2175 = vsel %vm395, %v2173, %v2174
        %v2176 = vrot.slane %v2103, 7
        %v2177 = vrot.slane %v2104, 7
        %v2178 = vsel %vm395, %v2176, %v2177
        %v2179 = vrot.slane %v2105, 7
        %v2180 = vrot.slane %v2106, 7
        %v2181 = vsel %vm395, %v2179, %v2180
        %v2182 = vrot.slane %v2107, 7
        %v2183 = vrot.slane %v2108, 7
        %v2184 = vsel %vm395, %v2182, %v2183
        %v2185 = vrot.slane %v2109, 7
        %v2186 = vrot.slane %v2110, 7
        %v2187 = vsel %vm395, %v2185, %v2186
        %v2188 = vrot.slane %v2111, 7
        %v2189 = vrot.slane %v2112, 7
        %v2190 = vsel %vm395, %v2188, %v2189
        %v2191 = vrot.slane %v2113, 7
        %v2192 = vrot.slane %v2114, 7
        %v2193 = vsel %vm395, %v2191, %v2192
        %v2194 = vrot.slane %v2115, 7
        %v2195 = vrot.slane %v2116, 7
        %v2196 = vsel %vm395, %v2194, %v2195
        %v2244 = vrot.slane %v2086, 6
        %v2245 = vrot.slane %v2088, 6
        %v2246 = vrot.slane %v2090, 6
        %v2247 = vrot.slane %v2092, 6
        %v2248 = vrot.slane %v2094, 6
        %v2249 = vrot.slane %v2096, 6
        %v2250 = vrot.slane %v2098, 6
        %v2251 = vrot.slane %v2100, 6
        %v2252 = vrot.slane %v2102, 6
        %v2253 = vrot.slane %v2104, 6
        %v2254 = vrot.slane %v2106, 6
        %v2255 = vrot.slane %v2108, 6
        %v2256 = vrot.slane %v2110, 6
        %v2257 = vrot.slane %v2112, 6
        %v2258 = vrot.slane %v2114, 6
        %v2259 = vrot.slane %v2116, 6
        %v2276 = vsel %vm395, %v2085, %v2149
        %v2277 = vsel %vm395, %v2087, %v2152
        %v2278 = vsel %vm395, %v2089, %v2155
        %v2279 = vsel %vm395, %v2091, %v2158
        %v2280 = vsel %vm395, %v2093, %v2161
        %v2281 = vsel %vm395, %v2095, %v2164
        %v2282 = vsel %vm395, %v2097, %v2167
        %v2283 = vsel %vm395, %v2099, %v2170
        %v2284 = vsel %vm395, %v2101, %v2173
        %v2285 = vsel %vm395, %v2103, %v2176
        %v2286 = vsel %vm395, %v2105, %v2179
        %v2287 = vsel %vm395, %v2107, %v2182
        %v2288 = vsel %vm395, %v2109, %v2185
        %v2289 = vsel %vm395, %v2111, %v2188
        %v2290 = vsel %vm395, %v2113, %v2191
        %v2291 = vsel %vm395, %v2115, %v2194
        %v2292 = vsel %vm395, %v2150, %v2244
        %v2293 = vsel %vm395, %v2153, %v2245
        %v2294 = vsel %vm395, %v2156, %v2246
        %v2295 = vsel %vm395, %v2159, %v2247
        %v2296 = vsel %vm395, %v2162, %v2248
        %v2297 = vsel %vm395, %v2165, %v2249
        %v2298 = vsel %vm395, %v2168, %v2250
        %v2299 = vsel %vm395, %v2171, %v2251
        %v2300 = vsel %vm395, %v2174, %v2252
        %v2301 = vsel %vm395, %v2177, %v2253
        %v2302 = vsel %vm395, %v2180, %v2254
        %v2303 = vsel %vm395, %v2183, %v2255
        %v2304 = vsel %vm395, %v2186, %v2256
        %v2305 = vsel %vm395, %v2189, %v2257
        %v2306 = vsel %vm395, %v2192, %v2258
        %v2307 = vsel %vm395, %v2195, %v2259
        %v2338 = vrot.slane %v2276, 1
        %v2339 = vrot.slane %v2151, 1
        %v2340 = vsel %vm585, %v2338, %v2339
        %v2341 = vrot.slane %v2292, 1
        %v2342 = vsel %vm585, %v2339, %v2341
        %v2343 = vrot.slane %v2277, 1
        %v2344 = vrot.slane %v2154, 1
        %v2345 = vsel %vm585, %v2343, %v2344
        %v2346 = vrot.slane %v2293, 1
        %v2347 = vsel %vm585, %v2344, %v2346
        %v2348 = vrot.slane %v2278, 1
        %v2349 = vrot.slane %v2157, 1
        %v2350 = vsel %vm585, %v2348, %v2349
        %v2351 = vrot.slane %v2294, 1
        %v2352 = vsel %vm585, %v2349, %v2351
        %v2353 = vrot.slane %v2279, 1
        %v2354 = vrot.slane %v2160, 1
        %v2355 = vsel %vm585, %v2353, %v2354
        %v2356 = vrot.slane %v2295, 1
        %v2357 = vsel %vm585, %v2354, %v2356
        %v2358 = vrot.slane %v2280, 1
        %v2359 = vrot.slane %v2163, 1
        %v2360 = vsel %vm585, %v2358, %v2359
        %v2361 = vrot.slane %v2296, 1
        %v2362 = vsel %vm585, %v2359, %v2361
        %v2363 = vrot.slane %v2281, 1
        %v2364 = vrot.slane %v2166, 1
        %v2365 = vsel %vm585, %v2363, %v2364
        %v2366 = vrot.slane %v2297, 1
        %v2367 = vsel %vm585, %v2364, %v2366
        %v2368 = vrot.slane %v2282, 1
        %v2369 = vrot.slane %v2169, 1
        %v2370 = vsel %vm585, %v2368, %v2369
        %v2371 = vrot.slane %v2298, 1
        %v2372 = vsel %vm585, %v2369, %v2371
        %v2373 = vrot.slane %v2283, 1
        %v2374 = vrot.slane %v2172, 1
        %v2375 = vsel %vm585, %v2373, %v2374
        %v2376 = vrot.slane %v2299, 1
        %v2377 = vsel %vm585, %v2374, %v2376
        %v2378 = vrot.slane %v2284, 1
        %v2379 = vrot.slane %v2175, 1
        %v2380 = vsel %vm585, %v2378, %v2379
        %v2381 = vrot.slane %v2300, 1
        %v2382 = vsel %vm585, %v2379, %v2381
        %v2383 = vrot.slane %v2285, 1
        %v2384 = vrot.slane %v2178, 1
        %v2385 = vsel %vm585, %v2383, %v2384
        %v2386 = vrot.slane %v2301, 1
        %v2387 = vsel %vm585, %v2384, %v2386
        %v2388 = vrot.slane %v2286, 1
        %v2389 = vrot.slane %v2181, 1
        %v2390 = vsel %vm585, %v2388, %v2389
        %v2391 = vrot.slane %v2302, 1
        %v2392 = vsel %vm585, %v2389, %v2391
        %v2393 = vrot.slane %v2287, 1
        %v2394 = vrot.slane %v2184, 1
        %v2395 = vsel %vm585, %v2393, %v2394
        %v2396 = vrot.slane %v2303, 1
        %v2397 = vsel %vm585, %v2394, %v2396
        %v2398 = vrot.slane %v2288, 1
        %v2399 = vrot.slane %v2187, 1
        %v2400 = vsel %vm585, %v2398, %v2399
        %v2401 = vrot.slane %v2304, 1
        %v2402 = vsel %vm585, %v2399, %v2401
        %v2403 = vrot.slane %v2289, 1
        %v2404 = vrot.slane %v2190, 1
        %v2405 = vsel %vm585, %v2403, %v2404
        %v2406 = vrot.slane %v2305, 1
        %v2407 = vsel %vm585, %v2404, %v2406
        %v2408 = vrot.slane %v2290, 1
        %v2409 = vrot.slane %v2193, 1
        %v2410 = vsel %vm585, %v2408, %v2409
        %v2411 = vrot.slane %v2306, 1
        %v2412 = vsel %vm585, %v2409, %v2411
        %v2413 = vrot.slane %v2276, 2
        %v2414 = vrot.slane %v2151, 2
        %v2415 = vsel %vm661, %v2413, %v2414
        %v2416 = vrot.slane %v2292, 2
        %v2417 = vsel %vm661, %v2414, %v2416
        %v2418 = vrot.slane %v2277, 2
        %v2419 = vrot.slane %v2154, 2
        %v2420 = vsel %vm661, %v2418, %v2419
        %v2421 = vrot.slane %v2293, 2
        %v2422 = vsel %vm661, %v2419, %v2421
        %v2423 = vrot.slane %v2278, 2
        %v2424 = vrot.slane %v2157, 2
        %v2425 = vsel %vm661, %v2423, %v2424
        %v2426 = vrot.slane %v2294, 2
        %v2427 = vsel %vm661, %v2424, %v2426
        %v2428 = vrot.slane %v2279, 2
        %v2429 = vrot.slane %v2160, 2
        %v2430 = vsel %vm661, %v2428, %v2429
        %v2431 = vrot.slane %v2295, 2
        %v2432 = vsel %vm661, %v2429, %v2431
        %v2433 = vrot.slane %v2280, 2
        %v2434 = vrot.slane %v2163, 2
        %v2435 = vsel %vm661, %v2433, %v2434
        %v2436 = vrot.slane %v2296, 2
        %v2437 = vsel %vm661, %v2434, %v2436
        %v2438 = vrot.slane %v2281, 2
        %v2439 = vrot.slane %v2166, 2
        %v2440 = vsel %vm661, %v2438, %v2439
        %v2441 = vrot.slane %v2297, 2
        %v2442 = vsel %vm661, %v2439, %v2441
        %v2443 = vrot.slane %v2282, 2
        %v2444 = vrot.slane %v2169, 2
        %v2445 = vsel %vm661, %v2443, %v2444
        %v2446 = vrot.slane %v2298, 2
        %v2447 = vsel %vm661, %v2444, %v2446
        %v2448 = vrot.slane %v2283, 2
        %v2449 = vrot.slane %v2172, 2
        %v2450 = vsel %vm661, %v2448, %v2449
        %v2451 = vrot.slane %v2299, 2
        %v2452 = vsel %vm661, %v2449, %v2451
        %v2453 = vrot.slane %v2284, 2
        %v2454 = vrot.slane %v2175, 2
        %v2455 = vsel %vm661, %v2453, %v2454
        %v2456 = vrot.slane %v2300, 2
        %v2457 = vsel %vm661, %v2454, %v2456
        %v2458 = vrot.slane %v2285, 2
        %v2459 = vrot.slane %v2178, 2
        %v2460 = vsel %vm661, %v2458, %v2459
        %v2461 = vrot.slane %v2301, 2
        %v2462 = vsel %vm661, %v2459, %v2461
        %v2463 = vrot.slane %v2286, 2
        %v2464 = vrot.slane %v2181, 2
        %v2465 = vsel %vm661, %v2463, %v2464
        %v2466 = vrot.slane %v2302, 2
        %v2467 = vsel %vm661, %v2464, %v2466
        %v2468 = vrot.slane %v2287, 2
        %v2469 = vrot.slane %v2184, 2
        %v2470 = vsel %vm661, %v2468, %v2469
        %v2471 = vrot.slane %v2303, 2
        %v2472 = vsel %vm661, %v2469, %v2471
        %v2473 = vrot.slane %v2288, 2
        %v2474 = vrot.slane %v2187, 2
        %v2475 = vsel %vm661, %v2473, %v2474
        %v2476 = vrot.slane %v2304, 2
        %v2477 = vsel %vm661, %v2474, %v2476
        %v2478 = vrot.slane %v2289, 2
        %v2479 = vrot.slane %v2190, 2
        %v2480 = vsel %vm661, %v2478, %v2479
        %v2481 = vrot.slane %v2305, 2
        %v2482 = vsel %vm661, %v2479, %v2481
        %v2483 = vrot.slane %v2290, 2
        %v2484 = vrot.slane %v2193, 2
        %v2485 = vsel %vm661, %v2483, %v2484
        %v2486 = vrot.slane %v2306, 2
        %v2487 = vsel %vm661, %v2484, %v2486
        %v2490 = vrot.slane %v2291, 1
        %v2491 = vrot.slane %v2196, 1
        %v2492 = vsel %vm585, %v2490, %v2491
        %v2493 = vrot.slane %v2307, 1
        %v2494 = vsel %vm585, %v2491, %v2493
        %v2495 = vrot.slane %v2291, 2
        %v2496 = vrot.slane %v2196, 2
        %v2497 = vsel %vm661, %v2495, %v2496
        %v2498 = vrot.slane %v2307, 2
        %v2499 = vsel %vm661, %v2496, %v2498
        %2500 = vrot.lane.b32.xlu0 %v2340, 16
        %v2501 = vpop.permute.xlu0 %2500
        %2502 = vrot.lane.b32.xlu0 %v2342, 16
        %v2503 = vpop.permute.xlu0 %2502
        %2504 = vrot.lane.b32.xlu0 %v2345, 16
        %v2505 = vpop.permute.xlu0 %2504
        %2506 = vrot.lane.b32.xlu0 %v2347, 16
        %v2507 = vpop.permute.xlu0 %2506
        %2508 = vrot.lane.b32.xlu0 %v2350, 16
        %v2509 = vpop.permute.xlu0 %2508
        %2510 = vrot.lane.b32.xlu0 %v2352, 16
        %v2511 = vpop.permute.xlu0 %2510
        %2512 = vrot.lane.b32.xlu0 %v2355, 16
        %v2513 = vpop.permute.xlu0 %2512
        %2514 = vrot.lane.b32.xlu0 %v2357, 16
        %v2515 = vpop.permute.xlu0 %2514
        %2516 = vrot.lane.b32.xlu0 %v2360, 16
        %v2517 = vpop.permute.xlu0 %2516
        %2518 = vrot.lane.b32.xlu0 %v2362, 16
        %v2519 = vpop.permute.xlu0 %2518
        %2520 = vrot.lane.b32.xlu0 %v2365, 16
        %v2521 = vpop.permute.xlu0 %2520
        %2522 = vrot.lane.b32.xlu0 %v2367, 16
        %v2523 = vpop.permute.xlu0 %2522
        %2524 = vrot.lane.b32.xlu0 %v2370, 16
        %v2525 = vpop.permute.xlu0 %2524
        %2526 = vrot.lane.b32.xlu0 %v2372, 16
        %v2527 = vpop.permute.xlu0 %2526
        %2528 = vrot.lane.b32.xlu0 %v2375, 16
        %v2529 = vpop.permute.xlu0 %2528
        %2530 = vrot.lane.b32.xlu0 %v2377, 16
        %v2531 = vpop.permute.xlu0 %2530
        %2532 = vrot.lane.b32.xlu0 %v2380, 16
        %v2533 = vpop.permute.xlu0 %2532
        %2534 = vrot.lane.b32.xlu0 %v2382, 16
        %v2535 = vpop.permute.xlu0 %2534
        %2536 = vrot.lane.b32.xlu0 %v2385, 16
        %v2537 = vpop.permute.xlu0 %2536
        %2538 = vrot.lane.b32.xlu0 %v2387, 16
        %v2539 = vpop.permute.xlu0 %2538
        %2540 = vrot.lane.b32.xlu0 %v2390, 16
        %v2541 = vpop.permute.xlu0 %2540
        %2542 = vrot.lane.b32.xlu0 %v2392, 16
        %v2543 = vpop.permute.xlu0 %2542
        %2544 = vrot.lane.b32.xlu0 %v2395, 16
        %v2545 = vpop.permute.xlu0 %2544
        %2546 = vrot.lane.b32.xlu0 %v2397, 16
        %v2547 = vpop.permute.xlu0 %2546
        %2548 = vrot.lane.b32.xlu0 %v2400, 16
        %v2549 = vpop.permute.xlu0 %2548
        %2550 = vrot.lane.b32.xlu0 %v2402, 16
        %v2551 = vpop.permute.xlu0 %2550
        %2552 = vrot.lane.b32.xlu0 %v2405, 16
        %v2553 = vpop.permute.xlu0 %2552
        %2554 = vrot.lane.b32.xlu0 %v2407, 16
        %v2555 = vpop.permute.xlu0 %2554
        %2556 = vrot.lane.b32.xlu0 %v2410, 16
        %v2557 = vpop.permute.xlu0 %2556
        %2558 = vrot.lane.b32.xlu0 %v2412, 16
        %v2559 = vpop.permute.xlu0 %2558
        %2590 = vrot.lane.b32.xlu0 %v2415, 32
        %v2591 = vpop.permute.xlu0 %2590
        %2592 = vrot.lane.b32.xlu0 %v2417, 32
        %v2593 = vpop.permute.xlu0 %2592
        %2594 = vrot.lane.b32.xlu0 %v2420, 32
        %v2595 = vpop.permute.xlu0 %2594
        %2596 = vrot.lane.b32.xlu0 %v2422, 32
        %v2597 = vpop.permute.xlu0 %2596
        %2598 = vrot.lane.b32.xlu0 %v2425, 32
        %v2599 = vpop.permute.xlu0 %2598
        %2600 = vrot.lane.b32.xlu0 %v2427, 32
        %v2601 = vpop.permute.xlu0 %2600
        %2602 = vrot.lane.b32.xlu0 %v2430, 32
        %v2603 = vpop.permute.xlu0 %2602
        %2604 = vrot.lane.b32.xlu0 %v2432, 32
        %v2605 = vpop.permute.xlu0 %2604
        %2606 = vrot.lane.b32.xlu0 %v2435, 32
        %v2607 = vpop.permute.xlu0 %2606
        %2608 = vrot.lane.b32.xlu0 %v2437, 32
        %v2609 = vpop.permute.xlu0 %2608
        %2610 = vrot.lane.b32.xlu0 %v2440, 32
        %v2611 = vpop.permute.xlu0 %2610
        %2612 = vrot.lane.b32.xlu0 %v2442, 32
        %v2613 = vpop.permute.xlu0 %2612
        %2614 = vrot.lane.b32.xlu0 %v2445, 32
        %v2615 = vpop.permute.xlu0 %2614
        %2616 = vrot.lane.b32.xlu0 %v2447, 32
        %v2617 = vpop.permute.xlu0 %2616
        %2618 = vrot.lane.b32.xlu0 %v2450, 32
        %v2619 = vpop.permute.xlu0 %2618
        %2620 = vrot.lane.b32.xlu0 %v2452, 32
        %v2621 = vpop.permute.xlu0 %2620
        %2622 = vrot.lane.b32.xlu0 %v2455, 32
        %v2623 = vpop.permute.xlu0 %2622
        %2624 = vrot.lane.b32.xlu0 %v2457, 32
        %v2625 = vpop.permute.xlu0 %2624
        %2626 = vrot.lane.b32.xlu0 %v2460, 32
        %v2627 = vpop.permute.xlu0 %2626
        %2628 = vrot.lane.b32.xlu0 %v2462, 32
        %v2629 = vpop.permute.xlu0 %2628
        %2630 = vrot.lane.b32.xlu0 %v2465, 32
        %v2631 = vpop.permute.xlu0 %2630
        %2632 = vrot.lane.b32.xlu0 %v2467, 32
        %v2633 = vpop.permute.xlu0 %2632
        %2634 = vrot.lane.b32.xlu0 %v2470, 32
        %v2635 = vpop.permute.xlu0 %2634
        %2636 = vrot.lane.b32.xlu0 %v2472, 32
        %v2637 = vpop.permute.xlu0 %2636
        %2638 = vrot.lane.b32.xlu0 %v2475, 32
        %v2639 = vpop.permute.xlu0 %2638
        %2640 = vrot.lane.b32.xlu0 %v2477, 32
        %v2641 = vpop.permute.xlu0 %2640
        %2642 = vrot.lane.b32.xlu0 %v2480, 32
        %v2643 = vpop.permute.xlu0 %2642
        %2644 = vrot.lane.b32.xlu0 %v2482, 32
        %v2645 = vpop.permute.xlu0 %2644
        %2646 = vrot.lane.b32.xlu0 %v2485, 32
        %v2647 = vpop.permute.xlu0 %2646
        %2648 = vrot.lane.b32.xlu0 %v2487, 32
        %v2649 = vpop.permute.xlu0 %2648
        %2680 = vrot.lane.b32.xlu0 %v2276, 48
        %v2681 = vpop.permute.xlu0 %2680
        %2682 = vrot.lane.b32.xlu0 %v2151, 48
        %v2683 = vpop.permute.xlu0 %2682
        %2684 = vrot.lane.b32.xlu0 %v2277, 48
        %v2685 = vpop.permute.xlu0 %2684
        %2686 = vrot.lane.b32.xlu0 %v2154, 48
        %v2687 = vpop.permute.xlu0 %2686
        %2688 = vrot.lane.b32.xlu0 %v2278, 48
        %v2689 = vpop.permute.xlu0 %2688
        %2690 = vrot.lane.b32.xlu0 %v2157, 48
        %v2691 = vpop.permute.xlu0 %2690
        %2692 = vrot.lane.b32.xlu0 %v2279, 48
        %v2693 = vpop.permute.xlu0 %2692
        %2694 = vrot.lane.b32.xlu0 %v2160, 48
        %v2695 = vpop.permute.xlu0 %2694
        %2696 = vrot.lane.b32.xlu0 %v2280, 48
        %v2697 = vpop.permute.xlu0 %2696
        %2698 = vrot.lane.b32.xlu0 %v2163, 48
        %v2699 = vpop.permute.xlu0 %2698
        %2700 = vrot.lane.b32.xlu0 %v2281, 48
        %v2701 = vpop.permute.xlu0 %2700
        %2702 = vrot.lane.b32.xlu0 %v2166, 48
        %v2703 = vpop.permute.xlu0 %2702
        %2704 = vrot.lane.b32.xlu0 %v2282, 48
        %v2705 = vpop.permute.xlu0 %2704
        %2706 = vrot.lane.b32.xlu0 %v2169, 48
        %v2707 = vpop.permute.xlu0 %2706
        %2708 = vrot.lane.b32.xlu0 %v2283, 48
        %v2709 = vpop.permute.xlu0 %2708
        %2710 = vrot.lane.b32.xlu0 %v2172, 48
        %v2711 = vpop.permute.xlu0 %2710
        %2712 = vrot.lane.b32.xlu0 %v2284, 48
        %v2713 = vpop.permute.xlu0 %2712
        %2714 = vrot.lane.b32.xlu0 %v2175, 48
        %v2715 = vpop.permute.xlu0 %2714
        %2716 = vrot.lane.b32.xlu0 %v2285, 48
        %v2717 = vpop.permute.xlu0 %2716
        %2718 = vrot.lane.b32.xlu0 %v2178, 48
        %v2719 = vpop.permute.xlu0 %2718
        %2720 = vrot.lane.b32.xlu0 %v2286, 48
        %v2721 = vpop.permute.xlu0 %2720
        %2722 = vrot.lane.b32.xlu0 %v2181, 48
        %v2723 = vpop.permute.xlu0 %2722
        %2724 = vrot.lane.b32.xlu0 %v2287, 48
        %v2725 = vpop.permute.xlu0 %2724
        %2726 = vrot.lane.b32.xlu0 %v2184, 48
        %v2727 = vpop.permute.xlu0 %2726
        %2728 = vrot.lane.b32.xlu0 %v2288, 48
        %v2729 = vpop.permute.xlu0 %2728
        %2730 = vrot.lane.b32.xlu0 %v2187, 48
        %v2731 = vpop.permute.xlu0 %2730
        %2732 = vrot.lane.b32.xlu0 %v2289, 48
        %v2733 = vpop.permute.xlu0 %2732
        %2734 = vrot.lane.b32.xlu0 %v2190, 48
        %v2735 = vpop.permute.xlu0 %2734
        %2736 = vrot.lane.b32.xlu0 %v2290, 48
        %v2737 = vpop.permute.xlu0 %2736
        %2738 = vrot.lane.b32.xlu0 %v2193, 48
        %v2739 = vpop.permute.xlu0 %2738
        %2740 = vrot.lane.b32.xlu0 %v2291, 48
        %v2741 = vpop.permute.xlu0 %2740
        %2742 = vrot.lane.b32.xlu0 %v2196, 48
        %v2743 = vpop.permute.xlu0 %2742
        %2776 = vrot.lane.b32.xlu0 %v2340, 64
        %v2777 = vpop.permute.xlu0 %2776
        %2778 = vrot.lane.b32.xlu0 %v2342, 64
        %v2779 = vpop.permute.xlu0 %2778
        %2780 = vrot.lane.b32.xlu0 %v2345, 64
        %v2781 = vpop.permute.xlu0 %2780
        %2782 = vrot.lane.b32.xlu0 %v2347, 64
        %v2783 = vpop.permute.xlu0 %2782
        %2784 = vrot.lane.b32.xlu0 %v2350, 64
        %v2785 = vpop.permute.xlu0 %2784
        %2786 = vrot.lane.b32.xlu0 %v2352, 64
        %v2787 = vpop.permute.xlu0 %2786
        %2788 = vrot.lane.b32.xlu0 %v2355, 64
        %v2789 = vpop.permute.xlu0 %2788
        %2790 = vrot.lane.b32.xlu0 %v2357, 64
        %v2791 = vpop.permute.xlu0 %2790
        %2792 = vrot.lane.b32.xlu0 %v2360, 64
        %v2793 = vpop.permute.xlu0 %2792
        %2794 = vrot.lane.b32.xlu0 %v2362, 64
        %v2795 = vpop.permute.xlu0 %2794
        %2796 = vrot.lane.b32.xlu0 %v2365, 64
        %v2797 = vpop.permute.xlu0 %2796
        %2798 = vrot.lane.b32.xlu0 %v2367, 64
        %v2799 = vpop.permute.xlu0 %2798
        %2800 = vrot.lane.b32.xlu0 %v2370, 64
        %v2801 = vpop.permute.xlu0 %2800
        %2802 = vrot.lane.b32.xlu0 %v2372, 64
        %v2803 = vpop.permute.xlu0 %2802
        %2804 = vrot.lane.b32.xlu0 %v2375, 64
        %v2805 = vpop.permute.xlu0 %2804
        %2806 = vrot.lane.b32.xlu0 %v2377, 64
        %v2807 = vpop.permute.xlu0 %2806
        %2808 = vrot.lane.b32.xlu0 %v2380, 64
        %v2809 = vpop.permute.xlu0 %2808
        %2810 = vrot.lane.b32.xlu0 %v2382, 64
        %v2811 = vpop.permute.xlu0 %2810
        %2812 = vrot.lane.b32.xlu0 %v2385, 64
        %v2813 = vpop.permute.xlu0 %2812
        %2814 = vrot.lane.b32.xlu0 %v2387, 64
        %v2815 = vpop.permute.xlu0 %2814
        %2816 = vrot.lane.b32.xlu0 %v2390, 64
        %v2817 = vpop.permute.xlu0 %2816
        %2818 = vrot.lane.b32.xlu0 %v2392, 64
        %v2819 = vpop.permute.xlu0 %2818
        %2820 = vrot.lane.b32.xlu0 %v2395, 64
        %v2821 = vpop.permute.xlu0 %2820
        %2822 = vrot.lane.b32.xlu0 %v2397, 64
        %v2823 = vpop.permute.xlu0 %2822
        %2824 = vrot.lane.b32.xlu0 %v2400, 64
        %v2825 = vpop.permute.xlu0 %2824
        %2826 = vrot.lane.b32.xlu0 %v2402, 64
        %v2827 = vpop.permute.xlu0 %2826
        %2828 = vrot.lane.b32.xlu0 %v2405, 64
        %v2829 = vpop.permute.xlu0 %2828
        %2830 = vrot.lane.b32.xlu0 %v2407, 64
        %v2831 = vpop.permute.xlu0 %2830
        %2832 = vrot.lane.b32.xlu0 %v2410, 64
        %v2833 = vpop.permute.xlu0 %2832
        %2834 = vrot.lane.b32.xlu0 %v2412, 64
        %v2835 = vpop.permute.xlu0 %2834
        %2836 = vrot.lane.b32.xlu0 %v2492, 64
        %v2837 = vpop.permute.xlu0 %2836
        %2838 = vrot.lane.b32.xlu0 %v2494, 64
        %v2839 = vpop.permute.xlu0 %2838
        %2872 = vrot.lane.b32.xlu0 %v2415, 80
        %v2873 = vpop.permute.xlu0 %2872
        %2874 = vrot.lane.b32.xlu0 %v2417, 80
        %v2875 = vpop.permute.xlu0 %2874
        %2876 = vrot.lane.b32.xlu0 %v2420, 80
        %v2877 = vpop.permute.xlu0 %2876
        %2878 = vrot.lane.b32.xlu0 %v2422, 80
        %v2879 = vpop.permute.xlu0 %2878
        %2880 = vrot.lane.b32.xlu0 %v2425, 80
        %v2881 = vpop.permute.xlu0 %2880
        %2882 = vrot.lane.b32.xlu0 %v2427, 80
        %v2883 = vpop.permute.xlu0 %2882
        %2884 = vrot.lane.b32.xlu0 %v2430, 80
        %v2885 = vpop.permute.xlu0 %2884
        %2886 = vrot.lane.b32.xlu0 %v2432, 80
        %v2887 = vpop.permute.xlu0 %2886
        %2888 = vrot.lane.b32.xlu0 %v2435, 80
        %v2889 = vpop.permute.xlu0 %2888
        %2890 = vrot.lane.b32.xlu0 %v2437, 80
        %v2891 = vpop.permute.xlu0 %2890
        %2892 = vrot.lane.b32.xlu0 %v2440, 80
        %v2893 = vpop.permute.xlu0 %2892
        %2894 = vrot.lane.b32.xlu0 %v2442, 80
        %v2895 = vpop.permute.xlu0 %2894
        %2896 = vrot.lane.b32.xlu0 %v2445, 80
        %v2897 = vpop.permute.xlu0 %2896
        %2898 = vrot.lane.b32.xlu0 %v2447, 80
        %v2899 = vpop.permute.xlu0 %2898
        %2900 = vrot.lane.b32.xlu0 %v2450, 80
        %v2901 = vpop.permute.xlu0 %2900
        %2902 = vrot.lane.b32.xlu0 %v2452, 80
        %v2903 = vpop.permute.xlu0 %2902
        %2904 = vrot.lane.b32.xlu0 %v2455, 80
        %v2905 = vpop.permute.xlu0 %2904
        %2906 = vrot.lane.b32.xlu0 %v2457, 80
        %v2907 = vpop.permute.xlu0 %2906
        %2908 = vrot.lane.b32.xlu0 %v2460, 80
        %v2909 = vpop.permute.xlu0 %2908
        %2910 = vrot.lane.b32.xlu0 %v2462, 80
        %v2911 = vpop.permute.xlu0 %2910
        %2912 = vrot.lane.b32.xlu0 %v2465, 80
        %v2913 = vpop.permute.xlu0 %2912
        %2914 = vrot.lane.b32.xlu0 %v2467, 80
        %v2915 = vpop.permute.xlu0 %2914
        %2916 = vrot.lane.b32.xlu0 %v2470, 80
        %v2917 = vpop.permute.xlu0 %2916
        %2918 = vrot.lane.b32.xlu0 %v2472, 80
        %v2919 = vpop.permute.xlu0 %2918
        %2920 = vrot.lane.b32.xlu0 %v2475, 80
        %v2921 = vpop.permute.xlu0 %2920
        %2922 = vrot.lane.b32.xlu0 %v2477, 80
        %v2923 = vpop.permute.xlu0 %2922
        %2924 = vrot.lane.b32.xlu0 %v2480, 80
        %v2925 = vpop.permute.xlu0 %2924
        %2926 = vrot.lane.b32.xlu0 %v2482, 80
        %v2927 = vpop.permute.xlu0 %2926
        %2928 = vrot.lane.b32.xlu0 %v2485, 80
        %v2929 = vpop.permute.xlu0 %2928
        %2930 = vrot.lane.b32.xlu0 %v2487, 80
        %v2931 = vpop.permute.xlu0 %2930
        %2932 = vrot.lane.b32.xlu0 %v2497, 80
        %v2933 = vpop.permute.xlu0 %2932
        %2934 = vrot.lane.b32.xlu0 %v2499, 80
        %v2935 = vpop.permute.xlu0 %2934
        %2968 = vrot.lane.b32.xlu0 %v2277, 96
        %v2969 = vpop.permute.xlu0 %2968
        %2970 = vrot.lane.b32.xlu0 %v2154, 96
        %v2971 = vpop.permute.xlu0 %2970
        %2972 = vrot.lane.b32.xlu0 %v2278, 96
        %v2973 = vpop.permute.xlu0 %2972
        %2974 = vrot.lane.b32.xlu0 %v2157, 96
        %v2975 = vpop.permute.xlu0 %2974
        %2976 = vrot.lane.b32.xlu0 %v2279, 96
        %v2977 = vpop.permute.xlu0 %2976
        %2978 = vrot.lane.b32.xlu0 %v2160, 96
        %v2979 = vpop.permute.xlu0 %2978
        %2980 = vrot.lane.b32.xlu0 %v2280, 96
        %v2981 = vpop.permute.xlu0 %2980
        %2982 = vrot.lane.b32.xlu0 %v2163, 96
        %v2983 = vpop.permute.xlu0 %2982
        %2984 = vrot.lane.b32.xlu0 %v2281, 96
        %v2985 = vpop.permute.xlu0 %2984
        %2986 = vrot.lane.b32.xlu0 %v2166, 96
        %v2987 = vpop.permute.xlu0 %2986
        %2988 = vrot.lane.b32.xlu0 %v2282, 96
        %v2989 = vpop.permute.xlu0 %2988
        %2990 = vrot.lane.b32.xlu0 %v2169, 96
        %v2991 = vpop.permute.xlu0 %2990
        %2992 = vrot.lane.b32.xlu0 %v2283, 96
        %v2993 = vpop.permute.xlu0 %2992
        %2994 = vrot.lane.b32.xlu0 %v2172, 96
        %v2995 = vpop.permute.xlu0 %2994
        %2996 = vrot.lane.b32.xlu0 %v2284, 96
        %v2997 = vpop.permute.xlu0 %2996
        %2998 = vrot.lane.b32.xlu0 %v2175, 96
        %v2999 = vpop.permute.xlu0 %2998
        %3000 = vrot.lane.b32.xlu0 %v2285, 96
        %v3001 = vpop.permute.xlu0 %3000
        %3002 = vrot.lane.b32.xlu0 %v2178, 96
        %v3003 = vpop.permute.xlu0 %3002
        %3004 = vrot.lane.b32.xlu0 %v2286, 96
        %v3005 = vpop.permute.xlu0 %3004
        %3006 = vrot.lane.b32.xlu0 %v2181, 96
        %v3007 = vpop.permute.xlu0 %3006
        %3008 = vrot.lane.b32.xlu0 %v2287, 96
        %v3009 = vpop.permute.xlu0 %3008
        %3010 = vrot.lane.b32.xlu0 %v2184, 96
        %v3011 = vpop.permute.xlu0 %3010
        %3012 = vrot.lane.b32.xlu0 %v2288, 96
        %v3013 = vpop.permute.xlu0 %3012
        %3014 = vrot.lane.b32.xlu0 %v2187, 96
        %v3015 = vpop.permute.xlu0 %3014
        %3016 = vrot.lane.b32.xlu0 %v2289, 96
        %v3017 = vpop.permute.xlu0 %3016
        %3018 = vrot.lane.b32.xlu0 %v2190, 96
        %v3019 = vpop.permute.xlu0 %3018
        %3020 = vrot.lane.b32.xlu0 %v2290, 96
        %v3021 = vpop.permute.xlu0 %3020
        %3022 = vrot.lane.b32.xlu0 %v2193, 96
        %v3023 = vpop.permute.xlu0 %3022
        %3024 = vrot.lane.b32.xlu0 %v2291, 96
        %v3025 = vpop.permute.xlu0 %3024
        %3026 = vrot.lane.b32.xlu0 %v2196, 96
        %v3027 = vpop.permute.xlu0 %3026
        %3058 = vrot.lane.b32.xlu0 %v2345, 112
        %v3059 = vpop.permute.xlu0 %3058
        %3060 = vrot.lane.b32.xlu0 %v2347, 112
        %v3061 = vpop.permute.xlu0 %3060
        %3062 = vrot.lane.b32.xlu0 %v2350, 112
        %v3063 = vpop.permute.xlu0 %3062
        %3064 = vrot.lane.b32.xlu0 %v2352, 112
        %v3065 = vpop.permute.xlu0 %3064
        %3066 = vrot.lane.b32.xlu0 %v2355, 112
        %v3067 = vpop.permute.xlu0 %3066
        %3068 = vrot.lane.b32.xlu0 %v2357, 112
        %v3069 = vpop.permute.xlu0 %3068
        %3070 = vrot.lane.b32.xlu0 %v2360, 112
        %v3071 = vpop.permute.xlu0 %3070
        %3072 = vrot.lane.b32.xlu0 %v2362, 112
        %v3073 = vpop.permute.xlu0 %3072
        %3074 = vrot.lane.b32.xlu0 %v2365, 112
        %v3075 = vpop.permute.xlu0 %3074
        %3076 = vrot.lane.b32.xlu0 %v2367, 112
        %v3077 = vpop.permute.xlu0 %3076
        %3078 = vrot.lane.b32.xlu0 %v2370, 112
        %v3079 = vpop.permute.xlu0 %3078
        %3080 = vrot.lane.b32.xlu0 %v2372, 112
        %v3081 = vpop.permute.xlu0 %3080
        %3082 = vrot.lane.b32.xlu0 %v2375, 112
        %v3083 = vpop.permute.xlu0 %3082
        %3084 = vrot.lane.b32.xlu0 %v2377, 112
        %v3085 = vpop.permute.xlu0 %3084
        %3086 = vrot.lane.b32.xlu0 %v2380, 112
        %v3087 = vpop.permute.xlu0 %3086
        %3088 = vrot.lane.b32.xlu0 %v2382, 112
        %v3089 = vpop.permute.xlu0 %3088
        %3090 = vrot.lane.b32.xlu0 %v2385, 112
        %v3091 = vpop.permute.xlu0 %3090
        %3092 = vrot.lane.b32.xlu0 %v2387, 112
        %v3093 = vpop.permute.xlu0 %3092
        %3094 = vrot.lane.b32.xlu0 %v2390, 112
        %v3095 = vpop.permute.xlu0 %3094
        %3096 = vrot.lane.b32.xlu0 %v2392, 112
        %v3097 = vpop.permute.xlu0 %3096
        %3098 = vrot.lane.b32.xlu0 %v2395, 112
        %v3099 = vpop.permute.xlu0 %3098
        %3100 = vrot.lane.b32.xlu0 %v2397, 112
        %v3101 = vpop.permute.xlu0 %3100
        %3102 = vrot.lane.b32.xlu0 %v2400, 112
        %v3103 = vpop.permute.xlu0 %3102
        %3104 = vrot.lane.b32.xlu0 %v2402, 112
        %v3105 = vpop.permute.xlu0 %3104
        %3106 = vrot.lane.b32.xlu0 %v2405, 112
        %v3107 = vpop.permute.xlu0 %3106
        %3108 = vrot.lane.b32.xlu0 %v2407, 112
        %v3109 = vpop.permute.xlu0 %3108
        %3110 = vrot.lane.b32.xlu0 %v2410, 112
        %v3111 = vpop.permute.xlu0 %3110
        %3112 = vrot.lane.b32.xlu0 %v2412, 112
        %v3113 = vpop.permute.xlu0 %3112
        %3114 = vrot.lane.b32.xlu0 %v2492, 112
        %v3115 = vpop.permute.xlu0 %3114
        %3116 = vrot.lane.b32.xlu0 %v2494, 112
        %v3117 = vpop.permute.xlu0 %3116
        %v3148 = vsel %vm1582, %v2276, %v2501
        %v3149 = vsel %vm1582, %v2151, %v2503
        %v3150 = vsel %vm1582, %v2277, %v2505
        %v3151 = vsel %vm1582, %v2154, %v2507
        %v3152 = vsel %vm1582, %v2278, %v2509
        %v3153 = vsel %vm1582, %v2157, %v2511
        %v3154 = vsel %vm1582, %v2279, %v2513
        %v3155 = vsel %vm1582, %v2160, %v2515
        %v3156 = vsel %vm1582, %v2280, %v2517
        %v3157 = vsel %vm1582, %v2163, %v2519
        %v3158 = vsel %vm1582, %v2281, %v2521
        %v3159 = vsel %vm1582, %v2166, %v2523
        %v3160 = vsel %vm1582, %v2282, %v2525
        %v3161 = vsel %vm1582, %v2169, %v2527
        %v3162 = vsel %vm1582, %v2283, %v2529
        %v3163 = vsel %vm1582, %v2172, %v2531
        %v3164 = vsel %vm1582, %v2284, %v2533
        %v3165 = vsel %vm1582, %v2175, %v2535
        %v3166 = vsel %vm1582, %v2285, %v2537
        %v3167 = vsel %vm1582, %v2178, %v2539
        %v3168 = vsel %vm1582, %v2286, %v2541
        %v3169 = vsel %vm1582, %v2181, %v2543
        %v3170 = vsel %vm1582, %v2287, %v2545
        %v3171 = vsel %vm1582, %v2184, %v2547
        %v3172 = vsel %vm1582, %v2288, %v2549
        %v3173 = vsel %vm1582, %v2187, %v2551
        %v3174 = vsel %vm1582, %v2289, %v2553
        %v3175 = vsel %vm1582, %v2190, %v2555
        %v3176 = vsel %vm1582, %v2290, %v2557
        %v3177 = vsel %vm1582, %v2193, %v2559
        %v3178 = vsel %vm1714, %v3148, %v2591
        %v3179 = vsel %vm1714, %v3149, %v2593
        %v3180 = vsel %vm1714, %v3150, %v2595
        %v3181 = vsel %vm1714, %v3151, %v2597
        %v3182 = vsel %vm1714, %v3152, %v2599
        %v3183 = vsel %vm1714, %v3153, %v2601
        %v3184 = vsel %vm1714, %v3154, %v2603
        %v3185 = vsel %vm1714, %v3155, %v2605
        %v3186 = vsel %vm1714, %v3156, %v2607
        %v3187 = vsel %vm1714, %v3157, %v2609
        %v3188 = vsel %vm1714, %v3158, %v2611
        %v3189 = vsel %vm1714, %v3159, %v2613
        %v3190 = vsel %vm1714, %v3160, %v2615
        %v3191 = vsel %vm1714, %v3161, %v2617
        %v3192 = vsel %vm1714, %v3162, %v2619
        %v3193 = vsel %vm1714, %v3163, %v2621
        %v3194 = vsel %vm1714, %v3164, %v2623
        %v3195 = vsel %vm1714, %v3165, %v2625
        %v3196 = vsel %vm1714, %v3166, %v2627
        %v3197 = vsel %vm1714, %v3167, %v2629
        %v3198 = vsel %vm1714, %v3168, %v2631
        %v3199 = vsel %vm1714, %v3169, %v2633
        %v3200 = vsel %vm1714, %v3170, %v2635
        %v3201 = vsel %vm1714, %v3171, %v2637
        %v3202 = vsel %vm1714, %v3172, %v2639
        %v3203 = vsel %vm1714, %v3173, %v2641
        %v3204 = vsel %vm1714, %v3174, %v2643
        %v3205 = vsel %vm1714, %v3175, %v2645
        %v3206 = vsel %vm1714, %v3176, %v2647
        %v3207 = vsel %vm1714, %v3177, %v2649
        %vm3208 = vcmask 392192
        %v3209 = vsel %vm3208, %v3178, %v2681
        %v3210 = vsel %vm3208, %v3179, %v2683
        %v3211 = vsel %vm3208, %v3178, %v2685
        %v3212 = vsel %vm3208, %v3179, %v2687
        %v3213 = vsel %vm3208, %v3180, %v2689
        %v3214 = vsel %vm3208, %v3181, %v2691
        %v3215 = vsel %vm3208, %v3182, %v2693
        %v3216 = vsel %vm3208, %v3183, %v2695
        %v3217 = vsel %vm3208, %v3184, %v2697
        %v3218 = vsel %vm3208, %v3185, %v2699
        %v3219 = vsel %vm3208, %v3186, %v2701
        %v3220 = vsel %vm3208, %v3187, %v2703
        %v3221 = vsel %vm3208, %v3188, %v2705
        %v3222 = vsel %vm3208, %v3189, %v2707
        %v3223 = vsel %vm3208, %v3190, %v2709
        %v3224 = vsel %vm3208, %v3191, %v2711
        %v3225 = vsel %vm3208, %v3192, %v2713
        %v3226 = vsel %vm3208, %v3193, %v2715
        %v3227 = vsel %vm3208, %v3194, %v2717
        %v3228 = vsel %vm3208, %v3195, %v2719
        %v3229 = vsel %vm3208, %v3196, %v2721
        %v3230 = vsel %vm3208, %v3197, %v2723
        %v3231 = vsel %vm3208, %v3198, %v2725
        %v3232 = vsel %vm3208, %v3199, %v2727
        %v3233 = vsel %vm3208, %v3200, %v2729
        %v3234 = vsel %vm3208, %v3201, %v2731
        %v3235 = vsel %vm3208, %v3202, %v2733
        %v3236 = vsel %vm3208, %v3203, %v2735
        %v3237 = vsel %vm3208, %v3204, %v2737
        %v3238 = vsel %vm3208, %v3205, %v2739
        %v3239 = vsel %vm3208, %v3206, %v2741
        %v3240 = vsel %vm3208, %v3207, %v2743
        %vm3241 = vcmask 523264
        %v3242 = vsel %vm3241, %v3209, %v2777
        %v3243 = vsel %vm3241, %v3210, %v2779
        %v3244 = vsel %vm3241, %v3211, %v2781
        %v3245 = vsel %vm3241, %v3212, %v2783
        %v3246 = vsel %vm3241, %v3213, %v2785
        %v3247 = vsel %vm3241, %v3214, %v2787
        %v3248 = vsel %vm3241, %v3215, %v2789
        %v3249 = vsel %vm3241, %v3216, %v2791
        %v3250 = vsel %vm3241, %v3217, %v2793
        %v3251 = vsel %vm3241, %v3218, %v2795
        %v3252 = vsel %vm3241, %v3219, %v2797
        %v3253 = vsel %vm3241, %v3220, %v2799
        %v3254 = vsel %vm3241, %v3221, %v2801
        %v3255 = vsel %vm3241, %v3222, %v2803
        %v3256 = vsel %vm3241, %v3223, %v2805
        %v3257 = vsel %vm3241, %v3224, %v2807
        %v3258 = vsel %vm3241, %v3225, %v2809
        %v3259 = vsel %vm3241, %v3226, %v2811
        %v3260 = vsel %vm3241, %v3227, %v2813
        %v3261 = vsel %vm3241, %v3228, %v2815
        %v3262 = vsel %vm3241, %v3229, %v2817
        %v3263 = vsel %vm3241, %v3230, %v2819
        %v3264 = vsel %vm3241, %v3231, %v2821
        %v3265 = vsel %vm3241, %v3232, %v2823
        %v3266 = vsel %vm3241, %v3233, %v2825
        %v3267 = vsel %vm3241, %v3234, %v2827
        %v3268 = vsel %vm3241, %v3235, %v2829
        %v3269 = vsel %vm3241, %v3236, %v2831
        %v3270 = vsel %vm3241, %v3237, %v2833
        %v3271 = vsel %vm3241, %v3238, %v2835
        %v3272 = vsel %vm3241, %v3239, %v2837
        %v3273 = vsel %vm3241, %v3240, %v2839
        %vm3274 = vcmask 654336
        %v3275 = vsel %vm3274, %v3242, %v2873
        %v3276 = vsel %vm3274, %v3243, %v2875
        %v3277 = vsel %vm3274, %v3244, %v2877
        %v3278 = vsel %vm3274, %v3245, %v2879
        %v3279 = vsel %vm3274, %v3246, %v2881
        %v3280 = vsel %vm3274, %v3247, %v2883
        %v3281 = vsel %vm3274, %v3248, %v2885
        %v3282 = vsel %vm3274, %v3249, %v2887
        %v3283 = vsel %vm3274, %v3250, %v2889
        %v3284 = vsel %vm3274, %v3251, %v2891
        %v3285 = vsel %vm3274, %v3252, %v2893
        %v3286 = vsel %vm3274, %v3253, %v2895
        %v3287 = vsel %vm3274, %v3254, %v2897
        %v3288 = vsel %vm3274, %v3255, %v2899
        %v3289 = vsel %vm3274, %v3256, %v2901
        %v3290 = vsel %vm3274, %v3257, %v2903
        %v3291 = vsel %vm3274, %v3258, %v2905
        %v3292 = vsel %vm3274, %v3259, %v2907
        %v3293 = vsel %vm3274, %v3260, %v2909
        %v3294 = vsel %vm3274, %v3261, %v2911
        %v3295 = vsel %vm3274, %v3262, %v2913
        %v3296 = vsel %vm3274, %v3263, %v2915
        %v3297 = vsel %vm3274, %v3264, %v2917
        %v3298 = vsel %vm3274, %v3265, %v2919
        %v3299 = vsel %vm3274, %v3266, %v2921
        %v3300 = vsel %vm3274, %v3267, %v2923
        %v3301 = vsel %vm3274, %v3268, %v2925
        %v3302 = vsel %vm3274, %v3269, %v2927
        %v3303 = vsel %vm3274, %v3270, %v2929
        %v3304 = vsel %vm3274, %v3271, %v2931
        %v3305 = vsel %vm3274, %v3272, %v2933
        %v3306 = vsel %vm3274, %v3273, %v2935
        %vm3307 = vcmask 785408
        %v3308 = vsel %vm3307, %v3275, %v2969
        %v3309 = vsel %vm3307, %v3276, %v2971
        %v3310 = vsel %vm3307, %v3277, %v2973
        %v3311 = vsel %vm3307, %v3278, %v2975
        %v3312 = vsel %vm3307, %v3279, %v2977
        %v3313 = vsel %vm3307, %v3280, %v2979
        %v3314 = vsel %vm3307, %v3281, %v2981
        %v3315 = vsel %vm3307, %v3282, %v2983
        %v3316 = vsel %vm3307, %v3283, %v2985
        %v3317 = vsel %vm3307, %v3284, %v2987
        %v3318 = vsel %vm3307, %v3285, %v2989
        %v3319 = vsel %vm3307, %v3286, %v2991
        %v3320 = vsel %vm3307, %v3287, %v2993
        %v3321 = vsel %vm3307, %v3288, %v2995
        %v3322 = vsel %vm3307, %v3289, %v2997
        %v3323 = vsel %vm3307, %v3290, %v2999
        %v3324 = vsel %vm3307, %v3291, %v3001
        %v3325 = vsel %vm3307, %v3292, %v3003
        %v3326 = vsel %vm3307, %v3293, %v3005
        %v3327 = vsel %vm3307, %v3294, %v3007
        %v3328 = vsel %vm3307, %v3295, %v3009
        %v3329 = vsel %vm3307, %v3296, %v3011
        %v3330 = vsel %vm3307, %v3297, %v3013
        %v3331 = vsel %vm3307, %v3298, %v3015
        %v3332 = vsel %vm3307, %v3299, %v3017
        %v3333 = vsel %vm3307, %v3300, %v3019
        %v3334 = vsel %vm3307, %v3301, %v3021
        %v3335 = vsel %vm3307, %v3302, %v3023
        %v3336 = vsel %vm3307, %v3303, %v3025
        %v3337 = vsel %vm3307, %v3304, %v3027
        %v3338 = vsel %vm3307, %v3305, %v3025
        %v3339 = vsel %vm3307, %v3306, %v3027
        %vm3340 = vcmask 916480
        %v3341 = vsel %vm3340, %v3308, %v3059
        %v3342 = vsel %vm3340, %v3309, %v3061
        %v3343 = vsel %vm3340, %v3310, %v3063
        %v3344 = vsel %vm3340, %v3311, %v3065
        %v3345 = vsel %vm3340, %v3312, %v3067
        %v3346 = vsel %vm3340, %v3313, %v3069
        %v3347 = vsel %vm3340, %v3314, %v3071
        %v3348 = vsel %vm3340, %v3315, %v3073
        %v3349 = vsel %vm3340, %v3316, %v3075
        %v3350 = vsel %vm3340, %v3317, %v3077
        %v3351 = vsel %vm3340, %v3318, %v3079
        %v3352 = vsel %vm3340, %v3319, %v3081
        %v3353 = vsel %vm3340, %v3320, %v3083
        %v3354 = vsel %vm3340, %v3321, %v3085
        %v3355 = vsel %vm3340, %v3322, %v3087
        %v3356 = vsel %vm3340, %v3323, %v3089
        %v3357 = vsel %vm3340, %v3324, %v3091
        %v3358 = vsel %vm3340, %v3325, %v3093
        %v3359 = vsel %vm3340, %v3326, %v3095
        %v3360 = vsel %vm3340, %v3327, %v3097
        %v3361 = vsel %vm3340, %v3328, %v3099
        %v3362 = vsel %vm3340, %v3329, %v3101
        %v3363 = vsel %vm3340, %v3330, %v3103
        %v3364 = vsel %vm3340, %v3331, %v3105
        %v3365 = vsel %vm3340, %v3332, %v3107
        %v3366 = vsel %vm3340, %v3333, %v3109
        %v3367 = vsel %vm3340, %v3334, %v3111
        %v3368 = vsel %vm3340, %v3335, %v3113
        %v3369 = vsel %vm3340, %v3336, %v3115
        %v3370 = vsel %vm3340, %v3337, %v3117
        %v3371 = vsel %vm3340, %v3338, %v3115
        %v3372 = vsel %vm3340, %v3339, %v3117
        %v3373 = vld [vmem:[%s3] sm:$0xff]
        %v3374 = vld [vmem:[%s3 + $0x8] sm:$0xff]
        %v3375 = vld [vmem:[%s3 + $0x10] sm:$0xff]
        %v3376 = vld [vmem:[%s3 + $0x18] sm:$0xff]
        %v3377 = vld [vmem:[%s3 + $0x20] sm:$0xff]
        %v3378 = vld [vmem:[%s3 + $0x28] sm:$0xff]
        %v3379 = vld [vmem:[%s3 + $0x30] sm:$0xff]
        %v3380 = vld [vmem:[%s3 + $0x38] sm:$0xff]
        %v3381 = vld [vmem:[%s3 + $0x40] sm:$0xff]
        %v3382 = vld [vmem:[%s3 + $0x48] sm:$0xff]
        %v3383 = vld [vmem:[%s3 + $0x50] sm:$0xff]
        %v3384 = vld [vmem:[%s3 + $0x58] sm:$0xff]
        %v3385 = vld [vmem:[%s3 + $0x60] sm:$0xff]
        %v3386 = vld [vmem:[%s3 + $0x68] sm:$0xff]
        %v3387 = vld [vmem:[%s3 + $0x70] sm:$0xff]
        %v3388 = vld [vmem:[%s3 + $0x78] sm:$0xff]
        %v3389 = vld [vmem:[%s3 + $0x80] sm:$0xff]
        %v3390 = vld [vmem:[%s3 + $0x88] sm:$0xff]
        %v3391 = vld [vmem:[%s4] sm:$0x1]
        %v3393 = vlaneseq
        %v3394 = vshrl.u32 %v3393, 7
        %v3395 = vsub.s32 0, %v3394
        %v3396 = vrot.slane %v3391, %v3395
        %v3398 = vsel %vm1582, %v2420, 0
        %v3400 = vsel %vm1582, %v2422, 0
        %v3402 = vsel %vm1582, %v2425, 0
        %v3404 = vsel %vm1582, %v2427, 0
        %v3406 = vsel %vm1582, %v2430, 0
        %v3408 = vsel %vm1582, %v2432, 0
        %v3410 = vsel %vm1582, %v2435, 0
        %v3412 = vsel %vm1582, %v2437, 0
        %v3414 = vsel %vm1582, %v2440, 0
        %v3416 = vsel %vm1582, %v2442, 0
        %v3418 = vsel %vm1582, %v2445, 0
        %v3420 = vsel %vm1582, %v2447, 0
        %v3422 = vsel %vm1582, %v2450, 0
        %v3424 = vsel %vm1582, %v2452, 0
        %v3426 = vsel %vm1582, %v2455, 0
        %v3428 = vsel %vm1582, %v2457, 0
        %v3430 = vsel %vm1582, %v2460, 0
        %v3432 = vsel %vm1582, %v2462, 0
        %v3434 = vsel %vm1582, %v2465, 0
        %v3436 = vsel %vm1582, %v2467, 0
        %v3438 = vsel %vm1582, %v2470, 0
        %v3440 = vsel %vm1582, %v2472, 0
        %v3442 = vsel %vm1582, %v2475, 0
        %v3444 = vsel %vm1582, %v2477, 0
        %v3446 = vsel %vm1582, %v2480, 0
        %v3448 = vsel %vm1582, %v2482, 0
        %v3450 = vsel %vm1582, %v2485, 0
        %v3452 = vsel %vm1582, %v2487, 0
        %v3454 = vsel %vm1582, %v2497, 0
        %v3456 = vsel %vm1582, %v2499, 0
        %3458 = vmatprep.subr.mxu0 0.0
        %3459 = vmatpush1.msra.mxu0 %v3388
        %3460 = vmatprep.subr.mxu0 0.0
        %3461 = vmatpush1.msra.mxu0 %v3387
        %3462 = vmatprep.subr.mxu0 0.0
        %3463 = vmatpush1.msra.mxu0 %v3386
        %3464 = vmatprep.subr.mxu0 0.0
        %3465 = vmatpush1.msra.mxu0 %v3385
        %3466 = vmatprep.subr.mxu0 0.0
        %3467 = vmatpush1.msra.mxu0 %v3384
        %3468 = vmatprep.subr.mxu0 0.0
        %3469 = vmatpush1.msra.mxu0 %v3383
        %3470 = vmatprep.subr.mxu0 0.0
        %3471 = vmatpush1.msra.mxu0 %v3382
        %3472 = vmatprep.subr.mxu0 0.0
        %3473 = vmatpush1.msra.mxu0 %v3381
        %3474 = vmatprep.subr.mxu0 0.0
        %3475 = vmatpush1.msra.mxu0 %v3380
        %3476 = vmatprep.subr.mxu0 0.0
        %3477 = vmatpush1.msra.mxu0 %v3379
        %3478 = vmatprep.subr.mxu0 0.0
        %3479 = vmatpush1.msra.mxu0 %v3378
        %3480 = vmatprep.subr.mxu0 0.0
        %3481 = vmatpush1.msra.mxu0 %v3377
        %3482 = vmatprep.subr.mxu0 0.0
        %3483 = vmatpush1.msra.mxu0 %v3376
        %3484 = vmatprep.subr.mxu0 0.0
        %3485 = vmatpush1.msra.mxu0 %v3375
        %3486 = vmatprep.subr.mxu0 0.0
        %3487 = vmatpush1.msra.mxu0 %v3374
        %3488 = vmatprep.subr.mxu0 0.0
        %3489 = vmatpush1.msra.mxu0 %v3373
        %3490 = vmatprep.subr.mxu0 0.0
        %3491 = vmatpush2.msra.mxu0 0.0
        %3492 = vmatprep.subr.mxu0 0.0
        %3493 = vmatpush2.msra.mxu0 0.0
        %3494 = vmatprep.subr.mxu0 0.0
        %3495 = vmatpush2.msra.mxu0 0.0
        %3496 = vmatprep.subr.mxu0 0.0
        %3497 = vmatpush2.msra.mxu0 0.0
        %3498 = vmatprep.subr.mxu0 0.0
        %3499 = vmatpush2.msra.mxu0 0.0
        %3500 = vmatprep.subr.mxu0 0.0
        %3501 = vmatpush2.msra.mxu0 0.0
        %3502 = vmatprep.subr.mxu0 0.0
        %3503 = vmatpush2.msra.mxu0 0.0
        %3504 = vmatprep.subr.mxu0 0.0
        %3505 = vmatpush2.msra.mxu0 0.0
        %3506 = vmatprep.subr.mxu0 0.0
        %3507 = vmatpush2.msra.mxu0 0.0
        %3508 = vmatprep.subr.mxu0 0.0
        %3509 = vmatpush2.msra.mxu0 0.0
        %3510 = vmatprep.subr.mxu0 0.0
        %3511 = vmatpush2.msra.mxu0 0.0
        %3512 = vmatprep.subr.mxu0 0.0
        %3513 = vmatpush2.msra.mxu0 0.0
        %3514 = vmatprep.subr.mxu0 0.0
        %3515 = vmatpush2.msra.mxu0 0.0
        %3516 = vmatprep.subr.mxu0 0.0
        %3517 = vmatpush2.msra.mxu0 0.0
        %3518 = vmatprep.subr.mxu0 0.0
        %3519 = vmatpush2.msra.mxu0 %v3390
        %3520 = vmatprep.subr.mxu0 0.0
        %3521 = vmatpush2.msra.mxu0 %v3389
        %3522 = vmatprep.mubr.f32.mxu0 %v3398
        %3523 = vmatmul.mubr.f32.gmra.mxu0 %v3341
        %v3524 = vpop.f32.mrf.mxu0
        %v3525 = vadd.f32 %v3396, %v3524
        %v3526 = vpop.f32.mrf.mxu0
        %3527 = vmatprep.mubr.f32.mxu0 %v3400
        %3528 = vmatmul.mubr.f32.gmra.mxu0 %v3342
        %v3529 = vpop.f32.mrf.mxu0
        %v3530 = vadd.f32 %v3396, %v3529
        %v3531 = vpop.f32.mrf.mxu0
        %3532 = vmatprep.mubr.f32.mxu0 %v3402
        %3533 = vmatmul.mubr.f32.gmra.mxu0 %v3343
        %v3534 = vpop.f32.mrf.mxu0
        %v3535 = vadd.f32 %v3396, %v3534
        %v3536 = vpop.f32.mrf.mxu0
        %3537 = vmatprep.mubr.f32.mxu0 %v3404
        %3538 = vmatmul.mubr.f32.gmra.mxu0 %v3344
        %v3539 = vpop.f32.mrf.mxu0
        %v3540 = vadd.f32 %v3396, %v3539
        %v3541 = vpop.f32.mrf.mxu0
        %3542 = vmatprep.mubr.f32.mxu0 %v3406
        %3543 = vmatmul.mubr.f32.gmra.mxu0 %v3345
        %v3544 = vpop.f32.mrf.mxu0
        %v3545 = vadd.f32 %v3396, %v3544
        %v3546 = vpop.f32.mrf.mxu0
        %3547 = vmatprep.mubr.f32.mxu0 %v3408
        %3548 = vmatmul.mubr.f32.gmra.mxu0 %v3346
        %v3549 = vpop.f32.mrf.mxu0
        %v3550 = vadd.f32 %v3396, %v3549
        %v3551 = vpop.f32.mrf.mxu0
        %3552 = vmatprep.mubr.f32.mxu0 %v3410
        %3553 = vmatmul.mubr.f32.gmra.mxu0 %v3347
        %v3554 = vpop.f32.mrf.mxu0
        %v3555 = vadd.f32 %v3396, %v3554
        %v3556 = vpop.f32.mrf.mxu0
        %3557 = vmatprep.mubr.f32.mxu0 %v3412
        %3558 = vmatmul.mubr.f32.gmra.mxu0 %v3348
        %v3559 = vpop.f32.mrf.mxu0
        %v3560 = vadd.f32 %v3396, %v3559
        %v3561 = vpop.f32.mrf.mxu0
        %3562 = vmatprep.mubr.f32.mxu0 %v3414
        %3563 = vmatmul.mubr.f32.gmra.mxu0 %v3349
        %v3564 = vpop.f32.mrf.mxu0
        %v3565 = vadd.f32 %v3396, %v3564
        %v3566 = vpop.f32.mrf.mxu0
        %3567 = vmatprep.mubr.f32.mxu0 %v3416
        %3568 = vmatmul.mubr.f32.gmra.mxu0 %v3350
        %v3569 = vpop.f32.mrf.mxu0
        %v3570 = vadd.f32 %v3396, %v3569
        %v3571 = vpop.f32.mrf.mxu0
        %3572 = vmatprep.mubr.f32.mxu0 %v3418
        %3573 = vmatmul.mubr.f32.gmra.mxu0 %v3351
        %v3574 = vpop.f32.mrf.mxu0
        %v3575 = vadd.f32 %v3396, %v3574
        %v3576 = vpop.f32.mrf.mxu0
        %3577 = vmatprep.mubr.f32.mxu0 %v3420
        %3578 = vmatmul.mubr.f32.gmra.mxu0 %v3352
        %v3579 = vpop.f32.mrf.mxu0
        %v3580 = vadd.f32 %v3396, %v3579
        %v3581 = vpop.f32.mrf.mxu0
        %3582 = vmatprep.mubr.f32.mxu0 %v3422
        %3583 = vmatmul.mubr.f32.gmra.mxu0 %v3353
        %v3584 = vpop.f32.mrf.mxu0
        %v3585 = vadd.f32 %v3396, %v3584
        %v3586 = vpop.f32.mrf.mxu0
        %3587 = vmatprep.mubr.f32.mxu0 %v3424
        %3588 = vmatmul.mubr.f32.gmra.mxu0 %v3354
        %v3589 = vpop.f32.mrf.mxu0
        %v3590 = vadd.f32 %v3396, %v3589
        %v3591 = vpop.f32.mrf.mxu0
        %3592 = vmatprep.mubr.f32.mxu0 %v3426
        %3593 = vmatmul.mubr.f32.gmra.mxu0 %v3355
        %v3594 = vpop.f32.mrf.mxu0
        %v3595 = vadd.f32 %v3396, %v3594
        %v3596 = vpop.f32.mrf.mxu0
        %3597 = vmatprep.mubr.f32.mxu0 %v3428
        %3598 = vmatmul.mubr.f32.gmra.mxu0 %v3356
        %v3599 = vpop.f32.mrf.mxu0
        %v3600 = vadd.f32 %v3396, %v3599
        %v3601 = vpop.f32.mrf.mxu0
        %3602 = vmatprep.mubr.f32.mxu0 %v3430
        %3603 = vmatmul.mubr.f32.gmra.mxu0 %v3357
        %v3604 = vpop.f32.mrf.mxu0
        %v3605 = vadd.f32 %v3396, %v3604
        %v3606 = vpop.f32.mrf.mxu0
        %3607 = vmatprep.mubr.f32.mxu0 %v3432
        %3608 = vmatmul.mubr.f32.gmra.mxu0 %v3358
        %v3609 = vpop.f32.mrf.mxu0
        %v3610 = vadd.f32 %v3396, %v3609
        %v3611 = vpop.f32.mrf.mxu0
        %3612 = vmatprep.mubr.f32.mxu0 %v3434
        %3613 = vmatmul.mubr.f32.gmra.mxu0 %v3359
        %v3614 = vpop.f32.mrf.mxu0
        %v3615 = vadd.f32 %v3396, %v3614
        %v3616 = vpop.f32.mrf.mxu0
        %3617 = vmatprep.mubr.f32.mxu0 %v3436
        %3618 = vmatmul.mubr.f32.gmra.mxu0 %v3360
        %v3619 = vpop.f32.mrf.mxu0
        %v3620 = vadd.f32 %v3396, %v3619
        %v3621 = vpop.f32.mrf.mxu0
        %3622 = vmatprep.mubr.f32.mxu0 %v3438
        %3623 = vmatmul.mubr.f32.gmra.mxu0 %v3361
        %v3624 = vpop.f32.mrf.mxu0
        %v3625 = vadd.f32 %v3396, %v3624
        %v3626 = vpop.f32.mrf.mxu0
        %3627 = vmatprep.mubr.f32.mxu0 %v3440
        %3628 = vmatmul.mubr.f32.gmra.mxu0 %v3362
        %v3629 = vpop.f32.mrf.mxu0
        %v3630 = vadd.f32 %v3396, %v3629
        %v3631 = vpop.f32.mrf.mxu0
        %3632 = vmatprep.mubr.f32.mxu0 %v3442
        %3633 = vmatmul.mubr.f32.gmra.mxu0 %v3363
        %v3634 = vpop.f32.mrf.mxu0
        %v3635 = vadd.f32 %v3396, %v3634
        %v3636 = vpop.f32.mrf.mxu0
        %3637 = vmatprep.mubr.f32.mxu0 %v3444
        %3638 = vmatmul.mubr.f32.gmra.mxu0 %v3364
        %v3639 = vpop.f32.mrf.mxu0
        %v3640 = vadd.f32 %v3396, %v3639
        %v3641 = vpop.f32.mrf.mxu0
        %3642 = vmatprep.mubr.f32.mxu0 %v3446
        %3643 = vmatmul.mubr.f32.gmra.mxu0 %v3365
        %v3644 = vpop.f32.mrf.mxu0
        %v3645 = vadd.f32 %v3396, %v3644
        %v3646 = vpop.f32.mrf.mxu0
        %3647 = vmatprep.mubr.f32.mxu0 %v3448
        %3648 = vmatmul.mubr.f32.gmra.mxu0 %v3366
        %v3649 = vpop.f32.mrf.mxu0
        %v3650 = vadd.f32 %v3396, %v3649
        %v3651 = vpop.f32.mrf.mxu0
        %3652 = vmatprep.mubr.f32.mxu0 %v3450
        %3653 = vmatmul.mubr.f32.gmra.mxu0 %v3367
        %v3654 = vpop.f32.mrf.mxu0
        %v3655 = vadd.f32 %v3396, %v3654
        %v3656 = vpop.f32.mrf.mxu0
        %3657 = vmatprep.mubr.f32.mxu0 %v3452
        %3658 = vmatmul.mubr.f32.gmra.mxu0 %v3368
        %v3659 = vpop.f32.mrf.mxu0
        %v3660 = vadd.f32 %v3396, %v3659
        %v3661 = vpop.f32.mrf.mxu0
        %3662 = vmatprep.mubr.f32.mxu0 %v3454
        %3663 = vmatmul.mubr.f32.gmra.mxu0 %v3369
        %v3664 = vpop.f32.mrf.mxu0
        %v3665 = vadd.f32 %v3396, %v3664
        %v3666 = vpop.f32.mrf.mxu0
        %3667 = vmatprep.mubr.f32.mxu0 %v3456
        %3668 = vmatmul.mubr.f32.gmra.mxu0 %v3370
        %v3669 = vpop.f32.mrf.mxu0
        %v3670 = vadd.f32 %v3396, %v3669
        %v3671 = vpop.f32.mrf.mxu0
        %3672 = vmatprep.mubr.f32.mxu0 %v3454
        %3673 = vmatmul.mubr.f32.gmra.mxu0 %v3371
        %v3674 = vpop.f32.mrf.mxu0
        %v3675 = vadd.f32 %v3396, %v3674
        %v3676 = vpop.f32.mrf.mxu0
        %3677 = vmatprep.mubr.f32.mxu0 %v3456
        %3678 = vmatmul.mubr.f32.gmra.mxu0 %v3372
        %v3679 = vpop.f32.mrf.mxu0
        %v3680 = vadd.f32 %v3396, %v3679
        %v3681 = vpop.f32.mrf.mxu0
        %3682 = vdwg.mxu0
        %v3683 = vmax.f32 %v3525, 0.0
        %v3684 = vmax.f32 %v3530, 0.0
        %v3685 = vmax.f32 %v3535, 0.0
        %v3686 = vmax.f32 %v3540, 0.0
        %v3687 = vmax.f32 %v3545, 0.0
        %v3688 = vmax.f32 %v3550, 0.0
        %v3689 = vmax.f32 %v3555, 0.0
        %v3690 = vmax.f32 %v3560, 0.0
        %v3691 = vmax.f32 %v3565, 0.0
        %v3692 = vmax.f32 %v3570, 0.0
        %v3693 = vmax.f32 %v3575, 0.0
        %v3694 = vmax.f32 %v3580, 0.0
        %v3695 = vmax.f32 %v3585, 0.0
        %v3696 = vmax.f32 %v3590, 0.0
        %v3697 = vmax.f32 %v3595, 0.0
        %v3698 = vmax.f32 %v3600, 0.0
        %v3699 = vmax.f32 %v3605, 0.0
        %v3700 = vmax.f32 %v3610, 0.0
        %v3701 = vmax.f32 %v3615, 0.0
        %v3702 = vmax.f32 %v3620, 0.0
        %v3703 = vmax.f32 %v3625, 0.0
        %v3704 = vmax.f32 %v3630, 0.0
        %v3705 = vmax.f32 %v3635, 0.0
        %v3706 = vmax.f32 %v3640, 0.0
        %v3707 = vmax.f32 %v3645, 0.0
        %v3708 = vmax.f32 %v3650, 0.0
        %v3709 = vmax.f32 %v3655, 0.0
        %v3710 = vmax.f32 %v3660, 0.0
        %v3711 = vmax.f32 %v3665, 0.0
        %v3712 = vmax.f32 %v3670, 0.0
        %v3713 = vmax.f32 %v3675, 0.0
        %v3714 = vmax.f32 %v3680, 0.0
        %v3747 = vrot.slane %v3683, 7
        %v3748 = vrot.slane %v3684, 7
        %v3749 = vsel %vm395, %v3747, %v3748
        %v3750 = vrot.slane %v3685, 7
        %v3751 = vrot.slane %v3686, 7
        %v3752 = vsel %vm395, %v3750, %v3751
        %v3753 = vrot.slane %v3687, 7
        %v3754 = vrot.slane %v3688, 7
        %v3755 = vsel %vm395, %v3753, %v3754
        %v3756 = vrot.slane %v3689, 7
        %v3757 = vrot.slane %v3690, 7
        %v3758 = vsel %vm395, %v3756, %v3757
        %v3759 = vrot.slane %v3691, 7
        %v3760 = vrot.slane %v3692, 7
        %v3761 = vsel %vm395, %v3759, %v3760
        %v3762 = vrot.slane %v3693, 7
        %v3763 = vrot.slane %v3694, 7
        %v3764 = vsel %vm395, %v3762, %v3763
        %v3765 = vrot.slane %v3695, 7
        %v3766 = vrot.slane %v3696, 7
        %v3767 = vsel %vm395, %v3765, %v3766
        %v3768 = vrot.slane %v3697, 7
        %v3769 = vrot.slane %v3698, 7
        %v3770 = vsel %vm395, %v3768, %v3769
        %v3771 = vrot.slane %v3699, 7
        %v3772 = vrot.slane %v3700, 7
        %v3773 = vsel %vm395, %v3771, %v3772
        %v3774 = vrot.slane %v3701, 7
        %v3775 = vrot.slane %v3702, 7
        %v3776 = vsel %vm395, %v3774, %v3775
        %v3777 = vrot.slane %v3703, 7
        %v3778 = vrot.slane %v3704, 7
        %v3779 = vsel %vm395, %v3777, %v3778
        %v3780 = vrot.slane %v3705, 7
        %v3781 = vrot.slane %v3706, 7
        %v3782 = vsel %vm395, %v3780, %v3781
        %v3783 = vrot.slane %v3707, 7
        %v3784 = vrot.slane %v3708, 7
        %v3785 = vsel %vm395, %v3783, %v3784
        %v3786 = vrot.slane %v3709, 7
        %v3787 = vrot.slane %v3710, 7
        %v3788 = vsel %vm395, %v3786, %v3787
        %v3789 = vrot.slane %v3711, 7
        %v3790 = vrot.slane %v3712, 7
        %v3791 = vsel %vm395, %v3789, %v3790
        %v3792 = vrot.slane %v3713, 7
        %v3793 = vrot.slane %v3714, 7
        %v3794 = vsel %vm395, %v3792, %v3793
        %v3842 = vrot.slane %v3684, 6
        %v3843 = vrot.slane %v3686, 6
        %v3844 = vrot.slane %v3688, 6
        %v3845 = vrot.slane %v3690, 6
        %v3846 = vrot.slane %v3692, 6
        %v3847 = vrot.slane %v3694, 6
        %v3848 = vrot.slane %v3696, 6
        %v3849 = vrot.slane %v3698, 6
        %v3850 = vrot.slane %v3700, 6
        %v3851 = vrot.slane %v3702, 6
        %v3852 = vrot.slane %v3704, 6
        %v3853 = vrot.slane %v3706, 6
        %v3854 = vrot.slane %v3708, 6
        %v3855 = vrot.slane %v3710, 6
        %v3856 = vrot.slane %v3712, 6
        %v3857 = vrot.slane %v3714, 6
        %v3874 = vsel %vm395, %v3683, %v3747
        %v3875 = vsel %vm395, %v3685, %v3750
        %v3876 = vsel %vm395, %v3687, %v3753
        %v3877 = vsel %vm395, %v3689, %v3756
        %v3878 = vsel %vm395, %v3691, %v3759
        %v3879 = vsel %vm395, %v3693, %v3762
        %v3880 = vsel %vm395, %v3695, %v3765
        %v3881 = vsel %vm395, %v3697, %v3768
        %v3882 = vsel %vm395, %v3699, %v3771
        %v3883 = vsel %vm395, %v3701, %v3774
        %v3884 = vsel %vm395, %v3703, %v3777
        %v3885 = vsel %vm395, %v3705, %v3780
        %v3886 = vsel %vm395, %v3707, %v3783
        %v3887 = vsel %vm395, %v3709, %v3786
        %v3888 = vsel %vm395, %v3711, %v3789
        %v3889 = vsel %vm395, %v3713, %v3792
        %v3890 = vsel %vm395, %v3748, %v3842
        %v3891 = vsel %vm395, %v3751, %v3843
        %v3892 = vsel %vm395, %v3754, %v3844
        %v3893 = vsel %vm395, %v3757, %v3845
        %v3894 = vsel %vm395, %v3760, %v3846
        %v3895 = vsel %vm395, %v3763, %v3847
        %v3896 = vsel %vm395, %v3766, %v3848
        %v3897 = vsel %vm395, %v3769, %v3849
        %v3898 = vsel %vm395, %v3772, %v3850
        %v3899 = vsel %vm395, %v3775, %v3851
        %v3900 = vsel %vm395, %v3778, %v3852
        %v3901 = vsel %vm395, %v3781, %v3853
        %v3902 = vsel %vm395, %v3784, %v3854
        %v3903 = vsel %vm395, %v3787, %v3855
        %v3904 = vsel %vm395, %v3790, %v3856
        %v3905 = vsel %vm395, %v3793, %v3857
        %v3936 = vrot.slane %v3874, 1
        %v3937 = vrot.slane %v3749, 1
        %v3938 = vsel %vm585, %v3936, %v3937
        %v3939 = vrot.slane %v3890, 1
        %v3940 = vsel %vm585, %v3937, %v3939
        %v3941 = vrot.slane %v3875, 1
        %v3942 = vrot.slane %v3752, 1
        %v3943 = vsel %vm585, %v3941, %v3942
        %v3944 = vrot.slane %v3891, 1
        %v3945 = vsel %vm585, %v3942, %v3944
        %v3946 = vrot.slane %v3876, 1
        %v3947 = vrot.slane %v3755, 1
        %v3948 = vsel %vm585, %v3946, %v3947
        %v3949 = vrot.slane %v3892, 1
        %v3950 = vsel %vm585, %v3947, %v3949
        %v3951 = vrot.slane %v3877, 1
        %v3952 = vrot.slane %v3758, 1
        %v3953 = vsel %vm585, %v3951, %v3952
        %v3954 = vrot.slane %v3893, 1
        %v3955 = vsel %vm585, %v3952, %v3954
        %v3956 = vrot.slane %v3878, 1
        %v3957 = vrot.slane %v3761, 1
        %v3958 = vsel %vm585, %v3956, %v3957
        %v3959 = vrot.slane %v3894, 1
        %v3960 = vsel %vm585, %v3957, %v3959
        %v3961 = vrot.slane %v3879, 1
        %v3962 = vrot.slane %v3764, 1
        %v3963 = vsel %vm585, %v3961, %v3962
        %v3964 = vrot.slane %v3895, 1
        %v3965 = vsel %vm585, %v3962, %v3964
        %v3966 = vrot.slane %v3880, 1
        %v3967 = vrot.slane %v3767, 1
        %v3968 = vsel %vm585, %v3966, %v3967
        %v3969 = vrot.slane %v3896, 1
        %v3970 = vsel %vm585, %v3967, %v3969
        %v3971 = vrot.slane %v3881, 1
        %v3972 = vrot.slane %v3770, 1
        %v3973 = vsel %vm585, %v3971, %v3972
        %v3974 = vrot.slane %v3897, 1
        %v3975 = vsel %vm585, %v3972, %v3974
        %v3976 = vrot.slane %v3882, 1
        %v3977 = vrot.slane %v3773, 1
        %v3978 = vsel %vm585, %v3976, %v3977
        %v3979 = vrot.slane %v3898, 1
        %v3980 = vsel %vm585, %v3977, %v3979
        %v3981 = vrot.slane %v3883, 1
        %v3982 = vrot.slane %v3776, 1
        %v3983 = vsel %vm585, %v3981, %v3982
        %v3984 = vrot.slane %v3899, 1
        %v3985 = vsel %vm585, %v3982, %v3984
        %v3986 = vrot.slane %v3884, 1
        %v3987 = vrot.slane %v3779, 1
        %v3988 = vsel %vm585, %v3986, %v3987
        %v3989 = vrot.slane %v3900, 1
        %v3990 = vsel %vm585, %v3987, %v3989
        %v3991 = vrot.slane %v3885, 1
        %v3992 = vrot.slane %v3782, 1
        %v3993 = vsel %vm585, %v3991, %v3992
        %v3994 = vrot.slane %v3901, 1
        %v3995 = vsel %vm585, %v3992, %v3994
        %v3996 = vrot.slane %v3886, 1
        %v3997 = vrot.slane %v3785, 1
        %v3998 = vsel %vm585, %v3996, %v3997
        %v3999 = vrot.slane %v3902, 1
        %v4000 = vsel %vm585, %v3997, %v3999
        %v4001 = vrot.slane %v3887, 1
        %v4002 = vrot.slane %v3788, 1
        %v4003 = vsel %vm585, %v4001, %v4002
        %v4004 = vrot.slane %v3903, 1
        %v4005 = vsel %vm585, %v4002, %v4004
        %v4006 = vrot.slane %v3888, 1
        %v4007 = vrot.slane %v3791, 1
        %v4008 = vsel %vm585, %v4006, %v4007
        %v4009 = vrot.slane %v3904, 1
        %v4010 = vsel %vm585, %v4007, %v4009
        %v4011 = vrot.slane %v3874, 2
        %v4012 = vrot.slane %v3749, 2
        %v4013 = vsel %vm661, %v4011, %v4012
        %v4014 = vrot.slane %v3890, 2
        %v4015 = vsel %vm661, %v4012, %v4014
        %v4016 = vrot.slane %v3875, 2
        %v4017 = vrot.slane %v3752, 2
        %v4018 = vsel %vm661, %v4016, %v4017
        %v4019 = vrot.slane %v3891, 2
        %v4020 = vsel %vm661, %v4017, %v4019
        %v4021 = vrot.slane %v3876, 2
        %v4022 = vrot.slane %v3755, 2
        %v4023 = vsel %vm661, %v4021, %v4022
        %v4024 = vrot.slane %v3892, 2
        %v4025 = vsel %vm661, %v4022, %v4024
        %v4026 = vrot.slane %v3877, 2
        %v4027 = vrot.slane %v3758, 2
        %v4028 = vsel %vm661, %v4026, %v4027
        %v4029 = vrot.slane %v3893, 2
        %v4030 = vsel %vm661, %v4027, %v4029
        %v4031 = vrot.slane %v3878, 2
        %v4032 = vrot.slane %v3761, 2
        %v4033 = vsel %vm661, %v4031, %v4032
        %v4034 = vrot.slane %v3894, 2
        %v4035 = vsel %vm661, %v4032, %v4034
        %v4036 = vrot.slane %v3879, 2
        %v4037 = vrot.slane %v3764, 2
        %v4038 = vsel %vm661, %v4036, %v4037
        %v4039 = vrot.slane %v3895, 2
        %v4040 = vsel %vm661, %v4037, %v4039
        %v4041 = vrot.slane %v3880, 2
        %v4042 = vrot.slane %v3767, 2
        %v4043 = vsel %vm661, %v4041, %v4042
        %v4044 = vrot.slane %v3896, 2
        %v4045 = vsel %vm661, %v4042, %v4044
        %v4046 = vrot.slane %v3881, 2
        %v4047 = vrot.slane %v3770, 2
        %v4048 = vsel %vm661, %v4046, %v4047
        %v4049 = vrot.slane %v3897, 2
        %v4050 = vsel %vm661, %v4047, %v4049
        %v4051 = vrot.slane %v3882, 2
        %v4052 = vrot.slane %v3773, 2
        %v4053 = vsel %vm661, %v4051, %v4052
        %v4054 = vrot.slane %v3898, 2
        %v4055 = vsel %vm661, %v4052, %v4054
        %v4056 = vrot.slane %v3883, 2
        %v4057 = vrot.slane %v3776, 2
        %v4058 = vsel %vm661, %v4056, %v4057
        %v4059 = vrot.slane %v3899, 2
        %v4060 = vsel %vm661, %v4057, %v4059
        %v4061 = vrot.slane %v3884, 2
        %v4062 = vrot.slane %v3779, 2
        %v4063 = vsel %vm661, %v4061, %v4062
        %v4064 = vrot.slane %v3900, 2
        %v4065 = vsel %vm661, %v4062, %v4064
        %v4066 = vrot.slane %v3885, 2
        %v4067 = vrot.slane %v3782, 2
        %v4068 = vsel %vm661, %v4066, %v4067
        %v4069 = vrot.slane %v3901, 2
        %v4070 = vsel %vm661, %v4067, %v4069
        %v4071 = vrot.slane %v3886, 2
        %v4072 = vrot.slane %v3785, 2
        %v4073 = vsel %vm661, %v4071, %v4072
        %v4074 = vrot.slane %v3902, 2
        %v4075 = vsel %vm661, %v4072, %v4074
        %v4076 = vrot.slane %v3887, 2
        %v4077 = vrot.slane %v3788, 2
        %v4078 = vsel %vm661, %v4076, %v4077
        %v4079 = vrot.slane %v3903, 2
        %v4080 = vsel %vm661, %v4077, %v4079
        %v4081 = vrot.slane %v3888, 2
        %v4082 = vrot.slane %v3791, 2
        %v4083 = vsel %vm661, %v4081, %v4082
        %v4084 = vrot.slane %v3904, 2
        %v4085 = vsel %vm661, %v4082, %v4084
        %v4088 = vrot.slane %v3889, 1
        %v4089 = vrot.slane %v3794, 1
        %v4090 = vsel %vm585, %v4088, %v4089
        %v4091 = vrot.slane %v3905, 1
        %v4092 = vsel %vm585, %v4089, %v4091
        %v4125 = vrot.slane %v3889, 2
        %v4126 = vrot.slane %v3794, 2
        %v4127 = vsel %vm661, %v4125, %v4126
        %v4128 = vrot.slane %v3905, 2
        %v4129 = vsel %vm661, %v4126, %v4128
        %4130 = vrot.lane.b32.xlu0 %v3938, 32
        %v4131 = vpop.permute.xlu0 %4130
        %4132 = vrot.lane.b32.xlu0 %v3940, 32
        %v4133 = vpop.permute.xlu0 %4132
        %4134 = vrot.lane.b32.xlu0 %v3943, 32
        %v4135 = vpop.permute.xlu0 %4134
        %4136 = vrot.lane.b32.xlu0 %v3945, 32
        %v4137 = vpop.permute.xlu0 %4136
        %4138 = vrot.lane.b32.xlu0 %v3948, 32
        %v4139 = vpop.permute.xlu0 %4138
        %4140 = vrot.lane.b32.xlu0 %v3950, 32
        %v4141 = vpop.permute.xlu0 %4140
        %4142 = vrot.lane.b32.xlu0 %v3953, 32
        %v4143 = vpop.permute.xlu0 %4142
        %4144 = vrot.lane.b32.xlu0 %v3955, 32
        %v4145 = vpop.permute.xlu0 %4144
        %4146 = vrot.lane.b32.xlu0 %v3958, 32
        %v4147 = vpop.permute.xlu0 %4146
        %4148 = vrot.lane.b32.xlu0 %v3960, 32
        %v4149 = vpop.permute.xlu0 %4148
        %4150 = vrot.lane.b32.xlu0 %v3963, 32
        %v4151 = vpop.permute.xlu0 %4150
        %4152 = vrot.lane.b32.xlu0 %v3965, 32
        %v4153 = vpop.permute.xlu0 %4152
        %4154 = vrot.lane.b32.xlu0 %v3968, 32
        %v4155 = vpop.permute.xlu0 %4154
        %4156 = vrot.lane.b32.xlu0 %v3970, 32
        %v4157 = vpop.permute.xlu0 %4156
        %4158 = vrot.lane.b32.xlu0 %v3973, 32
        %v4159 = vpop.permute.xlu0 %4158
        %4160 = vrot.lane.b32.xlu0 %v3975, 32
        %v4161 = vpop.permute.xlu0 %4160
        %4162 = vrot.lane.b32.xlu0 %v3978, 32
        %v4163 = vpop.permute.xlu0 %4162
        %4164 = vrot.lane.b32.xlu0 %v3980, 32
        %v4165 = vpop.permute.xlu0 %4164
        %4166 = vrot.lane.b32.xlu0 %v3983, 32
        %v4167 = vpop.permute.xlu0 %4166
        %4168 = vrot.lane.b32.xlu0 %v3985, 32
        %v4169 = vpop.permute.xlu0 %4168
        %4170 = vrot.lane.b32.xlu0 %v3988, 32
        %v4171 = vpop.permute.xlu0 %4170
        %4172 = vrot.lane.b32.xlu0 %v3990, 32
        %v4173 = vpop.permute.xlu0 %4172
        %4174 = vrot.lane.b32.xlu0 %v3993, 32
        %v4175 = vpop.permute.xlu0 %4174
        %4176 = vrot.lane.b32.xlu0 %v3995, 32
        %v4177 = vpop.permute.xlu0 %4176
        %4178 = vrot.lane.b32.xlu0 %v3998, 32
        %v4179 = vpop.permute.xlu0 %4178
        %4180 = vrot.lane.b32.xlu0 %v4000, 32
        %v4181 = vpop.permute.xlu0 %4180
        %4182 = vrot.lane.b32.xlu0 %v4003, 32
        %v4183 = vpop.permute.xlu0 %4182
        %4184 = vrot.lane.b32.xlu0 %v4005, 32
        %v4185 = vpop.permute.xlu0 %4184
        %4186 = vrot.lane.b32.xlu0 %v4008, 32
        %v4187 = vpop.permute.xlu0 %4186
        %4188 = vrot.lane.b32.xlu0 %v4010, 32
        %v4189 = vpop.permute.xlu0 %4188
        %4220 = vrot.lane.b32.xlu0 %v4013, 64
        %v4221 = vpop.permute.xlu0 %4220
        %4222 = vrot.lane.b32.xlu0 %v4015, 64
        %v4223 = vpop.permute.xlu0 %4222
        %4224 = vrot.lane.b32.xlu0 %v4018, 64
        %v4225 = vpop.permute.xlu0 %4224
        %4226 = vrot.lane.b32.xlu0 %v4020, 64
        %v4227 = vpop.permute.xlu0 %4226
        %4228 = vrot.lane.b32.xlu0 %v4023, 64
        %v4229 = vpop.permute.xlu0 %4228
        %4230 = vrot.lane.b32.xlu0 %v4025, 64
        %v4231 = vpop.permute.xlu0 %4230
        %4232 = vrot.lane.b32.xlu0 %v4028, 64
        %v4233 = vpop.permute.xlu0 %4232
        %4234 = vrot.lane.b32.xlu0 %v4030, 64
        %v4235 = vpop.permute.xlu0 %4234
        %4236 = vrot.lane.b32.xlu0 %v4033, 64
        %v4237 = vpop.permute.xlu0 %4236
        %4238 = vrot.lane.b32.xlu0 %v4035, 64
        %v4239 = vpop.permute.xlu0 %4238
        %4240 = vrot.lane.b32.xlu0 %v4038, 64
        %v4241 = vpop.permute.xlu0 %4240
        %4242 = vrot.lane.b32.xlu0 %v4040, 64
        %v4243 = vpop.permute.xlu0 %4242
        %4244 = vrot.lane.b32.xlu0 %v4043, 64
        %v4245 = vpop.permute.xlu0 %4244
        %4246 = vrot.lane.b32.xlu0 %v4045, 64
        %v4247 = vpop.permute.xlu0 %4246
        %4248 = vrot.lane.b32.xlu0 %v4048, 64
        %v4249 = vpop.permute.xlu0 %4248
        %4250 = vrot.lane.b32.xlu0 %v4050, 64
        %v4251 = vpop.permute.xlu0 %4250
        %4252 = vrot.lane.b32.xlu0 %v4053, 64
        %v4253 = vpop.permute.xlu0 %4252
        %4254 = vrot.lane.b32.xlu0 %v4055, 64
        %v4255 = vpop.permute.xlu0 %4254
        %4256 = vrot.lane.b32.xlu0 %v4058, 64
        %v4257 = vpop.permute.xlu0 %4256
        %4258 = vrot.lane.b32.xlu0 %v4060, 64
        %v4259 = vpop.permute.xlu0 %4258
        %4260 = vrot.lane.b32.xlu0 %v4063, 64
        %v4261 = vpop.permute.xlu0 %4260
        %4262 = vrot.lane.b32.xlu0 %v4065, 64
        %v4263 = vpop.permute.xlu0 %4262
        %4264 = vrot.lane.b32.xlu0 %v4068, 64
        %v4265 = vpop.permute.xlu0 %4264
        %4266 = vrot.lane.b32.xlu0 %v4070, 64
        %v4267 = vpop.permute.xlu0 %4266
        %4268 = vrot.lane.b32.xlu0 %v4073, 64
        %v4269 = vpop.permute.xlu0 %4268
        %4270 = vrot.lane.b32.xlu0 %v4075, 64
        %v4271 = vpop.permute.xlu0 %4270
        %4272 = vrot.lane.b32.xlu0 %v4078, 64
        %v4273 = vpop.permute.xlu0 %4272
        %4274 = vrot.lane.b32.xlu0 %v4080, 64
        %v4275 = vpop.permute.xlu0 %4274
        %4276 = vrot.lane.b32.xlu0 %v4083, 64
        %v4277 = vpop.permute.xlu0 %4276
        %4278 = vrot.lane.b32.xlu0 %v4085, 64
        %v4279 = vpop.permute.xlu0 %4278
        %4310 = vrot.lane.b32.xlu0 %v3874, 96
        %v4311 = vpop.permute.xlu0 %4310
        %4312 = vrot.lane.b32.xlu0 %v3749, 96
        %v4313 = vpop.permute.xlu0 %4312
        %4314 = vrot.lane.b32.xlu0 %v3875, 96
        %v4315 = vpop.permute.xlu0 %4314
        %4316 = vrot.lane.b32.xlu0 %v3752, 96
        %v4317 = vpop.permute.xlu0 %4316
        %4318 = vrot.lane.b32.xlu0 %v3876, 96
        %v4319 = vpop.permute.xlu0 %4318
        %4320 = vrot.lane.b32.xlu0 %v3755, 96
        %v4321 = vpop.permute.xlu0 %4320
        %4322 = vrot.lane.b32.xlu0 %v3877, 96
        %v4323 = vpop.permute.xlu0 %4322
        %4324 = vrot.lane.b32.xlu0 %v3758, 96
        %v4325 = vpop.permute.xlu0 %4324
        %4326 = vrot.lane.b32.xlu0 %v3878, 96
        %v4327 = vpop.permute.xlu0 %4326
        %4328 = vrot.lane.b32.xlu0 %v3761, 96
        %v4329 = vpop.permute.xlu0 %4328
        %4330 = vrot.lane.b32.xlu0 %v3879, 96
        %v4331 = vpop.permute.xlu0 %4330
        %4332 = vrot.lane.b32.xlu0 %v3764, 96
        %v4333 = vpop.permute.xlu0 %4332
        %4334 = vrot.lane.b32.xlu0 %v3880, 96
        %v4335 = vpop.permute.xlu0 %4334
        %4336 = vrot.lane.b32.xlu0 %v3767, 96
        %v4337 = vpop.permute.xlu0 %4336
        %4338 = vrot.lane.b32.xlu0 %v3881, 96
        %v4339 = vpop.permute.xlu0 %4338
        %4340 = vrot.lane.b32.xlu0 %v3770, 96
        %v4341 = vpop.permute.xlu0 %4340
        %4342 = vrot.lane.b32.xlu0 %v3882, 96
        %v4343 = vpop.permute.xlu0 %4342
        %4344 = vrot.lane.b32.xlu0 %v3773, 96
        %v4345 = vpop.permute.xlu0 %4344
        %4346 = vrot.lane.b32.xlu0 %v3883, 96
        %v4347 = vpop.permute.xlu0 %4346
        %4348 = vrot.lane.b32.xlu0 %v3776, 96
        %v4349 = vpop.permute.xlu0 %4348
        %4350 = vrot.lane.b32.xlu0 %v3884, 96
        %v4351 = vpop.permute.xlu0 %4350
        %4352 = vrot.lane.b32.xlu0 %v3779, 96
        %v4353 = vpop.permute.xlu0 %4352
        %4354 = vrot.lane.b32.xlu0 %v3885, 96
        %v4355 = vpop.permute.xlu0 %4354
        %4356 = vrot.lane.b32.xlu0 %v3782, 96
        %v4357 = vpop.permute.xlu0 %4356
        %4358 = vrot.lane.b32.xlu0 %v3886, 96
        %v4359 = vpop.permute.xlu0 %4358
        %4360 = vrot.lane.b32.xlu0 %v3785, 96
        %v4361 = vpop.permute.xlu0 %4360
        %4362 = vrot.lane.b32.xlu0 %v3887, 96
        %v4363 = vpop.permute.xlu0 %4362
        %4364 = vrot.lane.b32.xlu0 %v3788, 96
        %v4365 = vpop.permute.xlu0 %4364
        %4366 = vrot.lane.b32.xlu0 %v3888, 96
        %v4367 = vpop.permute.xlu0 %4366
        %4368 = vrot.lane.b32.xlu0 %v3791, 96
        %v4369 = vpop.permute.xlu0 %4368
        %4370 = vrot.lane.b32.xlu0 %v3889, 96
        %v4371 = vpop.permute.xlu0 %4370
        %4372 = vrot.lane.b32.xlu0 %v3794, 96
        %v4373 = vpop.permute.xlu0 %4372
        %4406 = vrot.lane.b32.xlu0 %v4013, 32
        %v4407 = vpop.permute.xlu0 %4406
        %4408 = vrot.lane.b32.xlu0 %v4015, 32
        %v4409 = vpop.permute.xlu0 %4408
        %4410 = vrot.lane.b32.xlu0 %v4018, 32
        %v4411 = vpop.permute.xlu0 %4410
        %4412 = vrot.lane.b32.xlu0 %v4020, 32
        %v4413 = vpop.permute.xlu0 %4412
        %4414 = vrot.lane.b32.xlu0 %v4023, 32
        %v4415 = vpop.permute.xlu0 %4414
        %4416 = vrot.lane.b32.xlu0 %v4025, 32
        %v4417 = vpop.permute.xlu0 %4416
        %4418 = vrot.lane.b32.xlu0 %v4028, 32
        %v4419 = vpop.permute.xlu0 %4418
        %4420 = vrot.lane.b32.xlu0 %v4030, 32
        %v4421 = vpop.permute.xlu0 %4420
        %4422 = vrot.lane.b32.xlu0 %v4033, 32
        %v4423 = vpop.permute.xlu0 %4422
        %4424 = vrot.lane.b32.xlu0 %v4035, 32
        %v4425 = vpop.permute.xlu0 %4424
        %4426 = vrot.lane.b32.xlu0 %v4038, 32
        %v4427 = vpop.permute.xlu0 %4426
        %4428 = vrot.lane.b32.xlu0 %v4040, 32
        %v4429 = vpop.permute.xlu0 %4428
        %4430 = vrot.lane.b32.xlu0 %v4043, 32
        %v4431 = vpop.permute.xlu0 %4430
        %4432 = vrot.lane.b32.xlu0 %v4045, 32
        %v4433 = vpop.permute.xlu0 %4432
        %4434 = vrot.lane.b32.xlu0 %v4048, 32
        %v4435 = vpop.permute.xlu0 %4434
        %4436 = vrot.lane.b32.xlu0 %v4050, 32
        %v4437 = vpop.permute.xlu0 %4436
        %4438 = vrot.lane.b32.xlu0 %v4053, 32
        %v4439 = vpop.permute.xlu0 %4438
        %4440 = vrot.lane.b32.xlu0 %v4055, 32
        %v4441 = vpop.permute.xlu0 %4440
        %4442 = vrot.lane.b32.xlu0 %v4058, 32
        %v4443 = vpop.permute.xlu0 %4442
        %4444 = vrot.lane.b32.xlu0 %v4060, 32
        %v4445 = vpop.permute.xlu0 %4444
        %4446 = vrot.lane.b32.xlu0 %v4063, 32
        %v4447 = vpop.permute.xlu0 %4446
        %4448 = vrot.lane.b32.xlu0 %v4065, 32
        %v4449 = vpop.permute.xlu0 %4448
        %4450 = vrot.lane.b32.xlu0 %v4068, 32
        %v4451 = vpop.permute.xlu0 %4450
        %4452 = vrot.lane.b32.xlu0 %v4070, 32
        %v4453 = vpop.permute.xlu0 %4452
        %4454 = vrot.lane.b32.xlu0 %v4073, 32
        %v4455 = vpop.permute.xlu0 %4454
        %4456 = vrot.lane.b32.xlu0 %v4075, 32
        %v4457 = vpop.permute.xlu0 %4456
        %4458 = vrot.lane.b32.xlu0 %v4078, 32
        %v4459 = vpop.permute.xlu0 %4458
        %4460 = vrot.lane.b32.xlu0 %v4080, 32
        %v4461 = vpop.permute.xlu0 %4460
        %4462 = vrot.lane.b32.xlu0 %v4083, 32
        %v4463 = vpop.permute.xlu0 %4462
        %4464 = vrot.lane.b32.xlu0 %v4085, 32
        %v4465 = vpop.permute.xlu0 %4464
        %4466 = vrot.lane.b32.xlu0 %v4127, 32
        %v4467 = vpop.permute.xlu0 %4466
        %4468 = vrot.lane.b32.xlu0 %v4129, 32
        %v4469 = vpop.permute.xlu0 %4468
        %4502 = vrot.lane.b32.xlu0 %v3875, 64
        %v4503 = vpop.permute.xlu0 %4502
        %4504 = vrot.lane.b32.xlu0 %v3752, 64
        %v4505 = vpop.permute.xlu0 %4504
        %4506 = vrot.lane.b32.xlu0 %v3876, 64
        %v4507 = vpop.permute.xlu0 %4506
        %4508 = vrot.lane.b32.xlu0 %v3755, 64
        %v4509 = vpop.permute.xlu0 %4508
        %4510 = vrot.lane.b32.xlu0 %v3877, 64
        %v4511 = vpop.permute.xlu0 %4510
        %4512 = vrot.lane.b32.xlu0 %v3758, 64
        %v4513 = vpop.permute.xlu0 %4512
        %4514 = vrot.lane.b32.xlu0 %v3878, 64
        %v4515 = vpop.permute.xlu0 %4514
        %4516 = vrot.lane.b32.xlu0 %v3761, 64
        %v4517 = vpop.permute.xlu0 %4516
        %4518 = vrot.lane.b32.xlu0 %v3879, 64
        %v4519 = vpop.permute.xlu0 %4518
        %4520 = vrot.lane.b32.xlu0 %v3764, 64
        %v4521 = vpop.permute.xlu0 %4520
        %4522 = vrot.lane.b32.xlu0 %v3880, 64
        %v4523 = vpop.permute.xlu0 %4522
        %4524 = vrot.lane.b32.xlu0 %v3767, 64
        %v4525 = vpop.permute.xlu0 %4524
        %4526 = vrot.lane.b32.xlu0 %v3881, 64
        %v4527 = vpop.permute.xlu0 %4526
        %4528 = vrot.lane.b32.xlu0 %v3770, 64
        %v4529 = vpop.permute.xlu0 %4528
        %4530 = vrot.lane.b32.xlu0 %v3882, 64
        %v4531 = vpop.permute.xlu0 %4530
        %4532 = vrot.lane.b32.xlu0 %v3773, 64
        %v4533 = vpop.permute.xlu0 %4532
        %4534 = vrot.lane.b32.xlu0 %v3883, 64
        %v4535 = vpop.permute.xlu0 %4534
        %4536 = vrot.lane.b32.xlu0 %v3776, 64
        %v4537 = vpop.permute.xlu0 %4536
        %4538 = vrot.lane.b32.xlu0 %v3884, 64
        %v4539 = vpop.permute.xlu0 %4538
        %4540 = vrot.lane.b32.xlu0 %v3779, 64
        %v4541 = vpop.permute.xlu0 %4540
        %4542 = vrot.lane.b32.xlu0 %v3885, 64
        %v4543 = vpop.permute.xlu0 %4542
        %4544 = vrot.lane.b32.xlu0 %v3782, 64
        %v4545 = vpop.permute.xlu0 %4544
        %4546 = vrot.lane.b32.xlu0 %v3886, 64
        %v4547 = vpop.permute.xlu0 %4546
        %4548 = vrot.lane.b32.xlu0 %v3785, 64
        %v4549 = vpop.permute.xlu0 %4548
        %4550 = vrot.lane.b32.xlu0 %v3887, 64
        %v4551 = vpop.permute.xlu0 %4550
        %4552 = vrot.lane.b32.xlu0 %v3788, 64
        %v4553 = vpop.permute.xlu0 %4552
        %4554 = vrot.lane.b32.xlu0 %v3888, 64
        %v4555 = vpop.permute.xlu0 %4554
        %4556 = vrot.lane.b32.xlu0 %v3791, 64
        %v4557 = vpop.permute.xlu0 %4556
        %4558 = vrot.lane.b32.xlu0 %v3889, 64
        %v4559 = vpop.permute.xlu0 %4558
        %4560 = vrot.lane.b32.xlu0 %v3794, 64
        %v4561 = vpop.permute.xlu0 %4560
        %4592 = vrot.lane.b32.xlu0 %v3943, 96
        %v4593 = vpop.permute.xlu0 %4592
        %4594 = vrot.lane.b32.xlu0 %v3945, 96
        %v4595 = vpop.permute.xlu0 %4594
        %4596 = vrot.lane.b32.xlu0 %v3948, 96
        %v4597 = vpop.permute.xlu0 %4596
        %4598 = vrot.lane.b32.xlu0 %v3950, 96
        %v4599 = vpop.permute.xlu0 %4598
        %4600 = vrot.lane.b32.xlu0 %v3953, 96
        %v4601 = vpop.permute.xlu0 %4600
        %4602 = vrot.lane.b32.xlu0 %v3955, 96
        %v4603 = vpop.permute.xlu0 %4602
        %4604 = vrot.lane.b32.xlu0 %v3958, 96
        %v4605 = vpop.permute.xlu0 %4604
        %4606 = vrot.lane.b32.xlu0 %v3960, 96
        %v4607 = vpop.permute.xlu0 %4606
        %4608 = vrot.lane.b32.xlu0 %v3963, 96
        %v4609 = vpop.permute.xlu0 %4608
        %4610 = vrot.lane.b32.xlu0 %v3965, 96
        %v4611 = vpop.permute.xlu0 %4610
        %4612 = vrot.lane.b32.xlu0 %v3968, 96
        %v4613 = vpop.permute.xlu0 %4612
        %4614 = vrot.lane.b32.xlu0 %v3970, 96
        %v4615 = vpop.permute.xlu0 %4614
        %4616 = vrot.lane.b32.xlu0 %v3973, 96
        %v4617 = vpop.permute.xlu0 %4616
        %4618 = vrot.lane.b32.xlu0 %v3975, 96
        %v4619 = vpop.permute.xlu0 %4618
        %4620 = vrot.lane.b32.xlu0 %v3978, 96
        %v4621 = vpop.permute.xlu0 %4620
        %4622 = vrot.lane.b32.xlu0 %v3980, 96
        %v4623 = vpop.permute.xlu0 %4622
        %4624 = vrot.lane.b32.xlu0 %v3983, 96
        %v4625 = vpop.permute.xlu0 %4624
        %4626 = vrot.lane.b32.xlu0 %v3985, 96
        %v4627 = vpop.permute.xlu0 %4626
        %4628 = vrot.lane.b32.xlu0 %v3988, 96
        %v4629 = vpop.permute.xlu0 %4628
        %4630 = vrot.lane.b32.xlu0 %v3990, 96
        %v4631 = vpop.permute.xlu0 %4630
        %4632 = vrot.lane.b32.xlu0 %v3993, 96
        %v4633 = vpop.permute.xlu0 %4632
        %4634 = vrot.lane.b32.xlu0 %v3995, 96
        %v4635 = vpop.permute.xlu0 %4634
        %4636 = vrot.lane.b32.xlu0 %v3998, 96
        %v4637 = vpop.permute.xlu0 %4636
        %4638 = vrot.lane.b32.xlu0 %v4000, 96
        %v4639 = vpop.permute.xlu0 %4638
        %4640 = vrot.lane.b32.xlu0 %v4003, 96
        %v4641 = vpop.permute.xlu0 %4640
        %4642 = vrot.lane.b32.xlu0 %v4005, 96
        %v4643 = vpop.permute.xlu0 %4642
        %4644 = vrot.lane.b32.xlu0 %v4008, 96
        %v4645 = vpop.permute.xlu0 %4644
        %4646 = vrot.lane.b32.xlu0 %v4010, 96
        %v4647 = vpop.permute.xlu0 %4646
        %4648 = vrot.lane.b32.xlu0 %v4090, 96
        %v4649 = vpop.permute.xlu0 %4648
        %4650 = vrot.lane.b32.xlu0 %v4092, 96
        %v4651 = vpop.permute.xlu0 %4650
        %v4682 = vsel %vm1714, %v3874, %v4131
        %v4683 = vsel %vm1714, %v3749, %v4133
        %v4684 = vsel %vm1714, %v3875, %v4135
        %v4685 = vsel %vm1714, %v3752, %v4137
        %v4686 = vsel %vm1714, %v3876, %v4139
        %v4687 = vsel %vm1714, %v3755, %v4141
        %v4688 = vsel %vm1714, %v3877, %v4143
        %v4689 = vsel %vm1714, %v3758, %v4145
        %v4690 = vsel %vm1714, %v3878, %v4147
        %v4691 = vsel %vm1714, %v3761, %v4149
        %v4692 = vsel %vm1714, %v3879, %v4151
        %v4693 = vsel %vm1714, %v3764, %v4153
        %v4694 = vsel %vm1714, %v3880, %v4155
        %v4695 = vsel %vm1714, %v3767, %v4157
        %v4696 = vsel %vm1714, %v3881, %v4159
        %v4697 = vsel %vm1714, %v3770, %v4161
        %v4698 = vsel %vm1714, %v3882, %v4163
        %v4699 = vsel %vm1714, %v3773, %v4165
        %v4700 = vsel %vm1714, %v3883, %v4167
        %v4701 = vsel %vm1714, %v3776, %v4169
        %v4702 = vsel %vm1714, %v3884, %v4171
        %v4703 = vsel %vm1714, %v3779, %v4173
        %v4704 = vsel %vm1714, %v3885, %v4175
        %v4705 = vsel %vm1714, %v3782, %v4177
        %v4706 = vsel %vm1714, %v3886, %v4179
        %v4707 = vsel %vm1714, %v3785, %v4181
        %v4708 = vsel %vm1714, %v3887, %v4183
        %v4709 = vsel %vm1714, %v3788, %v4185
        %v4710 = vsel %vm1714, %v3888, %v4187
        %v4711 = vsel %vm1714, %v3791, %v4189
        %v4712 = vsel %vm3241, %v4682, %v4221
        %v4713 = vsel %vm3241, %v4683, %v4223
        %v4714 = vsel %vm3241, %v4684, %v4225
        %v4715 = vsel %vm3241, %v4685, %v4227
        %v4716 = vsel %vm3241, %v4686, %v4229
        %v4717 = vsel %vm3241, %v4687, %v4231
        %v4718 = vsel %vm3241, %v4688, %v4233
        %v4719 = vsel %vm3241, %v4689, %v4235
        %v4720 = vsel %vm3241, %v4690, %v4237
        %v4721 = vsel %vm3241, %v4691, %v4239
        %v4722 = vsel %vm3241, %v4692, %v4241
        %v4723 = vsel %vm3241, %v4693, %v4243
        %v4724 = vsel %vm3241, %v4694, %v4245
        %v4725 = vsel %vm3241, %v4695, %v4247
        %v4726 = vsel %vm3241, %v4696, %v4249
        %v4727 = vsel %vm3241, %v4697, %v4251
        %v4728 = vsel %vm3241, %v4698, %v4253
        %v4729 = vsel %vm3241, %v4699, %v4255
        %v4730 = vsel %vm3241, %v4700, %v4257
        %v4731 = vsel %vm3241, %v4701, %v4259
        %v4732 = vsel %vm3241, %v4702, %v4261
        %v4733 = vsel %vm3241, %v4703, %v4263
        %v4734 = vsel %vm3241, %v4704, %v4265
        %v4735 = vsel %vm3241, %v4705, %v4267
        %v4736 = vsel %vm3241, %v4706, %v4269
        %v4737 = vsel %vm3241, %v4707, %v4271
        %v4738 = vsel %vm3241, %v4708, %v4273
        %v4739 = vsel %vm3241, %v4709, %v4275
        %v4740 = vsel %vm3241, %v4710, %v4277
        %v4741 = vsel %vm3241, %v4711, %v4279
        %v4742 = vsel %vm3307, %v4712, %v4311
        %v4743 = vsel %vm3307, %v4713, %v4313
        %v4744 = vsel %vm3307, %v4712, %v4315
        %v4745 = vsel %vm3307, %v4713, %v4317
        %v4746 = vsel %vm3307, %v4714, %v4319
        %v4747 = vsel %vm3307, %v4715, %v4321
        %v4748 = vsel %vm3307, %v4716, %v4323
        %v4749 = vsel %vm3307, %v4717, %v4325
        %v4750 = vsel %vm3307, %v4718, %v4327
        %v4751 = vsel %vm3307, %v4719, %v4329
        %v4752 = vsel %vm3307, %v4720, %v4331
        %v4753 = vsel %vm3307, %v4721, %v4333
        %v4754 = vsel %vm3307, %v4722, %v4335
        %v4755 = vsel %vm3307, %v4723, %v4337
        %v4756 = vsel %vm3307, %v4724, %v4339
        %v4757 = vsel %vm3307, %v4725, %v4341
        %v4758 = vsel %vm3307, %v4726, %v4343
        %v4759 = vsel %vm3307, %v4727, %v4345
        %v4760 = vsel %vm3307, %v4728, %v4347
        %v4761 = vsel %vm3307, %v4729, %v4349
        %v4762 = vsel %vm3307, %v4730, %v4351
        %v4763 = vsel %vm3307, %v4731, %v4353
        %v4764 = vsel %vm3307, %v4732, %v4355
        %v4765 = vsel %vm3307, %v4733, %v4357
        %v4766 = vsel %vm3307, %v4734, %v4359
        %v4767 = vsel %vm3307, %v4735, %v4361
        %v4768 = vsel %vm3307, %v4736, %v4363
        %v4769 = vsel %vm3307, %v4737, %v4365
        %v4770 = vsel %vm3307, %v4738, %v4367
        %v4771 = vsel %vm3307, %v4739, %v4369
        %v4772 = vsel %vm3307, %v4740, %v4371
        %v4773 = vsel %vm3307, %v4741, %v4373
        %v4774 = vsel %vm1714, %v3938, %v4407
        %v4775 = vsel %vm1714, %v3940, %v4409
        %v4776 = vsel %vm1714, %v3943, %v4411
        %v4777 = vsel %vm1714, %v3945, %v4413
        %v4778 = vsel %vm1714, %v3948, %v4415
        %v4779 = vsel %vm1714, %v3950, %v4417
        %v4780 = vsel %vm1714, %v3953, %v4419
        %v4781 = vsel %vm1714, %v3955, %v4421
        %v4782 = vsel %vm1714, %v3958, %v4423
        %v4783 = vsel %vm1714, %v3960, %v4425
        %v4784 = vsel %vm1714, %v3963, %v4427
        %v4785 = vsel %vm1714, %v3965, %v4429
        %v4786 = vsel %vm1714, %v3968, %v4431
        %v4787 = vsel %vm1714, %v3970, %v4433
        %v4788 = vsel %vm1714, %v3973, %v4435
        %v4789 = vsel %vm1714, %v3975, %v4437
        %v4790 = vsel %vm1714, %v3978, %v4439
        %v4791 = vsel %vm1714, %v3980, %v4441
        %v4792 = vsel %vm1714, %v3983, %v4443
        %v4793 = vsel %vm1714, %v3985, %v4445
        %v4794 = vsel %vm1714, %v3988, %v4447
        %v4795 = vsel %vm1714, %v3990, %v4449
        %v4796 = vsel %vm1714, %v3993, %v4451
        %v4797 = vsel %vm1714, %v3995, %v4453
        %v4798 = vsel %vm1714, %v3998, %v4455
        %v4799 = vsel %vm1714, %v4000, %v4457
        %v4800 = vsel %vm1714, %v4003, %v4459
        %v4801 = vsel %vm1714, %v4005, %v4461
        %v4802 = vsel %vm1714, %v4008, %v4463
        %v4803 = vsel %vm1714, %v4010, %v4465
        %v4804 = vsel %vm1714, %v4090, %v4467
        %v4805 = vsel %vm1714, %v4092, %v4469
        %v4806 = vsel %vm3241, %v4774, %v4503
        %v4807 = vsel %vm3241, %v4775, %v4505
        %v4808 = vsel %vm3241, %v4776, %v4507
        %v4809 = vsel %vm3241, %v4777, %v4509
        %v4810 = vsel %vm3241, %v4778, %v4511
        %v4811 = vsel %vm3241, %v4779, %v4513
        %v4812 = vsel %vm3241, %v4780, %v4515
        %v4813 = vsel %vm3241, %v4781, %v4517
        %v4814 = vsel %vm3241, %v4782, %v4519
        %v4815 = vsel %vm3241, %v4783, %v4521
        %v4816 = vsel %vm3241, %v4784, %v4523
        %v4817 = vsel %vm3241, %v4785, %v4525
        %v4818 = vsel %vm3241, %v4786, %v4527
        %v4819 = vsel %vm3241, %v4787, %v4529
        %v4820 = vsel %vm3241, %v4788, %v4531
        %v4821 = vsel %vm3241, %v4789, %v4533
        %v4822 = vsel %vm3241, %v4790, %v4535
        %v4823 = vsel %vm3241, %v4791, %v4537
        %v4824 = vsel %vm3241, %v4792, %v4539
        %v4825 = vsel %vm3241, %v4793, %v4541
        %v4826 = vsel %vm3241, %v4794, %v4543
        %v4827 = vsel %vm3241, %v4795, %v4545
        %v4828 = vsel %vm3241, %v4796, %v4547
        %v4829 = vsel %vm3241, %v4797, %v4549
        %v4830 = vsel %vm3241, %v4798, %v4551
        %v4831 = vsel %vm3241, %v4799, %v4553
        %v4832 = vsel %vm3241, %v4800, %v4555
        %v4833 = vsel %vm3241, %v4801, %v4557
        %v4834 = vsel %vm3241, %v4802, %v4559
        %v4835 = vsel %vm3241, %v4803, %v4561
        %v4836 = vsel %vm3241, %v4804, %v4559
        %v4837 = vsel %vm3241, %v4805, %v4561
        %v4838 = vsel %vm3307, %v4806, %v4593
        %v4839 = vsel %vm3307, %v4807, %v4595
        %v4840 = vsel %vm3307, %v4808, %v4597
        %v4841 = vsel %vm3307, %v4809, %v4599
        %v4842 = vsel %vm3307, %v4810, %v4601
        %v4843 = vsel %vm3307, %v4811, %v4603
        %v4844 = vsel %vm3307, %v4812, %v4605
        %v4845 = vsel %vm3307, %v4813, %v4607
        %v4846 = vsel %vm3307, %v4814, %v4609
        %v4847 = vsel %vm3307, %v4815, %v4611
        %v4848 = vsel %vm3307, %v4816, %v4613
        %v4849 = vsel %vm3307, %v4817, %v4615
        %v4850 = vsel %vm3307, %v4818, %v4617
        %v4851 = vsel %vm3307, %v4819, %v4619
        %v4852 = vsel %vm3307, %v4820, %v4621
        %v4853 = vsel %vm3307, %v4821, %v4623
        %v4854 = vsel %vm3307, %v4822, %v4625
        %v4855 = vsel %vm3307, %v4823, %v4627
        %v4856 = vsel %vm3307, %v4824, %v4629
        %v4857 = vsel %vm3307, %v4825, %v4631
        %v4858 = vsel %vm3307, %v4826, %v4633
        %v4859 = vsel %vm3307, %v4827, %v4635
        %v4860 = vsel %vm3307, %v4828, %v4637
        %v4861 = vsel %vm3307, %v4829, %v4639
        %v4862 = vsel %vm3307, %v4830, %v4641
        %v4863 = vsel %vm3307, %v4831, %v4643
        %v4864 = vsel %vm3307, %v4832, %v4645
        %v4865 = vsel %vm3307, %v4833, %v4647
        %v4866 = vsel %vm3307, %v4834, %v4649
        %v4867 = vsel %vm3307, %v4835, %v4651
        %v4868 = vsel %vm3307, %v4836, %v4649
        %v4869 = vsel %vm3307, %v4837, %v4651
        %v4870 = vld [vmem:[%s5] sm:$0xff]
        %v4871 = vld [vmem:[%s5 + $0x8] sm:$0xff]
        %v4872 = vld [vmem:[%s5 + $0x10] sm:$0xff]
        %v4873 = vld [vmem:[%s5 + $0x18] sm:$0xff]
        %v4874 = vld [vmem:[%s5 + $0x20] sm:$0xff]
        %v4875 = vld [vmem:[%s5 + $0x28] sm:$0xff]
        %v4876 = vld [vmem:[%s5 + $0x30] sm:$0xff]
        %v4877 = vld [vmem:[%s5 + $0x38] sm:$0xff]
        %v4878 = vld [vmem:[%s5 + $0x40] sm:$0xff]
        %v4879 = vld [vmem:[%s5 + $0x48] sm:$0xff]
        %v4880 = vld [vmem:[%s5 + $0x50] sm:$0xff]
        %v4881 = vld [vmem:[%s5 + $0x58] sm:$0xff]
        %v4882 = vld [vmem:[%s5 + $0x60] sm:$0xff]
        %v4883 = vld [vmem:[%s5 + $0x68] sm:$0xff]
        %v4884 = vld [vmem:[%s5 + $0x70] sm:$0xff]
        %v4885 = vld [vmem:[%s5 + $0x78] sm:$0xff]
        %v4886 = vld [vmem:[%s5 + $0x80] sm:$0xff]
        %v4887 = vld [vmem:[%s5 + $0x88] sm:$0xff]
        %v4888 = vld [vmem:[%s5 + $0x90] sm:$0xff]
        %v4889 = vld [vmem:[%s5 + $0x98] sm:$0xff]
        %v4890 = vld [vmem:[%s5 + $0xa0] sm:$0xff]
        %v4891 = vld [vmem:[%s5 + $0xa8] sm:$0xff]
        %v4892 = vld [vmem:[%s5 + $0xb0] sm:$0xff]
        %v4893 = vld [vmem:[%s5 + $0xb8] sm:$0xff]
        %v4894 = vld [vmem:[%s5 + $0xc0] sm:$0xff]
        %v4895 = vld [vmem:[%s5 + $0xc8] sm:$0xff]
        %v4896 = vld [vmem:[%s5 + $0xd0] sm:$0xff]
        %v4897 = vld [vmem:[%s5 + $0xd8] sm:$0xff]
        %v4898 = vld [vmem:[%s5 + $0xe0] sm:$0xff]
        %v4899 = vld [vmem:[%s5 + $0xe8] sm:$0xff]
        %v4900 = vld [vmem:[%s5 + $0xf0] sm:$0xff]
        %v4901 = vld [vmem:[%s5 + $0xf8] sm:$0xff]
        %v4902 = vld [vmem:[%s5 + $0x100] sm:$0xff]
        %v4903 = vld [vmem:[%s5 + $0x108] sm:$0xff]
        %v4904 = vld [vmem:[%s5 + $0x110] sm:$0xff]
        %v4905 = vld [vmem:[%s5 + $0x118] sm:$0xff]
        %v4906 = vld [vmem:[%s6] sm:$0x1]
        %v4908 = vlaneseq
        %v4909 = vshrl.u32 %v4908, 7
        %v4910 = vsub.s32 0, %v4909
        %v4911 = vrot.slane %v4906, %v4910
        %v4913 = vsel %vm1714, %v4018, 0
        %v4915 = vsel %vm1714, %v4020, 0
        %v4917 = vsel %vm1714, %v4023, 0
        %v4919 = vsel %vm1714, %v4025, 0
        %v4921 = vsel %vm1714, %v4028, 0
        %v4923 = vsel %vm1714, %v4030, 0
        %v4925 = vsel %vm1714, %v4033, 0
        %v4927 = vsel %vm1714, %v4035, 0
        %v4929 = vsel %vm1714, %v4038, 0
        %v4931 = vsel %vm1714, %v4040, 0
        %v4933 = vsel %vm1714, %v4043, 0
        %v4935 = vsel %vm1714, %v4045, 0
        %v4937 = vsel %vm1714, %v4048, 0
        %v4939 = vsel %vm1714, %v4050, 0
        %v4941 = vsel %vm1714, %v4053, 0
        %v4943 = vsel %vm1714, %v4055, 0
        %v4945 = vsel %vm1714, %v4058, 0
        %v4947 = vsel %vm1714, %v4060, 0
        %v4949 = vsel %vm1714, %v4063, 0
        %v4951 = vsel %vm1714, %v4065, 0
        %v4953 = vsel %vm1714, %v4068, 0
        %v4955 = vsel %vm1714, %v4070, 0
        %v4957 = vsel %vm1714, %v4073, 0
        %v4959 = vsel %vm1714, %v4075, 0
        %v4961 = vsel %vm1714, %v4078, 0
        %v4963 = vsel %vm1714, %v4080, 0
        %v4965 = vsel %vm1714, %v4083, 0
        %v4967 = vsel %vm1714, %v4085, 0
        %v4969 = vsel %vm1714, %v4127, 0
        %v4971 = vsel %vm1714, %v4129, 0
        %4973 = vmatprep.subr.mxu0 0.0
        %4974 = vmatpush1.msra.mxu0 %v4885
        %4975 = vmatprep.subr.mxu0 0.0
        %4976 = vmatpush1.msra.mxu0 %v4884
        %4977 = vmatprep.subr.mxu0 0.0
        %4978 = vmatpush1.msra.mxu0 %v4883
        %4979 = vmatprep.subr.mxu0 0.0
        %4980 = vmatpush1.msra.mxu0 %v4882
        %4981 = vmatprep.subr.mxu0 0.0
        %4982 = vmatpush1.msra.mxu0 %v4881
        %4983 = vmatprep.subr.mxu0 0.0
        %4984 = vmatpush1.msra.mxu0 %v4880
        %4985 = vmatprep.subr.mxu0 0.0
        %4986 = vmatpush1.msra.mxu0 %v4879
        %4987 = vmatprep.subr.mxu0 0.0
        %4988 = vmatpush1.msra.mxu0 %v4878
        %4989 = vmatprep.subr.mxu0 0.0
        %4990 = vmatpush1.msra.mxu0 %v4877
        %4991 = vmatprep.subr.mxu0 0.0
        %4992 = vmatpush1.msra.mxu0 %v4876
        %4993 = vmatprep.subr.mxu0 0.0
        %4994 = vmatpush1.msra.mxu0 %v4875
        %4995 = vmatprep.subr.mxu0 0.0
        %4996 = vmatpush1.msra.mxu0 %v4874
        %4997 = vmatprep.subr.mxu0 0.0
        %4998 = vmatpush1.msra.mxu0 %v4873
        %4999 = vmatprep.subr.mxu0 0.0
        %5000 = vmatpush1.msra.mxu0 %v4872
        %5001 = vmatprep.subr.mxu0 0.0
        %5002 = vmatpush1.msra.mxu0 %v4871
        %5003 = vmatprep.subr.mxu0 0.0
        %5004 = vmatpush1.msra.mxu0 %v4870
        %5005 = vmatprep.subr.mxu0 0.0
        %5006 = vmatpush2.msra.mxu0 %v4901
        %5007 = vmatprep.subr.mxu0 0.0
        %5008 = vmatpush2.msra.mxu0 %v4900
        %5009 = vmatprep.subr.mxu0 0.0
        %5010 = vmatpush2.msra.mxu0 %v4899
        %5011 = vmatprep.subr.mxu0 0.0
        %5012 = vmatpush2.msra.mxu0 %v4898
        %5013 = vmatprep.subr.mxu0 0.0
        %5014 = vmatpush2.msra.mxu0 %v4897
        %5015 = vmatprep.subr.mxu0 0.0
        %5016 = vmatpush2.msra.mxu0 %v4896
        %5017 = vmatprep.subr.mxu0 0.0
        %5018 = vmatpush2.msra.mxu0 %v4895
        %5019 = vmatprep.subr.mxu0 0.0
        %5020 = vmatpush2.msra.mxu0 %v4894
        %5021 = vmatprep.subr.mxu0 0.0
        %5022 = vmatpush2.msra.mxu0 %v4893
        %5023 = vmatprep.subr.mxu0 0.0
        %5024 = vmatpush2.msra.mxu0 %v4892
        %5025 = vmatprep.subr.mxu0 0.0
        %5026 = vmatpush2.msra.mxu0 %v4891
        %5027 = vmatprep.subr.mxu0 0.0
        %5028 = vmatpush2.msra.mxu0 %v4890
        %5029 = vmatprep.subr.mxu0 0.0
        %5030 = vmatpush2.msra.mxu0 %v4889
        %5031 = vmatprep.subr.mxu0 0.0
        %5032 = vmatpush2.msra.mxu0 %v4888
        %5033 = vmatprep.subr.mxu0 0.0
        %5034 = vmatpush2.msra.mxu0 %v4887
        %5035 = vmatprep.subr.mxu0 0.0
        %5036 = vmatpush2.msra.mxu0 %v4886
        %5037 = vmatprep.mubr.f32.mxu0 %v4838
        %5038 = vmatmul.mubr.f32.gmra.mxu0 %v4742
        %v5039 = vpop.f32.mrf.mxu0
        %v5040 = vadd.f32 %v4911, %v5039
        %v5041 = vpop.f32.mrf.mxu0
        %5042 = vmatprep.mubr.f32.mxu0 %v4839
        %5043 = vmatmul.mubr.f32.gmra.mxu0 %v4743
        %v5044 = vpop.f32.mrf.mxu0
        %v5045 = vadd.f32 %v4911, %v5044
        %v5046 = vpop.f32.mrf.mxu0
        %5047 = vmatprep.mubr.f32.mxu0 %v4840
        %5048 = vmatmul.mubr.f32.gmra.mxu0 %v4744
        %v5049 = vpop.f32.mrf.mxu0
        %v5050 = vadd.f32 %v4911, %v5049
        %v5051 = vpop.f32.mrf.mxu0
        %5052 = vmatprep.mubr.f32.mxu0 %v4841
        %5053 = vmatmul.mubr.f32.gmra.mxu0 %v4745
        %v5054 = vpop.f32.mrf.mxu0
        %v5055 = vadd.f32 %v4911, %v5054
        %v5056 = vpop.f32.mrf.mxu0
        %5057 = vmatprep.mubr.f32.mxu0 %v4842
        %5058 = vmatmul.mubr.f32.gmra.mxu0 %v4746
        %v5059 = vpop.f32.mrf.mxu0
        %v5060 = vadd.f32 %v4911, %v5059
        %v5061 = vpop.f32.mrf.mxu0
        %5062 = vmatprep.mubr.f32.mxu0 %v4843
        %5063 = vmatmul.mubr.f32.gmra.mxu0 %v4747
        %v5064 = vpop.f32.mrf.mxu0
        %v5065 = vadd.f32 %v4911, %v5064
        %v5066 = vpop.f32.mrf.mxu0
        %5067 = vmatprep.mubr.f32.mxu0 %v4844
        %5068 = vmatmul.mubr.f32.gmra.mxu0 %v4748
        %v5069 = vpop.f32.mrf.mxu0
        %v5070 = vadd.f32 %v4911, %v5069
        %v5071 = vpop.f32.mrf.mxu0
        %5072 = vmatprep.mubr.f32.mxu0 %v4845
        %5073 = vmatmul.mubr.f32.gmra.mxu0 %v4749
        %v5074 = vpop.f32.mrf.mxu0
        %v5075 = vadd.f32 %v4911, %v5074
        %v5076 = vpop.f32.mrf.mxu0
        %5077 = vmatprep.mubr.f32.mxu0 %v4846
        %5078 = vmatmul.mubr.f32.gmra.mxu0 %v4750
        %v5079 = vpop.f32.mrf.mxu0
        %v5080 = vadd.f32 %v4911, %v5079
        %v5081 = vpop.f32.mrf.mxu0
        %5082 = vmatprep.mubr.f32.mxu0 %v4847
        %5083 = vmatmul.mubr.f32.gmra.mxu0 %v4751
        %v5084 = vpop.f32.mrf.mxu0
        %v5085 = vadd.f32 %v4911, %v5084
        %v5086 = vpop.f32.mrf.mxu0
        %5087 = vmatprep.mubr.f32.mxu0 %v4848
        %5088 = vmatmul.mubr.f32.gmra.mxu0 %v4752
        %v5089 = vpop.f32.mrf.mxu0
        %v5090 = vadd.f32 %v4911, %v5089
        %v5091 = vpop.f32.mrf.mxu0
        %5092 = vmatprep.mubr.f32.mxu0 %v4849
        %5093 = vmatmul.mubr.f32.gmra.mxu0 %v4753
        %v5094 = vpop.f32.mrf.mxu0
        %v5095 = vadd.f32 %v4911, %v5094
        %v5096 = vpop.f32.mrf.mxu0
        %5097 = vmatprep.mubr.f32.mxu0 %v4850
        %5098 = vmatmul.mubr.f32.gmra.mxu0 %v4754
        %v5099 = vpop.f32.mrf.mxu0
        %v5100 = vadd.f32 %v4911, %v5099
        %v5101 = vpop.f32.mrf.mxu0
        %5102 = vmatprep.mubr.f32.mxu0 %v4851
        %5103 = vmatmul.mubr.f32.gmra.mxu0 %v4755
        %v5104 = vpop.f32.mrf.mxu0
        %v5105 = vadd.f32 %v4911, %v5104
        %v5106 = vpop.f32.mrf.mxu0
        %5107 = vmatprep.mubr.f32.mxu0 %v4852
        %5108 = vmatmul.mubr.f32.gmra.mxu0 %v4756
        %v5109 = vpop.f32.mrf.mxu0
        %v5110 = vadd.f32 %v4911, %v5109
        %v5111 = vpop.f32.mrf.mxu0
        %5112 = vmatprep.mubr.f32.mxu0 %v4853
        %5113 = vmatmul.mubr.f32.gmra.mxu0 %v4757
        %v5114 = vpop.f32.mrf.mxu0
        %v5115 = vadd.f32 %v4911, %v5114
        %v5116 = vpop.f32.mrf.mxu0
        %5117 = vmatprep.mubr.f32.mxu0 %v4854
        %5118 = vmatmul.mubr.f32.gmra.mxu0 %v4758
        %v5119 = vpop.f32.mrf.mxu0
        %v5120 = vadd.f32 %v4911, %v5119
        %v5121 = vpop.f32.mrf.mxu0
        %5122 = vmatprep.mubr.f32.mxu0 %v4855
        %5123 = vmatmul.mubr.f32.gmra.mxu0 %v4759
        %v5124 = vpop.f32.mrf.mxu0
        %v5125 = vadd.f32 %v4911, %v5124
        %v5126 = vpop.f32.mrf.mxu0
        %5127 = vmatprep.mubr.f32.mxu0 %v4856
        %5128 = vmatmul.mubr.f32.gmra.mxu0 %v4760
        %v5129 = vpop.f32.mrf.mxu0
        %v5130 = vadd.f32 %v4911, %v5129
        %v5131 = vpop.f32.mrf.mxu0
        %5132 = vmatprep.mubr.f32.mxu0 %v4857
        %5133 = vmatmul.mubr.f32.gmra.mxu0 %v4761
        %v5134 = vpop.f32.mrf.mxu0
        %v5135 = vadd.f32 %v4911, %v5134
        %v5136 = vpop.f32.mrf.mxu0
        %5137 = vmatprep.mubr.f32.mxu0 %v4858
        %5138 = vmatmul.mubr.f32.gmra.mxu0 %v4762
        %v5139 = vpop.f32.mrf.mxu0
        %v5140 = vadd.f32 %v4911, %v5139
        %v5141 = vpop.f32.mrf.mxu0
        %5142 = vmatprep.mubr.f32.mxu0 %v4859
        %5143 = vmatmul.mubr.f32.gmra.mxu0 %v4763
        %v5144 = vpop.f32.mrf.mxu0
        %v5145 = vadd.f32 %v4911, %v5144
        %v5146 = vpop.f32.mrf.mxu0
        %5147 = vmatprep.mubr.f32.mxu0 %v4860
        %5148 = vmatmul.mubr.f32.gmra.mxu0 %v4764
        %v5149 = vpop.f32.mrf.mxu0
        %v5150 = vadd.f32 %v4911, %v5149
        %v5151 = vpop.f32.mrf.mxu0
        %5152 = vmatprep.mubr.f32.mxu0 %v4861
        %5153 = vmatmul.mubr.f32.gmra.mxu0 %v4765
        %v5154 = vpop.f32.mrf.mxu0
        %v5155 = vadd.f32 %v4911, %v5154
        %v5156 = vpop.f32.mrf.mxu0
        %5157 = vmatprep.mubr.f32.mxu0 %v4862
        %5158 = vmatmul.mubr.f32.gmra.mxu0 %v4766
        %v5159 = vpop.f32.mrf.mxu0
        %v5160 = vadd.f32 %v4911, %v5159
        %v5161 = vpop.f32.mrf.mxu0
        %5162 = vmatprep.mubr.f32.mxu0 %v4863
        %5163 = vmatmul.mubr.f32.gmra.mxu0 %v4767
        %v5164 = vpop.f32.mrf.mxu0
        %v5165 = vadd.f32 %v4911, %v5164
        %v5166 = vpop.f32.mrf.mxu0
        %5167 = vmatprep.mubr.f32.mxu0 %v4864
        %5168 = vmatmul.mubr.f32.gmra.mxu0 %v4768
        %v5169 = vpop.f32.mrf.mxu0
        %v5170 = vadd.f32 %v4911, %v5169
        %v5171 = vpop.f32.mrf.mxu0
        %5172 = vmatprep.mubr.f32.mxu0 %v4865
        %5173 = vmatmul.mubr.f32.gmra.mxu0 %v4769
        %v5174 = vpop.f32.mrf.mxu0
        %v5175 = vadd.f32 %v4911, %v5174
        %v5176 = vpop.f32.mrf.mxu0
        %5177 = vmatprep.mubr.f32.mxu0 %v4866
        %5178 = vmatmul.mubr.f32.gmra.mxu0 %v4770
        %v5179 = vpop.f32.mrf.mxu0
        %v5180 = vadd.f32 %v4911, %v5179
        %v5181 = vpop.f32.mrf.mxu0
        %5182 = vmatprep.mubr.f32.mxu0 %v4867
        %5183 = vmatmul.mubr.f32.gmra.mxu0 %v4771
        %v5184 = vpop.f32.mrf.mxu0
        %v5185 = vadd.f32 %v4911, %v5184
        %v5186 = vpop.f32.mrf.mxu0
        %5187 = vmatprep.mubr.f32.mxu0 %v4868
        %5188 = vmatmul.mubr.f32.gmra.mxu0 %v4772
        %v5189 = vpop.f32.mrf.mxu0
        %v5190 = vadd.f32 %v4911, %v5189
        %v5191 = vpop.f32.mrf.mxu0
        %5192 = vmatprep.mubr.f32.mxu0 %v4869
        %5193 = vmatmul.mubr.f32.gmra.mxu0 %v4773
        %v5194 = vpop.f32.mrf.mxu0
        %v5195 = vadd.f32 %v4911, %v5194
        %v5196 = vpop.f32.mrf.mxu0
        %5197 = vdwg.mxu0
        %5198 = vmatprep.subr.mxu0 0.0
        %5199 = vmatpush1.msra.mxu0 0.0
        %5200 = vmatprep.subr.mxu0 0.0
        %5201 = vmatpush1.msra.mxu0 0.0
        %5202 = vmatprep.subr.mxu0 0.0
        %5203 = vmatpush1.msra.mxu0 0.0
        %5204 = vmatprep.subr.mxu0 0.0
        %5205 = vmatpush1.msra.mxu0 0.0
        %5206 = vmatprep.subr.mxu0 0.0
        %5207 = vmatpush1.msra.mxu0 0.0
        %5208 = vmatprep.subr.mxu0 0.0
        %5209 = vmatpush1.msra.mxu0 0.0
        %5210 = vmatprep.subr.mxu0 0.0
        %5211 = vmatpush1.msra.mxu0 0.0
        %5212 = vmatprep.subr.mxu0 0.0
        %5213 = vmatpush1.msra.mxu0 0.0
        %5214 = vmatprep.subr.mxu0 0.0
        %5215 = vmatpush1.msra.mxu0 0.0
        %5216 = vmatprep.subr.mxu0 0.0
        %5217 = vmatpush1.msra.mxu0 0.0
        %5218 = vmatprep.subr.mxu0 0.0
        %5219 = vmatpush1.msra.mxu0 0.0
        %5220 = vmatprep.subr.mxu0 0.0
        %5221 = vmatpush1.msra.mxu0 0.0
        %5222 = vmatprep.subr.mxu0 0.0
        %5223 = vmatpush1.msra.mxu0 %v4905
        %5224 = vmatprep.subr.mxu0 0.0
        %5225 = vmatpush1.msra.mxu0 %v4904
        %5226 = vmatprep.subr.mxu0 0.0
        %5227 = vmatpush1.msra.mxu0 %v4903
        %5228 = vmatprep.subr.mxu0 0.0
        %5229 = vmatpush1.msra.mxu0 %v4902
        %5230 = vmatprep.subr.mxu0 0.0
        %5231 = vmatpush2.msra.mxu0 0.0
        %5232 = vmatprep.subr.mxu0 0.0
        %5233 = vmatpush2.msra.mxu0 0.0
        %5234 = vmatprep.subr.mxu0 0.0
        %5235 = vmatpush2.msra.mxu0 0.0
        %5236 = vmatprep.subr.mxu0 0.0
        %5237 = vmatpush2.msra.mxu0 0.0
        %5238 = vmatprep.subr.mxu0 0.0
        %5239 = vmatpush2.msra.mxu0 0.0
        %5240 = vmatprep.subr.mxu0 0.0
        %5241 = vmatpush2.msra.mxu0 0.0
        %5242 = vmatprep.subr.mxu0 0.0
        %5243 = vmatpush2.msra.mxu0 0.0
        %5244 = vmatprep.subr.mxu0 0.0
        %5245 = vmatpush2.msra.mxu0 0.0
        %5246 = vmatprep.subr.mxu0 0.0
        %5247 = vmatpush2.msra.mxu0 0.0
        %5248 = vmatprep.subr.mxu0 0.0
        %5249 = vmatpush2.msra.mxu0 0.0
        %5250 = vmatprep.subr.mxu0 0.0
        %5251 = vmatpush2.msra.mxu0 0.0
        %5252 = vmatprep.subr.mxu0 0.0
        %5253 = vmatpush2.msra.mxu0 0.0
        %5254 = vmatprep.subr.mxu0 0.0
        %5255 = vmatpush2.msra.mxu0 0.0
        %5256 = vmatprep.subr.mxu0 0.0
        %5257 = vmatpush2.msra.mxu0 0.0
        %5258 = vmatprep.subr.mxu0 0.0
        %5259 = vmatpush2.msra.mxu0 0.0
        %5260 = vmatprep.subr.mxu0 0.0
        %5261 = vmatpush2.msra.mxu0 0.0
        %5262 = vmatprep.mubr.f32.mxu0 0.0
        %5263 = vmatmul.mubr.f32.gmra.mxu0 %v4913
        %v5264 = vpop.f32.mrf.mxu0
        %v5265 = vadd.f32 %v5040, %v5264
        %v5266 = vpop.f32.mrf.mxu0
        %5267 = vmatprep.mubr.f32.mxu0 0.0
        %5268 = vmatmul.mubr.f32.gmra.mxu0 %v4915
        %v5269 = vpop.f32.mrf.mxu0
        %v5270 = vadd.f32 %v5045, %v5269
        %v5271 = vpop.f32.mrf.mxu0
        %5272 = vmatprep.mubr.f32.mxu0 0.0
        %5273 = vmatmul.mubr.f32.gmra.mxu0 %v4917
        %v5274 = vpop.f32.mrf.mxu0
        %v5275 = vadd.f32 %v5050, %v5274
        %v5276 = vpop.f32.mrf.mxu0
        %5277 = vmatprep.mubr.f32.mxu0 0.0
        %5278 = vmatmul.mubr.f32.gmra.mxu0 %v4919
        %v5279 = vpop.f32.mrf.mxu0
        %v5280 = vadd.f32 %v5055, %v5279
        %v5281 = vpop.f32.mrf.mxu0
        %5282 = vmatprep.mubr.f32.mxu0 0.0
        %5283 = vmatmul.mubr.f32.gmra.mxu0 %v4921
        %v5284 = vpop.f32.mrf.mxu0
        %v5285 = vadd.f32 %v5060, %v5284
        %v5286 = vpop.f32.mrf.mxu0
        %5287 = vmatprep.mubr.f32.mxu0 0.0
        %5288 = vmatmul.mubr.f32.gmra.mxu0 %v4923
        %v5289 = vpop.f32.mrf.mxu0
        %v5290 = vadd.f32 %v5065, %v5289
        %v5291 = vpop.f32.mrf.mxu0
        %5292 = vmatprep.mubr.f32.mxu0 0.0
        %5293 = vmatmul.mubr.f32.gmra.mxu0 %v4925
        %v5294 = vpop.f32.mrf.mxu0
        %v5295 = vadd.f32 %v5070, %v5294
        %v5296 = vpop.f32.mrf.mxu0
        %5297 = vmatprep.mubr.f32.mxu0 0.0
        %5298 = vmatmul.mubr.f32.gmra.mxu0 %v4927
        %v5299 = vpop.f32.mrf.mxu0
        %v5300 = vadd.f32 %v5075, %v5299
        %v5301 = vpop.f32.mrf.mxu0
        %5302 = vmatprep.mubr.f32.mxu0 0.0
        %5303 = vmatmul.mubr.f32.gmra.mxu0 %v4929
        %v5304 = vpop.f32.mrf.mxu0
        %v5305 = vadd.f32 %v5080, %v5304
        %v5306 = vpop.f32.mrf.mxu0
        %5307 = vmatprep.mubr.f32.mxu0 0.0
        %5308 = vmatmul.mubr.f32.gmra.mxu0 %v4931
        %v5309 = vpop.f32.mrf.mxu0
        %v5310 = vadd.f32 %v5085, %v5309
        %v5311 = vpop.f32.mrf.mxu0
        %5312 = vmatprep.mubr.f32.mxu0 0.0
        %5313 = vmatmul.mubr.f32.gmra.mxu0 %v4933
        %v5314 = vpop.f32.mrf.mxu0
        %v5315 = vadd.f32 %v5090, %v5314
        %v5316 = vpop.f32.mrf.mxu0
        %5317 = vmatprep.mubr.f32.mxu0 0.0
        %5318 = vmatmul.mubr.f32.gmra.mxu0 %v4935
        %v5319 = vpop.f32.mrf.mxu0
        %v5320 = vadd.f32 %v5095, %v5319
        %v5321 = vpop.f32.mrf.mxu0
        %5322 = vmatprep.mubr.f32.mxu0 0.0
        %5323 = vmatmul.mubr.f32.gmra.mxu0 %v4937
        %v5324 = vpop.f32.mrf.mxu0
        %v5325 = vadd.f32 %v5100, %v5324
        %v5326 = vpop.f32.mrf.mxu0
        %5327 = vmatprep.mubr.f32.mxu0 0.0
        %5328 = vmatmul.mubr.f32.gmra.mxu0 %v4939
        %v5329 = vpop.f32.mrf.mxu0
        %v5330 = vadd.f32 %v5105, %v5329
        %v5331 = vpop.f32.mrf.mxu0
        %5332 = vmatprep.mubr.f32.mxu0 0.0
        %5333 = vmatmul.mubr.f32.gmra.mxu0 %v4941
        %v5334 = vpop.f32.mrf.mxu0
        %v5335 = vadd.f32 %v5110, %v5334
        %v5336 = vpop.f32.mrf.mxu0
        %5337 = vmatprep.mubr.f32.mxu0 0.0
        %5338 = vmatmul.mubr.f32.gmra.mxu0 %v4943
        %v5339 = vpop.f32.mrf.mxu0
        %v5340 = vadd.f32 %v5115, %v5339
        %v5341 = vpop.f32.mrf.mxu0
        %5342 = vmatprep.mubr.f32.mxu0 0.0
        %5343 = vmatmul.mubr.f32.gmra.mxu0 %v4945
        %v5344 = vpop.f32.mrf.mxu0
        %v5345 = vadd.f32 %v5120, %v5344
        %v5346 = vpop.f32.mrf.mxu0
        %5347 = vmatprep.mubr.f32.mxu0 0.0
        %5348 = vmatmul.mubr.f32.gmra.mxu0 %v4947
        %v5349 = vpop.f32.mrf.mxu0
        %v5350 = vadd.f32 %v5125, %v5349
        %v5351 = vpop.f32.mrf.mxu0
        %5352 = vmatprep.mubr.f32.mxu0 0.0
        %5353 = vmatmul.mubr.f32.gmra.mxu0 %v4949
        %v5354 = vpop.f32.mrf.mxu0
        %v5355 = vadd.f32 %v5130, %v5354
        %v5356 = vpop.f32.mrf.mxu0
        %5357 = vmatprep.mubr.f32.mxu0 0.0
        %5358 = vmatmul.mubr.f32.gmra.mxu0 %v4951
        %v5359 = vpop.f32.mrf.mxu0
        %v5360 = vadd.f32 %v5135, %v5359
        %v5361 = vpop.f32.mrf.mxu0
        %5362 = vmatprep.mubr.f32.mxu0 0.0
        %5363 = vmatmul.mubr.f32.gmra.mxu0 %v4953
        %v5364 = vpop.f32.mrf.mxu0
        %v5365 = vadd.f32 %v5140, %v5364
        %v5366 = vpop.f32.mrf.mxu0
        %5367 = vmatprep.mubr.f32.mxu0 0.0
        %5368 = vmatmul.mubr.f32.gmra.mxu0 %v4955
        %v5369 = vpop.f32.mrf.mxu0
        %v5370 = vadd.f32 %v5145, %v5369
        %v5371 = vpop.f32.mrf.mxu0
        %5372 = vmatprep.mubr.f32.mxu0 0.0
        %5373 = vmatmul.mubr.f32.gmra.mxu0 %v4957
        %v5374 = vpop.f32.mrf.mxu0
        %v5375 = vadd.f32 %v5150, %v5374
        %v5376 = vpop.f32.mrf.mxu0
        %5377 = vmatprep.mubr.f32.mxu0 0.0
        %5378 = vmatmul.mubr.f32.gmra.mxu0 %v4959
        %v5379 = vpop.f32.mrf.mxu0
        %v5380 = vadd.f32 %v5155, %v5379
        %v5381 = vpop.f32.mrf.mxu0
        %5382 = vmatprep.mubr.f32.mxu0 0.0
        %5383 = vmatmul.mubr.f32.gmra.mxu0 %v4961
        %v5384 = vpop.f32.mrf.mxu0
        %v5385 = vadd.f32 %v5160, %v5384
        %v5386 = vpop.f32.mrf.mxu0
        %5387 = vmatprep.mubr.f32.mxu0 0.0
        %5388 = vmatmul.mubr.f32.gmra.mxu0 %v4963
        %v5389 = vpop.f32.mrf.mxu0
        %v5390 = vadd.f32 %v5165, %v5389
        %v5391 = vpop.f32.mrf.mxu0
        %5392 = vmatprep.mubr.f32.mxu0 0.0
        %5393 = vmatmul.mubr.f32.gmra.mxu0 %v4965
        %v5394 = vpop.f32.mrf.mxu0
        %v5395 = vadd.f32 %v5170, %v5394
        %v5396 = vpop.f32.mrf.mxu0
        %5397 = vmatprep.mubr.f32.mxu0 0.0
        %5398 = vmatmul.mubr.f32.gmra.mxu0 %v4967
        %v5399 = vpop.f32.mrf.mxu0
        %v5400 = vadd.f32 %v5175, %v5399
        %v5401 = vpop.f32.mrf.mxu0
        %5402 = vmatprep.mubr.f32.mxu0 0.0
        %5403 = vmatmul.mubr.f32.gmra.mxu0 %v4969
        %v5404 = vpop.f32.mrf.mxu0
        %v5405 = vadd.f32 %v5180, %v5404
        %v5406 = vpop.f32.mrf.mxu0
        %5407 = vmatprep.mubr.f32.mxu0 0.0
        %5408 = vmatmul.mubr.f32.gmra.mxu0 %v4971
        %v5409 = vpop.f32.mrf.mxu0
        %v5410 = vadd.f32 %v5185, %v5409
        %v5411 = vpop.f32.mrf.mxu0
        %5412 = vmatprep.mubr.f32.mxu0 0.0
        %5413 = vmatmul.mubr.f32.gmra.mxu0 %v4969
        %v5414 = vpop.f32.mrf.mxu0
        %v5415 = vadd.f32 %v5190, %v5414
        %v5416 = vpop.f32.mrf.mxu0
        %5417 = vmatprep.mubr.f32.mxu0 0.0
        %5418 = vmatmul.mubr.f32.gmra.mxu0 %v4971
        %v5419 = vpop.f32.mrf.mxu0
        %v5420 = vadd.f32 %v5195, %v5419
        %v5421 = vpop.f32.mrf.mxu0
        %5422 = vdwg.mxu0
        %v5455 = vrot.slane %v5265, 7
        %v5456 = vrot.slane %v5270, 7
        %v5457 = vsel %vm395, %v5455, %v5456
        %v5458 = vrot.slane %v5275, 7
        %v5459 = vrot.slane %v5280, 7
        %v5460 = vsel %vm395, %v5458, %v5459
        %v5461 = vrot.slane %v5285, 7
        %v5462 = vrot.slane %v5290, 7
        %v5463 = vsel %vm395, %v5461, %v5462
        %v5464 = vrot.slane %v5295, 7
        %v5465 = vrot.slane %v5300, 7
        %v5466 = vsel %vm395, %v5464, %v5465
        %v5467 = vrot.slane %v5305, 7
        %v5468 = vrot.slane %v5310, 7
        %v5469 = vsel %vm395, %v5467, %v5468
        %v5470 = vrot.slane %v5315, 7
        %v5471 = vrot.slane %v5320, 7
        %v5472 = vsel %vm395, %v5470, %v5471
        %v5473 = vrot.slane %v5325, 7
        %v5474 = vrot.slane %v5330, 7
        %v5475 = vsel %vm395, %v5473, %v5474
        %v5476 = vrot.slane %v5335, 7
        %v5477 = vrot.slane %v5340, 7
        %v5478 = vsel %vm395, %v5476, %v5477
        %v5479 = vrot.slane %v5345, 7
        %v5480 = vrot.slane %v5350, 7
        %v5481 = vsel %vm395, %v5479, %v5480
        %v5482 = vrot.slane %v5355, 7
        %v5483 = vrot.slane %v5360, 7
        %v5484 = vsel %vm395, %v5482, %v5483
        %v5485 = vrot.slane %v5365, 7
        %v5486 = vrot.slane %v5370, 7
        %v5487 = vsel %vm395, %v5485, %v5486
        %v5488 = vrot.slane %v5375, 7
        %v5489 = vrot.slane %v5380, 7
        %v5490 = vsel %vm395, %v5488, %v5489
        %v5491 = vrot.slane %v5385, 7
        %v5492 = vrot.slane %v5390, 7
        %v5493 = vsel %vm395, %v5491, %v5492
        %v5494 = vrot.slane %v5395, 7
        %v5495 = vrot.slane %v5400, 7
        %v5496 = vsel %vm395, %v5494, %v5495
        %v5497 = vrot.slane %v5405, 7
        %v5498 = vrot.slane %v5410, 7
        %v5499 = vsel %vm395, %v5497, %v5498
        %v5500 = vrot.slane %v5415, 7
        %v5501 = vrot.slane %v5420, 7
        %v5502 = vsel %vm395, %v5500, %v5501
        %v5550 = vrot.slane %v5270, 6
        %v5551 = vrot.slane %v5280, 6
        %v5552 = vrot.slane %v5290, 6
        %v5553 = vrot.slane %v5300, 6
        %v5554 = vrot.slane %v5310, 6
        %v5555 = vrot.slane %v5320, 6
        %v5556 = vrot.slane %v5330, 6
        %v5557 = vrot.slane %v5340, 6
        %v5558 = vrot.slane %v5350, 6
        %v5559 = vrot.slane %v5360, 6
        %v5560 = vrot.slane %v5370, 6
        %v5561 = vrot.slane %v5380, 6
        %v5562 = vrot.slane %v5390, 6
        %v5563 = vrot.slane %v5400, 6
        %v5564 = vrot.slane %v5410, 6
        %v5565 = vrot.slane %v5420, 6
        %v5582 = vsel %vm395, %v5265, %v5455
        %v5583 = vsel %vm395, %v5275, %v5458
        %v5584 = vsel %vm395, %v5285, %v5461
        %v5585 = vsel %vm395, %v5295, %v5464
        %v5586 = vsel %vm395, %v5305, %v5467
        %v5587 = vsel %vm395, %v5315, %v5470
        %v5588 = vsel %vm395, %v5325, %v5473
        %v5589 = vsel %vm395, %v5335, %v5476
        %v5590 = vsel %vm395, %v5345, %v5479
        %v5591 = vsel %vm395, %v5355, %v5482
        %v5592 = vsel %vm395, %v5365, %v5485
        %v5593 = vsel %vm395, %v5375, %v5488
        %v5594 = vsel %vm395, %v5385, %v5491
        %v5595 = vsel %vm395, %v5395, %v5494
        %v5596 = vsel %vm395, %v5405, %v5497
        %v5597 = vsel %vm395, %v5415, %v5500
        %v5598 = vsel %vm395, %v5456, %v5550
        %v5599 = vsel %vm395, %v5459, %v5551
        %v5600 = vsel %vm395, %v5462, %v5552
        %v5601 = vsel %vm395, %v5465, %v5553
        %v5602 = vsel %vm395, %v5468, %v5554
        %v5603 = vsel %vm395, %v5471, %v5555
        %v5604 = vsel %vm395, %v5474, %v5556
        %v5605 = vsel %vm395, %v5477, %v5557
        %v5606 = vsel %vm395, %v5480, %v5558
        %v5607 = vsel %vm395, %v5483, %v5559
        %v5608 = vsel %vm395, %v5486, %v5560
        %v5609 = vsel %vm395, %v5489, %v5561
        %v5610 = vsel %vm395, %v5492, %v5562
        %v5611 = vsel %vm395, %v5495, %v5563
        %v5612 = vsel %vm395, %v5498, %v5564
        %v5613 = vsel %vm395, %v5501, %v5565
        %v5644 = vrot.slane %v5582, 1
        %v5645 = vrot.slane %v5457, 1
        %v5646 = vsel %vm585, %v5644, %v5645
        %v5647 = vrot.slane %v5598, 1
        %v5648 = vsel %vm585, %v5645, %v5647
        %v5649 = vrot.slane %v5583, 1
        %v5650 = vrot.slane %v5460, 1
        %v5651 = vsel %vm585, %v5649, %v5650
        %v5652 = vrot.slane %v5599, 1
        %v5653 = vsel %vm585, %v5650, %v5652
        %v5654 = vrot.slane %v5584, 1
        %v5655 = vrot.slane %v5463, 1
        %v5656 = vsel %vm585, %v5654, %v5655
        %v5657 = vrot.slane %v5600, 1
        %v5658 = vsel %vm585, %v5655, %v5657
        %v5659 = vrot.slane %v5585, 1
        %v5660 = vrot.slane %v5466, 1
        %v5661 = vsel %vm585, %v5659, %v5660
        %v5662 = vrot.slane %v5601, 1
        %v5663 = vsel %vm585, %v5660, %v5662
        %v5664 = vrot.slane %v5586, 1
        %v5665 = vrot.slane %v5469, 1
        %v5666 = vsel %vm585, %v5664, %v5665
        %v5667 = vrot.slane %v5602, 1
        %v5668 = vsel %vm585, %v5665, %v5667
        %v5669 = vrot.slane %v5587, 1
        %v5670 = vrot.slane %v5472, 1
        %v5671 = vsel %vm585, %v5669, %v5670
        %v5672 = vrot.slane %v5603, 1
        %v5673 = vsel %vm585, %v5670, %v5672
        %v5674 = vrot.slane %v5588, 1
        %v5675 = vrot.slane %v5475, 1
        %v5676 = vsel %vm585, %v5674, %v5675
        %v5677 = vrot.slane %v5604, 1
        %v5678 = vsel %vm585, %v5675, %v5677
        %v5679 = vrot.slane %v5589, 1
        %v5680 = vrot.slane %v5478, 1
        %v5681 = vsel %vm585, %v5679, %v5680
        %v5682 = vrot.slane %v5605, 1
        %v5683 = vsel %vm585, %v5680, %v5682
        %v5684 = vrot.slane %v5590, 1
        %v5685 = vrot.slane %v5481, 1
        %v5686 = vsel %vm585, %v5684, %v5685
        %v5687 = vrot.slane %v5606, 1
        %v5688 = vsel %vm585, %v5685, %v5687
        %v5689 = vrot.slane %v5591, 1
        %v5690 = vrot.slane %v5484, 1
        %v5691 = vsel %vm585, %v5689, %v5690
        %v5692 = vrot.slane %v5607, 1
        %v5693 = vsel %vm585, %v5690, %v5692
        %v5694 = vrot.slane %v5592, 1
        %v5695 = vrot.slane %v5487, 1
        %v5696 = vsel %vm585, %v5694, %v5695
        %v5697 = vrot.slane %v5608, 1
        %v5698 = vsel %vm585, %v5695, %v5697
        %v5699 = vrot.slane %v5593, 1
        %v5700 = vrot.slane %v5490, 1
        %v5701 = vsel %vm585, %v5699, %v5700
        %v5702 = vrot.slane %v5609, 1
        %v5703 = vsel %vm585, %v5700, %v5702
        %v5704 = vrot.slane %v5594, 1
        %v5705 = vrot.slane %v5493, 1
        %v5706 = vsel %vm585, %v5704, %v5705
        %v5707 = vrot.slane %v5610, 1
        %v5708 = vsel %vm585, %v5705, %v5707
        %v5709 = vrot.slane %v5595, 1
        %v5710 = vrot.slane %v5496, 1
        %v5711 = vsel %vm585, %v5709, %v5710
        %v5712 = vrot.slane %v5611, 1
        %v5713 = vsel %vm585, %v5710, %v5712
        %v5714 = vrot.slane %v5596, 1
        %v5715 = vrot.slane %v5499, 1
        %v5716 = vsel %vm585, %v5714, %v5715
        %v5717 = vrot.slane %v5612, 1
        %v5718 = vsel %vm585, %v5715, %v5717
        %v5719 = vrot.slane %v5582, 2
        %v5720 = vrot.slane %v5457, 2
        %v5721 = vsel %vm661, %v5719, %v5720
        %v5722 = vrot.slane %v5598, 2
        %v5723 = vsel %vm661, %v5720, %v5722
        %v5724 = vrot.slane %v5583, 2
        %v5725 = vrot.slane %v5460, 2
        %v5726 = vsel %vm661, %v5724, %v5725
        %v5727 = vrot.slane %v5599, 2
        %v5728 = vsel %vm661, %v5725, %v5727
        %v5729 = vrot.slane %v5584, 2
        %v5730 = vrot.slane %v5463, 2
        %v5731 = vsel %vm661, %v5729, %v5730
        %v5732 = vrot.slane %v5600, 2
        %v5733 = vsel %vm661, %v5730, %v5732
        %v5734 = vrot.slane %v5585, 2
        %v5735 = vrot.slane %v5466, 2
        %v5736 = vsel %vm661, %v5734, %v5735
        %v5737 = vrot.slane %v5601, 2
        %v5738 = vsel %vm661, %v5735, %v5737
        %v5739 = vrot.slane %v5586, 2
        %v5740 = vrot.slane %v5469, 2
        %v5741 = vsel %vm661, %v5739, %v5740
        %v5742 = vrot.slane %v5602, 2
        %v5743 = vsel %vm661, %v5740, %v5742
        %v5744 = vrot.slane %v5587, 2
        %v5745 = vrot.slane %v5472, 2
        %v5746 = vsel %vm661, %v5744, %v5745
        %v5747 = vrot.slane %v5603, 2
        %v5748 = vsel %vm661, %v5745, %v5747
        %v5749 = vrot.slane %v5588, 2
        %v5750 = vrot.slane %v5475, 2
        %v5751 = vsel %vm661, %v5749, %v5750
        %v5752 = vrot.slane %v5604, 2
        %v5753 = vsel %vm661, %v5750, %v5752
        %v5754 = vrot.slane %v5589, 2
        %v5755 = vrot.slane %v5478, 2
        %v5756 = vsel %vm661, %v5754, %v5755
        %v5757 = vrot.slane %v5605, 2
        %v5758 = vsel %vm661, %v5755, %v5757
        %v5759 = vrot.slane %v5590, 2
        %v5760 = vrot.slane %v5481, 2
        %v5761 = vsel %vm661, %v5759, %v5760
        %v5762 = vrot.slane %v5606, 2
        %v5763 = vsel %vm661, %v5760, %v5762
        %v5764 = vrot.slane %v5591, 2
        %v5765 = vrot.slane %v5484, 2
        %v5766 = vsel %vm661, %v5764, %v5765
        %v5767 = vrot.slane %v5607, 2
        %v5768 = vsel %vm661, %v5765, %v5767
        %v5769 = vrot.slane %v5592, 2
        %v5770 = vrot.slane %v5487, 2
        %v5771 = vsel %vm661, %v5769, %v5770
        %v5772 = vrot.slane %v5608, 2
        %v5773 = vsel %vm661, %v5770, %v5772
        %v5774 = vrot.slane %v5593, 2
        %v5775 = vrot.slane %v5490, 2
        %v5776 = vsel %vm661, %v5774, %v5775
        %v5777 = vrot.slane %v5609, 2
        %v5778 = vsel %vm661, %v5775, %v5777
        %v5779 = vrot.slane %v5594, 2
        %v5780 = vrot.slane %v5493, 2
        %v5781 = vsel %vm661, %v5779, %v5780
        %v5782 = vrot.slane %v5610, 2
        %v5783 = vsel %vm661, %v5780, %v5782
        %v5784 = vrot.slane %v5595, 2
        %v5785 = vrot.slane %v5496, 2
        %v5786 = vsel %vm661, %v5784, %v5785
        %v5787 = vrot.slane %v5611, 2
        %v5788 = vsel %vm661, %v5785, %v5787
        %v5789 = vrot.slane %v5596, 2
        %v5790 = vrot.slane %v5499, 2
        %v5791 = vsel %vm661, %v5789, %v5790
        %v5792 = vrot.slane %v5612, 2
        %v5793 = vsel %vm661, %v5790, %v5792
        %v5796 = vrot.slane %v5597, 1
        %v5797 = vrot.slane %v5502, 1
        %v5798 = vsel %vm585, %v5796, %v5797
        %v5799 = vrot.slane %v5613, 1
        %v5800 = vsel %vm585, %v5797, %v5799
        %v5801 = vrot.slane %v5597, 2
        %v5802 = vrot.slane %v5502, 2
        %v5803 = vsel %vm661, %v5801, %v5802
        %v5804 = vrot.slane %v5613, 2
        %v5805 = vsel %vm661, %v5802, %v5804
        %5806 = vrot.lane.b32.xlu0 %v5646, 16
        %v5807 = vpop.permute.xlu0 %5806
        %5808 = vrot.lane.b32.xlu0 %v5648, 16
        %v5809 = vpop.permute.xlu0 %5808
        %5810 = vrot.lane.b32.xlu0 %v5651, 16
        %v5811 = vpop.permute.xlu0 %5810
        %5812 = vrot.lane.b32.xlu0 %v5653, 16
        %v5813 = vpop.permute.xlu0 %5812
        %5814 = vrot.lane.b32.xlu0 %v5656, 16
        %v5815 = vpop.permute.xlu0 %5814
        %5816 = vrot.lane.b32.xlu0 %v5658, 16
        %v5817 = vpop.permute.xlu0 %5816
        %5818 = vrot.lane.b32.xlu0 %v5661, 16
        %v5819 = vpop.permute.xlu0 %5818
        %5820 = vrot.lane.b32.xlu0 %v5663, 16
        %v5821 = vpop.permute.xlu0 %5820
        %5822 = vrot.lane.b32.xlu0 %v5666, 16
        %v5823 = vpop.permute.xlu0 %5822
        %5824 = vrot.lane.b32.xlu0 %v5668, 16
        %v5825 = vpop.permute.xlu0 %5824
        %5826 = vrot.lane.b32.xlu0 %v5671, 16
        %v5827 = vpop.permute.xlu0 %5826
        %5828 = vrot.lane.b32.xlu0 %v5673, 16
        %v5829 = vpop.permute.xlu0 %5828
        %5830 = vrot.lane.b32.xlu0 %v5676, 16
        %v5831 = vpop.permute.xlu0 %5830
        %5832 = vrot.lane.b32.xlu0 %v5678, 16
        %v5833 = vpop.permute.xlu0 %5832
        %5834 = vrot.lane.b32.xlu0 %v5681, 16
        %v5835 = vpop.permute.xlu0 %5834
        %5836 = vrot.lane.b32.xlu0 %v5683, 16
        %v5837 = vpop.permute.xlu0 %5836
        %5838 = vrot.lane.b32.xlu0 %v5686, 16
        %v5839 = vpop.permute.xlu0 %5838
        %5840 = vrot.lane.b32.xlu0 %v5688, 16
        %v5841 = vpop.permute.xlu0 %5840
        %5842 = vrot.lane.b32.xlu0 %v5691, 16
        %v5843 = vpop.permute.xlu0 %5842
        %5844 = vrot.lane.b32.xlu0 %v5693, 16
        %v5845 = vpop.permute.xlu0 %5844
        %5846 = vrot.lane.b32.xlu0 %v5696, 16
        %v5847 = vpop.permute.xlu0 %5846
        %5848 = vrot.lane.b32.xlu0 %v5698, 16
        %v5849 = vpop.permute.xlu0 %5848
        %5850 = vrot.lane.b32.xlu0 %v5701, 16
        %v5851 = vpop.permute.xlu0 %5850
        %5852 = vrot.lane.b32.xlu0 %v5703, 16
        %v5853 = vpop.permute.xlu0 %5852
        %5854 = vrot.lane.b32.xlu0 %v5706, 16
        %v5855 = vpop.permute.xlu0 %5854
        %5856 = vrot.lane.b32.xlu0 %v5708, 16
        %v5857 = vpop.permute.xlu0 %5856
        %5858 = vrot.lane.b32.xlu0 %v5711, 16
        %v5859 = vpop.permute.xlu0 %5858
        %5860 = vrot.lane.b32.xlu0 %v5713, 16
        %v5861 = vpop.permute.xlu0 %5860
        %5862 = vrot.lane.b32.xlu0 %v5716, 16
        %v5863 = vpop.permute.xlu0 %5862
        %5864 = vrot.lane.b32.xlu0 %v5718, 16
        %v5865 = vpop.permute.xlu0 %5864
        %5896 = vrot.lane.b32.xlu0 %v5721, 32
        %v5897 = vpop.permute.xlu0 %5896
        %5898 = vrot.lane.b32.xlu0 %v5723, 32
        %v5899 = vpop.permute.xlu0 %5898
        %5900 = vrot.lane.b32.xlu0 %v5726, 32
        %v5901 = vpop.permute.xlu0 %5900
        %5902 = vrot.lane.b32.xlu0 %v5728, 32
        %v5903 = vpop.permute.xlu0 %5902
        %5904 = vrot.lane.b32.xlu0 %v5731, 32
        %v5905 = vpop.permute.xlu0 %5904
        %5906 = vrot.lane.b32.xlu0 %v5733, 32
        %v5907 = vpop.permute.xlu0 %5906
        %5908 = vrot.lane.b32.xlu0 %v5736, 32
        %v5909 = vpop.permute.xlu0 %5908
        %5910 = vrot.lane.b32.xlu0 %v5738, 32
        %v5911 = vpop.permute.xlu0 %5910
        %5912 = vrot.lane.b32.xlu0 %v5741, 32
        %v5913 = vpop.permute.xlu0 %5912
        %5914 = vrot.lane.b32.xlu0 %v5743, 32
        %v5915 = vpop.permute.xlu0 %5914
        %5916 = vrot.lane.b32.xlu0 %v5746, 32
        %v5917 = vpop.permute.xlu0 %5916
        %5918 = vrot.lane.b32.xlu0 %v5748, 32
        %v5919 = vpop.permute.xlu0 %5918
        %5920 = vrot.lane.b32.xlu0 %v5751, 32
        %v5921 = vpop.permute.xlu0 %5920
        %5922 = vrot.lane.b32.xlu0 %v5753, 32
        %v5923 = vpop.permute.xlu0 %5922
        %5924 = vrot.lane.b32.xlu0 %v5756, 32
        %v5925 = vpop.permute.xlu0 %5924
        %5926 = vrot.lane.b32.xlu0 %v5758, 32
        %v5927 = vpop.permute.xlu0 %5926
        %5928 = vrot.lane.b32.xlu0 %v5761, 32
        %v5929 = vpop.permute.xlu0 %5928
        %5930 = vrot.lane.b32.xlu0 %v5763, 32
        %v5931 = vpop.permute.xlu0 %5930
        %5932 = vrot.lane.b32.xlu0 %v5766, 32
        %v5933 = vpop.permute.xlu0 %5932
        %5934 = vrot.lane.b32.xlu0 %v5768, 32
        %v5935 = vpop.permute.xlu0 %5934
        %5936 = vrot.lane.b32.xlu0 %v5771, 32
        %v5937 = vpop.permute.xlu0 %5936
        %5938 = vrot.lane.b32.xlu0 %v5773, 32
        %v5939 = vpop.permute.xlu0 %5938
        %5940 = vrot.lane.b32.xlu0 %v5776, 32
        %v5941 = vpop.permute.xlu0 %5940
        %5942 = vrot.lane.b32.xlu0 %v5778, 32
        %v5943 = vpop.permute.xlu0 %5942
        %5944 = vrot.lane.b32.xlu0 %v5781, 32
        %v5945 = vpop.permute.xlu0 %5944
        %5946 = vrot.lane.b32.xlu0 %v5783, 32
        %v5947 = vpop.permute.xlu0 %5946
        %5948 = vrot.lane.b32.xlu0 %v5786, 32
        %v5949 = vpop.permute.xlu0 %5948
        %5950 = vrot.lane.b32.xlu0 %v5788, 32
        %v5951 = vpop.permute.xlu0 %5950
        %5952 = vrot.lane.b32.xlu0 %v5791, 32
        %v5953 = vpop.permute.xlu0 %5952
        %5954 = vrot.lane.b32.xlu0 %v5793, 32
        %v5955 = vpop.permute.xlu0 %5954
        %5986 = vrot.lane.b32.xlu0 %v5582, 48
        %v5987 = vpop.permute.xlu0 %5986
        %5988 = vrot.lane.b32.xlu0 %v5457, 48
        %v5989 = vpop.permute.xlu0 %5988
        %5990 = vrot.lane.b32.xlu0 %v5583, 48
        %v5991 = vpop.permute.xlu0 %5990
        %5992 = vrot.lane.b32.xlu0 %v5460, 48
        %v5993 = vpop.permute.xlu0 %5992
        %5994 = vrot.lane.b32.xlu0 %v5584, 48
        %v5995 = vpop.permute.xlu0 %5994
        %5996 = vrot.lane.b32.xlu0 %v5463, 48
        %v5997 = vpop.permute.xlu0 %5996
        %5998 = vrot.lane.b32.xlu0 %v5585, 48
        %v5999 = vpop.permute.xlu0 %5998
        %6000 = vrot.lane.b32.xlu0 %v5466, 48
        %v6001 = vpop.permute.xlu0 %6000
        %6002 = vrot.lane.b32.xlu0 %v5586, 48
        %v6003 = vpop.permute.xlu0 %6002
        %6004 = vrot.lane.b32.xlu0 %v5469, 48
        %v6005 = vpop.permute.xlu0 %6004
        %6006 = vrot.lane.b32.xlu0 %v5587, 48
        %v6007 = vpop.permute.xlu0 %6006
        %6008 = vrot.lane.b32.xlu0 %v5472, 48
        %v6009 = vpop.permute.xlu0 %6008
        %6010 = vrot.lane.b32.xlu0 %v5588, 48
        %v6011 = vpop.permute.xlu0 %6010
        %6012 = vrot.lane.b32.xlu0 %v5475, 48
        %v6013 = vpop.permute.xlu0 %6012
        %6014 = vrot.lane.b32.xlu0 %v5589, 48
        %v6015 = vpop.permute.xlu0 %6014
        %6016 = vrot.lane.b32.xlu0 %v5478, 48
        %v6017 = vpop.permute.xlu0 %6016
        %6018 = vrot.lane.b32.xlu0 %v5590, 48
        %v6019 = vpop.permute.xlu0 %6018
        %6020 = vrot.lane.b32.xlu0 %v5481, 48
        %v6021 = vpop.permute.xlu0 %6020
        %6022 = vrot.lane.b32.xlu0 %v5591, 48
        %v6023 = vpop.permute.xlu0 %6022
        %6024 = vrot.lane.b32.xlu0 %v5484, 48
        %v6025 = vpop.permute.xlu0 %6024
        %6026 = vrot.lane.b32.xlu0 %v5592, 48
        %v6027 = vpop.permute.xlu0 %6026
        %6028 = vrot.lane.b32.xlu0 %v5487, 48
        %v6029 = vpop.permute.xlu0 %6028
        %6030 = vrot.lane.b32.xlu0 %v5593, 48
        %v6031 = vpop.permute.xlu0 %6030
        %6032 = vrot.lane.b32.xlu0 %v5490, 48
        %v6033 = vpop.permute.xlu0 %6032
        %6034 = vrot.lane.b32.xlu0 %v5594, 48
        %v6035 = vpop.permute.xlu0 %6034
        %6036 = vrot.lane.b32.xlu0 %v5493, 48
        %v6037 = vpop.permute.xlu0 %6036
        %6038 = vrot.lane.b32.xlu0 %v5595, 48
        %v6039 = vpop.permute.xlu0 %6038
        %6040 = vrot.lane.b32.xlu0 %v5496, 48
        %v6041 = vpop.permute.xlu0 %6040
        %6042 = vrot.lane.b32.xlu0 %v5596, 48
        %v6043 = vpop.permute.xlu0 %6042
        %6044 = vrot.lane.b32.xlu0 %v5499, 48
        %v6045 = vpop.permute.xlu0 %6044
        %6046 = vrot.lane.b32.xlu0 %v5597, 48
        %v6047 = vpop.permute.xlu0 %6046
        %6048 = vrot.lane.b32.xlu0 %v5502, 48
        %v6049 = vpop.permute.xlu0 %6048
        %6082 = vrot.lane.b32.xlu0 %v5646, 64
        %v6083 = vpop.permute.xlu0 %6082
        %6084 = vrot.lane.b32.xlu0 %v5648, 64
        %v6085 = vpop.permute.xlu0 %6084
        %6086 = vrot.lane.b32.xlu0 %v5651, 64
        %v6087 = vpop.permute.xlu0 %6086
        %6088 = vrot.lane.b32.xlu0 %v5653, 64
        %v6089 = vpop.permute.xlu0 %6088
        %6090 = vrot.lane.b32.xlu0 %v5656, 64
        %v6091 = vpop.permute.xlu0 %6090
        %6092 = vrot.lane.b32.xlu0 %v5658, 64
        %v6093 = vpop.permute.xlu0 %6092
        %6094 = vrot.lane.b32.xlu0 %v5661, 64
        %v6095 = vpop.permute.xlu0 %6094
        %6096 = vrot.lane.b32.xlu0 %v5663, 64
        %v6097 = vpop.permute.xlu0 %6096
        %6098 = vrot.lane.b32.xlu0 %v5666, 64
        %v6099 = vpop.permute.xlu0 %6098
        %6100 = vrot.lane.b32.xlu0 %v5668, 64
        %v6101 = vpop.permute.xlu0 %6100
        %6102 = vrot.lane.b32.xlu0 %v5671, 64
        %v6103 = vpop.permute.xlu0 %6102
        %6104 = vrot.lane.b32.xlu0 %v5673, 64
        %v6105 = vpop.permute.xlu0 %6104
        %6106 = vrot.lane.b32.xlu0 %v5676, 64
        %v6107 = vpop.permute.xlu0 %6106
        %6108 = vrot.lane.b32.xlu0 %v5678, 64
        %v6109 = vpop.permute.xlu0 %6108
        %6110 = vrot.lane.b32.xlu0 %v5681, 64
        %v6111 = vpop.permute.xlu0 %6110
        %6112 = vrot.lane.b32.xlu0 %v5683, 64
        %v6113 = vpop.permute.xlu0 %6112
        %6114 = vrot.lane.b32.xlu0 %v5686, 64
        %v6115 = vpop.permute.xlu0 %6114
        %6116 = vrot.lane.b32.xlu0 %v5688, 64
        %v6117 = vpop.permute.xlu0 %6116
        %6118 = vrot.lane.b32.xlu0 %v5691, 64
        %v6119 = vpop.permute.xlu0 %6118
        %6120 = vrot.lane.b32.xlu0 %v5693, 64
        %v6121 = vpop.permute.xlu0 %6120
        %6122 = vrot.lane.b32.xlu0 %v5696, 64
        %v6123 = vpop.permute.xlu0 %6122
        %6124 = vrot.lane.b32.xlu0 %v5698, 64
        %v6125 = vpop.permute.xlu0 %6124
        %6126 = vrot.lane.b32.xlu0 %v5701, 64
        %v6127 = vpop.permute.xlu0 %6126
        %6128 = vrot.lane.b32.xlu0 %v5703, 64
        %v6129 = vpop.permute.xlu0 %6128
        %6130 = vrot.lane.b32.xlu0 %v5706, 64
        %v6131 = vpop.permute.xlu0 %6130
        %6132 = vrot.lane.b32.xlu0 %v5708, 64
        %v6133 = vpop.permute.xlu0 %6132
        %6134 = vrot.lane.b32.xlu0 %v5711, 64
        %v6135 = vpop.permute.xlu0 %6134
        %6136 = vrot.lane.b32.xlu0 %v5713, 64
        %v6137 = vpop.permute.xlu0 %6136
        %6138 = vrot.lane.b32.xlu0 %v5716, 64
        %v6139 = vpop.permute.xlu0 %6138
        %6140 = vrot.lane.b32.xlu0 %v5718, 64
        %v6141 = vpop.permute.xlu0 %6140
        %6142 = vrot.lane.b32.xlu0 %v5798, 64
        %v6143 = vpop.permute.xlu0 %6142
        %6144 = vrot.lane.b32.xlu0 %v5800, 64
        %v6145 = vpop.permute.xlu0 %6144
        %6178 = vrot.lane.b32.xlu0 %v5721, 80
        %v6179 = vpop.permute.xlu0 %6178
        %6180 = vrot.lane.b32.xlu0 %v5723, 80
        %v6181 = vpop.permute.xlu0 %6180
        %6182 = vrot.lane.b32.xlu0 %v5726, 80
        %v6183 = vpop.permute.xlu0 %6182
        %6184 = vrot.lane.b32.xlu0 %v5728, 80
        %v6185 = vpop.permute.xlu0 %6184
        %6186 = vrot.lane.b32.xlu0 %v5731, 80
        %v6187 = vpop.permute.xlu0 %6186
        %6188 = vrot.lane.b32.xlu0 %v5733, 80
        %v6189 = vpop.permute.xlu0 %6188
        %6190 = vrot.lane.b32.xlu0 %v5736, 80
        %v6191 = vpop.permute.xlu0 %6190
        %6192 = vrot.lane.b32.xlu0 %v5738, 80
        %v6193 = vpop.permute.xlu0 %6192
        %6194 = vrot.lane.b32.xlu0 %v5741, 80
        %v6195 = vpop.permute.xlu0 %6194
        %6196 = vrot.lane.b32.xlu0 %v5743, 80
        %v6197 = vpop.permute.xlu0 %6196
        %6198 = vrot.lane.b32.xlu0 %v5746, 80
        %v6199 = vpop.permute.xlu0 %6198
        %6200 = vrot.lane.b32.xlu0 %v5748, 80
        %v6201 = vpop.permute.xlu0 %6200
        %6202 = vrot.lane.b32.xlu0 %v5751, 80
        %v6203 = vpop.permute.xlu0 %6202
        %6204 = vrot.lane.b32.xlu0 %v5753, 80
        %v6205 = vpop.permute.xlu0 %6204
        %6206 = vrot.lane.b32.xlu0 %v5756, 80
        %v6207 = vpop.permute.xlu0 %6206
        %6208 = vrot.lane.b32.xlu0 %v5758, 80
        %v6209 = vpop.permute.xlu0 %6208
        %6210 = vrot.lane.b32.xlu0 %v5761, 80
        %v6211 = vpop.permute.xlu0 %6210
        %6212 = vrot.lane.b32.xlu0 %v5763, 80
        %v6213 = vpop.permute.xlu0 %6212
        %6214 = vrot.lane.b32.xlu0 %v5766, 80
        %v6215 = vpop.permute.xlu0 %6214
        %6216 = vrot.lane.b32.xlu0 %v5768, 80
        %v6217 = vpop.permute.xlu0 %6216
        %6218 = vrot.lane.b32.xlu0 %v5771, 80
        %v6219 = vpop.permute.xlu0 %6218
        %6220 = vrot.lane.b32.xlu0 %v5773, 80
        %v6221 = vpop.permute.xlu0 %6220
        %6222 = vrot.lane.b32.xlu0 %v5776, 80
        %v6223 = vpop.permute.xlu0 %6222
        %6224 = vrot.lane.b32.xlu0 %v5778, 80
        %v6225 = vpop.permute.xlu0 %6224
        %6226 = vrot.lane.b32.xlu0 %v5781, 80
        %v6227 = vpop.permute.xlu0 %6226
        %6228 = vrot.lane.b32.xlu0 %v5783, 80
        %v6229 = vpop.permute.xlu0 %6228
        %6230 = vrot.lane.b32.xlu0 %v5786, 80
        %v6231 = vpop.permute.xlu0 %6230
        %6232 = vrot.lane.b32.xlu0 %v5788, 80
        %v6233 = vpop.permute.xlu0 %6232
        %6234 = vrot.lane.b32.xlu0 %v5791, 80
        %v6235 = vpop.permute.xlu0 %6234
        %6236 = vrot.lane.b32.xlu0 %v5793, 80
        %v6237 = vpop.permute.xlu0 %6236
        %6238 = vrot.lane.b32.xlu0 %v5803, 80
        %v6239 = vpop.permute.xlu0 %6238
        %6240 = vrot.lane.b32.xlu0 %v5805, 80
        %v6241 = vpop.permute.xlu0 %6240
        %6274 = vrot.lane.b32.xlu0 %v5583, 96
        %v6275 = vpop.permute.xlu0 %6274
        %6276 = vrot.lane.b32.xlu0 %v5460, 96
        %v6277 = vpop.permute.xlu0 %6276
        %6278 = vrot.lane.b32.xlu0 %v5584, 96
        %v6279 = vpop.permute.xlu0 %6278
        %6280 = vrot.lane.b32.xlu0 %v5463, 96
        %v6281 = vpop.permute.xlu0 %6280
        %6282 = vrot.lane.b32.xlu0 %v5585, 96
        %v6283 = vpop.permute.xlu0 %6282
        %6284 = vrot.lane.b32.xlu0 %v5466, 96
        %v6285 = vpop.permute.xlu0 %6284
        %6286 = vrot.lane.b32.xlu0 %v5586, 96
        %v6287 = vpop.permute.xlu0 %6286
        %6288 = vrot.lane.b32.xlu0 %v5469, 96
        %v6289 = vpop.permute.xlu0 %6288
        %6290 = vrot.lane.b32.xlu0 %v5587, 96
        %v6291 = vpop.permute.xlu0 %6290
        %6292 = vrot.lane.b32.xlu0 %v5472, 96
        %v6293 = vpop.permute.xlu0 %6292
        %6294 = vrot.lane.b32.xlu0 %v5588, 96
        %v6295 = vpop.permute.xlu0 %6294
        %6296 = vrot.lane.b32.xlu0 %v5475, 96
        %v6297 = vpop.permute.xlu0 %6296
        %6298 = vrot.lane.b32.xlu0 %v5589, 96
        %v6299 = vpop.permute.xlu0 %6298
        %6300 = vrot.lane.b32.xlu0 %v5478, 96
        %v6301 = vpop.permute.xlu0 %6300
        %6302 = vrot.lane.b32.xlu0 %v5590, 96
        %v6303 = vpop.permute.xlu0 %6302
        %6304 = vrot.lane.b32.xlu0 %v5481, 96
        %v6305 = vpop.permute.xlu0 %6304
        %6306 = vrot.lane.b32.xlu0 %v5591, 96
        %v6307 = vpop.permute.xlu0 %6306
        %6308 = vrot.lane.b32.xlu0 %v5484, 96
        %v6309 = vpop.permute.xlu0 %6308
        %6310 = vrot.lane.b32.xlu0 %v5592, 96
        %v6311 = vpop.permute.xlu0 %6310
        %6312 = vrot.lane.b32.xlu0 %v5487, 96
        %v6313 = vpop.permute.xlu0 %6312
        %6314 = vrot.lane.b32.xlu0 %v5593, 96
        %v6315 = vpop.permute.xlu0 %6314
        %6316 = vrot.lane.b32.xlu0 %v5490, 96
        %v6317 = vpop.permute.xlu0 %6316
        %6318 = vrot.lane.b32.xlu0 %v5594, 96
        %v6319 = vpop.permute.xlu0 %6318
        %6320 = vrot.lane.b32.xlu0 %v5493, 96
        %v6321 = vpop.permute.xlu0 %6320
        %6322 = vrot.lane.b32.xlu0 %v5595, 96
        %v6323 = vpop.permute.xlu0 %6322
        %6324 = vrot.lane.b32.xlu0 %v5496, 96
        %v6325 = vpop.permute.xlu0 %6324
        %6326 = vrot.lane.b32.xlu0 %v5596, 96
        %v6327 = vpop.permute.xlu0 %6326
        %6328 = vrot.lane.b32.xlu0 %v5499, 96
        %v6329 = vpop.permute.xlu0 %6328
        %6330 = vrot.lane.b32.xlu0 %v5597, 96
        %v6331 = vpop.permute.xlu0 %6330
        %6332 = vrot.lane.b32.xlu0 %v5502, 96
        %v6333 = vpop.permute.xlu0 %6332
        %6364 = vrot.lane.b32.xlu0 %v5651, 112
        %v6365 = vpop.permute.xlu0 %6364
        %6366 = vrot.lane.b32.xlu0 %v5653, 112
        %v6367 = vpop.permute.xlu0 %6366
        %6368 = vrot.lane.b32.xlu0 %v5656, 112
        %v6369 = vpop.permute.xlu0 %6368
        %6370 = vrot.lane.b32.xlu0 %v5658, 112
        %v6371 = vpop.permute.xlu0 %6370
        %6372 = vrot.lane.b32.xlu0 %v5661, 112
        %v6373 = vpop.permute.xlu0 %6372
        %6374 = vrot.lane.b32.xlu0 %v5663, 112
        %v6375 = vpop.permute.xlu0 %6374
        %6376 = vrot.lane.b32.xlu0 %v5666, 112
        %v6377 = vpop.permute.xlu0 %6376
        %6378 = vrot.lane.b32.xlu0 %v5668, 112
        %v6379 = vpop.permute.xlu0 %6378
        %6380 = vrot.lane.b32.xlu0 %v5671, 112
        %v6381 = vpop.permute.xlu0 %6380
        %6382 = vrot.lane.b32.xlu0 %v5673, 112
        %v6383 = vpop.permute.xlu0 %6382
        %6384 = vrot.lane.b32.xlu0 %v5676, 112
        %v6385 = vpop.permute.xlu0 %6384
        %6386 = vrot.lane.b32.xlu0 %v5678, 112
        %v6387 = vpop.permute.xlu0 %6386
        %6388 = vrot.lane.b32.xlu0 %v5681, 112
        %v6389 = vpop.permute.xlu0 %6388
        %6390 = vrot.lane.b32.xlu0 %v5683, 112
        %v6391 = vpop.permute.xlu0 %6390
        %6392 = vrot.lane.b32.xlu0 %v5686, 112
        %v6393 = vpop.permute.xlu0 %6392
        %6394 = vrot.lane.b32.xlu0 %v5688, 112
        %v6395 = vpop.permute.xlu0 %6394
        %6396 = vrot.lane.b32.xlu0 %v5691, 112
        %v6397 = vpop.permute.xlu0 %6396
        %6398 = vrot.lane.b32.xlu0 %v5693, 112
        %v6399 = vpop.permute.xlu0 %6398
        %6400 = vrot.lane.b32.xlu0 %v5696, 112
        %v6401 = vpop.permute.xlu0 %6400
        %6402 = vrot.lane.b32.xlu0 %v5698, 112
        %v6403 = vpop.permute.xlu0 %6402
        %6404 = vrot.lane.b32.xlu0 %v5701, 112
        %v6405 = vpop.permute.xlu0 %6404
        %6406 = vrot.lane.b32.xlu0 %v5703, 112
        %v6407 = vpop.permute.xlu0 %6406
        %6408 = vrot.lane.b32.xlu0 %v5706, 112
        %v6409 = vpop.permute.xlu0 %6408
        %6410 = vrot.lane.b32.xlu0 %v5708, 112
        %v6411 = vpop.permute.xlu0 %6410
        %6412 = vrot.lane.b32.xlu0 %v5711, 112
        %v6413 = vpop.permute.xlu0 %6412
        %6414 = vrot.lane.b32.xlu0 %v5713, 112
        %v6415 = vpop.permute.xlu0 %6414
        %6416 = vrot.lane.b32.xlu0 %v5716, 112
        %v6417 = vpop.permute.xlu0 %6416
        %6418 = vrot.lane.b32.xlu0 %v5718, 112
        %v6419 = vpop.permute.xlu0 %6418
        %6420 = vrot.lane.b32.xlu0 %v5798, 112
        %v6421 = vpop.permute.xlu0 %6420
        %6422 = vrot.lane.b32.xlu0 %v5800, 112
        %v6423 = vpop.permute.xlu0 %6422
        %v6454 = vsel %vm1582, %v5582, %v5807
        %v6455 = vsel %vm1582, %v5457, %v5809
        %v6456 = vsel %vm1582, %v5583, %v5811
        %v6457 = vsel %vm1582, %v5460, %v5813
        %v6458 = vsel %vm1582, %v5584, %v5815
        %v6459 = vsel %vm1582, %v5463, %v5817
        %v6460 = vsel %vm1582, %v5585, %v5819
        %v6461 = vsel %vm1582, %v5466, %v5821
        %v6462 = vsel %vm1582, %v5586, %v5823
        %v6463 = vsel %vm1582, %v5469, %v5825
        %v6464 = vsel %vm1582, %v5587, %v5827
        %v6465 = vsel %vm1582, %v5472, %v5829
        %v6466 = vsel %vm1582, %v5588, %v5831
        %v6467 = vsel %vm1582, %v5475, %v5833
        %v6468 = vsel %vm1582, %v5589, %v5835
        %v6469 = vsel %vm1582, %v5478, %v5837
        %v6470 = vsel %vm1582, %v5590, %v5839
        %v6471 = vsel %vm1582, %v5481, %v5841
        %v6472 = vsel %vm1582, %v5591, %v5843
        %v6473 = vsel %vm1582, %v5484, %v5845
        %v6474 = vsel %vm1582, %v5592, %v5847
        %v6475 = vsel %vm1582, %v5487, %v5849
        %v6476 = vsel %vm1582, %v5593, %v5851
        %v6477 = vsel %vm1582, %v5490, %v5853
        %v6478 = vsel %vm1582, %v5594, %v5855
        %v6479 = vsel %vm1582, %v5493, %v5857
        %v6480 = vsel %vm1582, %v5595, %v5859
        %v6481 = vsel %vm1582, %v5496, %v5861
        %v6482 = vsel %vm1582, %v5596, %v5863
        %v6483 = vsel %vm1582, %v5499, %v5865
        %v6484 = vsel %vm1714, %v6454, %v5897
        %v6485 = vsel %vm1714, %v6455, %v5899
        %v6486 = vsel %vm1714, %v6456, %v5901
        %v6487 = vsel %vm1714, %v6457, %v5903
        %v6488 = vsel %vm1714, %v6458, %v5905
        %v6489 = vsel %vm1714, %v6459, %v5907
        %v6490 = vsel %vm1714, %v6460, %v5909
        %v6491 = vsel %vm1714, %v6461, %v5911
        %v6492 = vsel %vm1714, %v6462, %v5913
        %v6493 = vsel %vm1714, %v6463, %v5915
        %v6494 = vsel %vm1714, %v6464, %v5917
        %v6495 = vsel %vm1714, %v6465, %v5919
        %v6496 = vsel %vm1714, %v6466, %v5921
        %v6497 = vsel %vm1714, %v6467, %v5923
        %v6498 = vsel %vm1714, %v6468, %v5925
        %v6499 = vsel %vm1714, %v6469, %v5927
        %v6500 = vsel %vm1714, %v6470, %v5929
        %v6501 = vsel %vm1714, %v6471, %v5931
        %v6502 = vsel %vm1714, %v6472, %v5933
        %v6503 = vsel %vm1714, %v6473, %v5935
        %v6504 = vsel %vm1714, %v6474, %v5937
        %v6505 = vsel %vm1714, %v6475, %v5939
        %v6506 = vsel %vm1714, %v6476, %v5941
        %v6507 = vsel %vm1714, %v6477, %v5943
        %v6508 = vsel %vm1714, %v6478, %v5945
        %v6509 = vsel %vm1714, %v6479, %v5947
        %v6510 = vsel %vm1714, %v6480, %v5949
        %v6511 = vsel %vm1714, %v6481, %v5951
        %v6512 = vsel %vm1714, %v6482, %v5953
        %v6513 = vsel %vm1714, %v6483, %v5955
        %v6514 = vsel %vm3208, %v6484, %v5987
        %v6515 = vsel %vm3208, %v6485, %v5989
        %v6516 = vsel %vm3208, %v6484, %v5991
        %v6517 = vsel %vm3208, %v6485, %v5993
        %v6518 = vsel %vm3208, %v6486, %v5995
        %v6519 = vsel %vm3208, %v6487, %v5997
        %v6520 = vsel %vm3208, %v6488, %v5999
        %v6521 = vsel %vm3208, %v6489, %v6001
        %v6522 = vsel %vm3208, %v6490, %v6003
        %v6523 = vsel %vm3208, %v6491, %v6005
        %v6524 = vsel %vm3208, %v6492, %v6007
        %v6525 = vsel %vm3208, %v6493, %v6009
        %v6526 = vsel %vm3208, %v6494, %v6011
        %v6527 = vsel %vm3208, %v6495, %v6013
        %v6528 = vsel %vm3208, %v6496, %v6015
        %v6529 = vsel %vm3208, %v6497, %v6017
        %v6530 = vsel %vm3208, %v6498, %v6019
        %v6531 = vsel %vm3208, %v6499, %v6021
        %v6532 = vsel %vm3208, %v6500, %v6023
        %v6533 = vsel %vm3208, %v6501, %v6025
        %v6534 = vsel %vm3208, %v6502, %v6027
        %v6535 = vsel %vm3208, %v6503, %v6029
        %v6536 = vsel %vm3208, %v6504, %v6031
        %v6537 = vsel %vm3208, %v6505, %v6033
        %v6538 = vsel %vm3208, %v6506, %v6035
        %v6539 = vsel %vm3208, %v6507, %v6037
        %v6540 = vsel %vm3208, %v6508, %v6039
        %v6541 = vsel %vm3208, %v6509, %v6041
        %v6542 = vsel %vm3208, %v6510, %v6043
        %v6543 = vsel %vm3208, %v6511, %v6045
        %v6544 = vsel %vm3208, %v6512, %v6047
        %v6545 = vsel %vm3208, %v6513, %v6049
        %v6546 = vsel %vm3241, %v6514, %v6083
        %v6547 = vsel %vm3241, %v6515, %v6085
        %v6548 = vsel %vm3241, %v6516, %v6087
        %v6549 = vsel %vm3241, %v6517, %v6089
        %v6550 = vsel %vm3241, %v6518, %v6091
        %v6551 = vsel %vm3241, %v6519, %v6093
        %v6552 = vsel %vm3241, %v6520, %v6095
        %v6553 = vsel %vm3241, %v6521, %v6097
        %v6554 = vsel %vm3241, %v6522, %v6099
        %v6555 = vsel %vm3241, %v6523, %v6101
        %v6556 = vsel %vm3241, %v6524, %v6103
        %v6557 = vsel %vm3241, %v6525, %v6105
        %v6558 = vsel %vm3241, %v6526, %v6107
        %v6559 = vsel %vm3241, %v6527, %v6109
        %v6560 = vsel %vm3241, %v6528, %v6111
        %v6561 = vsel %vm3241, %v6529, %v6113
        %v6562 = vsel %vm3241, %v6530, %v6115
        %v6563 = vsel %vm3241, %v6531, %v6117
        %v6564 = vsel %vm3241, %v6532, %v6119
        %v6565 = vsel %vm3241, %v6533, %v6121
        %v6566 = vsel %vm3241, %v6534, %v6123
        %v6567 = vsel %vm3241, %v6535, %v6125
        %v6568 = vsel %vm3241, %v6536, %v6127
        %v6569 = vsel %vm3241, %v6537, %v6129
        %v6570 = vsel %vm3241, %v6538, %v6131
        %v6571 = vsel %vm3241, %v6539, %v6133
        %v6572 = vsel %vm3241, %v6540, %v6135
        %v6573 = vsel %vm3241, %v6541, %v6137
        %v6574 = vsel %vm3241, %v6542, %v6139
        %v6575 = vsel %vm3241, %v6543, %v6141
        %v6576 = vsel %vm3241, %v6544, %v6143
        %v6577 = vsel %vm3241, %v6545, %v6145
        %v6578 = vsel %vm3274, %v6546, %v6179
        %v6579 = vsel %vm3274, %v6547, %v6181
        %v6580 = vsel %vm3274, %v6548, %v6183
        %v6581 = vsel %vm3274, %v6549, %v6185
        %v6582 = vsel %vm3274, %v6550, %v6187
        %v6583 = vsel %vm3274, %v6551, %v6189
        %v6584 = vsel %vm3274, %v6552, %v6191
        %v6585 = vsel %vm3274, %v6553, %v6193
        %v6586 = vsel %vm3274, %v6554, %v6195
        %v6587 = vsel %vm3274, %v6555, %v6197
        %v6588 = vsel %vm3274, %v6556, %v6199
        %v6589 = vsel %vm3274, %v6557, %v6201
        %v6590 = vsel %vm3274, %v6558, %v6203
        %v6591 = vsel %vm3274, %v6559, %v6205
        %v6592 = vsel %vm3274, %v6560, %v6207
        %v6593 = vsel %vm3274, %v6561, %v6209
        %v6594 = vsel %vm3274, %v6562, %v6211
        %v6595 = vsel %vm3274, %v6563, %v6213
        %v6596 = vsel %vm3274, %v6564, %v6215
        %v6597 = vsel %vm3274, %v6565, %v6217
        %v6598 = vsel %vm3274, %v6566, %v6219
        %v6599 = vsel %vm3274, %v6567, %v6221
        %v6600 = vsel %vm3274, %v6568, %v6223
        %v6601 = vsel %vm3274, %v6569, %v6225
        %v6602 = vsel %vm3274, %v6570, %v6227
        %v6603 = vsel %vm3274, %v6571, %v6229
        %v6604 = vsel %vm3274, %v6572, %v6231
        %v6605 = vsel %vm3274, %v6573, %v6233
        %v6606 = vsel %vm3274, %v6574, %v6235
        %v6607 = vsel %vm3274, %v6575, %v6237
        %v6608 = vsel %vm3274, %v6576, %v6239
        %v6609 = vsel %vm3274, %v6577, %v6241
        %v6610 = vsel %vm3307, %v6578, %v6275
        %v6611 = vsel %vm3307, %v6579, %v6277
        %v6612 = vsel %vm3307, %v6580, %v6279
        %v6613 = vsel %vm3307, %v6581, %v6281
        %v6614 = vsel %vm3307, %v6582, %v6283
        %v6615 = vsel %vm3307, %v6583, %v6285
        %v6616 = vsel %vm3307, %v6584, %v6287
        %v6617 = vsel %vm3307, %v6585, %v6289
        %v6618 = vsel %vm3307, %v6586, %v6291
        %v6619 = vsel %vm3307, %v6587, %v6293
        %v6620 = vsel %vm3307, %v6588, %v6295
        %v6621 = vsel %vm3307, %v6589, %v6297
        %v6622 = vsel %vm3307, %v6590, %v6299
        %v6623 = vsel %vm3307, %v6591, %v6301
        %v6624 = vsel %vm3307, %v6592, %v6303
        %v6625 = vsel %vm3307, %v6593, %v6305
        %v6626 = vsel %vm3307, %v6594, %v6307
        %v6627 = vsel %vm3307, %v6595, %v6309
        %v6628 = vsel %vm3307, %v6596, %v6311
        %v6629 = vsel %vm3307, %v6597, %v6313
        %v6630 = vsel %vm3307, %v6598, %v6315
        %v6631 = vsel %vm3307, %v6599, %v6317
        %v6632 = vsel %vm3307, %v6600, %v6319
        %v6633 = vsel %vm3307, %v6601, %v6321
        %v6634 = vsel %vm3307, %v6602, %v6323
        %v6635 = vsel %vm3307, %v6603, %v6325
        %v6636 = vsel %vm3307, %v6604, %v6327
        %v6637 = vsel %vm3307, %v6605, %v6329
        %v6638 = vsel %vm3307, %v6606, %v6331
        %v6639 = vsel %vm3307, %v6607, %v6333
        %v6640 = vsel %vm3307, %v6608, %v6331
        %v6641 = vsel %vm3307, %v6609, %v6333
        %v6642 = vsel %vm3340, %v6610, %v6365
        %v6643 = vsel %vm3340, %v6611, %v6367
        %v6644 = vsel %vm3340, %v6612, %v6369
        %v6645 = vsel %vm3340, %v6613, %v6371
        %v6646 = vsel %vm3340, %v6614, %v6373
        %v6647 = vsel %vm3340, %v6615, %v6375
        %v6648 = vsel %vm3340, %v6616, %v6377
        %v6649 = vsel %vm3340, %v6617, %v6379
        %v6650 = vsel %vm3340, %v6618, %v6381
        %v6651 = vsel %vm3340, %v6619, %v6383
        %v6652 = vsel %vm3340, %v6620, %v6385
        %v6653 = vsel %vm3340, %v6621, %v6387
        %v6654 = vsel %vm3340, %v6622, %v6389
        %v6655 = vsel %vm3340, %v6623, %v6391
        %v6656 = vsel %vm3340, %v6624, %v6393
        %v6657 = vsel %vm3340, %v6625, %v6395
        %v6658 = vsel %vm3340, %v6626, %v6397
        %v6659 = vsel %vm3340, %v6627, %v6399
        %v6660 = vsel %vm3340, %v6628, %v6401
        %v6661 = vsel %vm3340, %v6629, %v6403
        %v6662 = vsel %vm3340, %v6630, %v6405
        %v6663 = vsel %vm3340, %v6631, %v6407
        %v6664 = vsel %vm3340, %v6632, %v6409
        %v6665 = vsel %vm3340, %v6633, %v6411
        %v6666 = vsel %vm3340, %v6634, %v6413
        %v6667 = vsel %vm3340, %v6635, %v6415
        %v6668 = vsel %vm3340, %v6636, %v6417
        %v6669 = vsel %vm3340, %v6637, %v6419
        %v6670 = vsel %vm3340, %v6638, %v6421
        %v6671 = vsel %vm3340, %v6639, %v6423
        %v6672 = vsel %vm3340, %v6640, %v6421
        %v6673 = vsel %vm3340, %v6641, %v6423
        %v6674 = vld [vmem:[%s7] sm:$0xff]
        %v6675 = vld [vmem:[%s8] sm:$0xf]
        %6677 = vset.pattern.permute.xlu0 0
        %6678 = vperm.xlu0 %6677, %v6675
        %v6679 = vpop.permute.xlu0 %6678
        %v6682 = vcombine.high %v6674, %v6674
        %v6683 = vsel %vm1582, %v6682, 0
        %v6685 = vsel %vm1582, %v5726, 0
        %v6687 = vsel %vm1582, %v5728, 0
        %v6689 = vsel %vm1582, %v5731, 0
        %v6691 = vsel %vm1582, %v5733, 0
        %v6693 = vsel %vm1582, %v5736, 0
        %v6695 = vsel %vm1582, %v5738, 0
        %v6697 = vsel %vm1582, %v5741, 0
        %v6699 = vsel %vm1582, %v5743, 0
        %v6701 = vsel %vm1582, %v5746, 0
        %v6703 = vsel %vm1582, %v5748, 0
        %v6705 = vsel %vm1582, %v5751, 0
        %v6707 = vsel %vm1582, %v5753, 0
        %v6709 = vsel %vm1582, %v5756, 0
        %v6711 = vsel %vm1582, %v5758, 0
        %v6713 = vsel %vm1582, %v5761, 0
        %v6715 = vsel %vm1582, %v5763, 0
        %v6717 = vsel %vm1582, %v5766, 0
        %v6719 = vsel %vm1582, %v5768, 0
        %v6721 = vsel %vm1582, %v5771, 0
        %v6723 = vsel %vm1582, %v5773, 0
        %v6725 = vsel %vm1582, %v5776, 0
        %v6727 = vsel %vm1582, %v5778, 0
        %v6729 = vsel %vm1582, %v5781, 0
        %v6731 = vsel %vm1582, %v5783, 0
        %v6733 = vsel %vm1582, %v5786, 0
        %v6735 = vsel %vm1582, %v5788, 0
        %v6737 = vsel %vm1582, %v5791, 0
        %v6739 = vsel %vm1582, %v5793, 0
        %v6741 = vsel %vm1582, %v5803, 0
        %v6743 = vsel %vm1582, %v5805, 0
        %6745 = vmatprep.subr.mxu0 %v6715
        %6746 = vmatpush1.xpose.msra.mxu0 %v6657
        %6747 = vmatprep.subr.mxu0 %v6713
        %6748 = vmatpush1.xpose.msra.mxu0 %v6656
        %6749 = vmatprep.subr.mxu0 %v6711
        %6750 = vmatpush1.xpose.msra.mxu0 %v6655
        %6751 = vmatprep.subr.mxu0 %v6709
        %6752 = vmatpush1.xpose.msra.mxu0 %v6654
        %6753 = vmatprep.subr.mxu0 %v6707
        %6754 = vmatpush1.xpose.msra.mxu0 %v6653
        %6755 = vmatprep.subr.mxu0 %v6705
        %6756 = vmatpush1.xpose.msra.mxu0 %v6652
        %6757 = vmatprep.subr.mxu0 %v6703
        %6758 = vmatpush1.xpose.msra.mxu0 %v6651
        %6759 = vmatprep.subr.mxu0 %v6701
        %6760 = vmatpush1.xpose.msra.mxu0 %v6650
        %6761 = vmatprep.subr.mxu0 %v6699
        %6762 = vmatpush1.xpose.msra.mxu0 %v6649
        %6763 = vmatprep.subr.mxu0 %v6697
        %6764 = vmatpush1.xpose.msra.mxu0 %v6648
        %6765 = vmatprep.subr.mxu0 %v6695
        %6766 = vmatpush1.xpose.msra.mxu0 %v6647
        %6767 = vmatprep.subr.mxu0 %v6693
        %6768 = vmatpush1.xpose.msra.mxu0 %v6646
        %6769 = vmatprep.subr.mxu0 %v6691
        %6770 = vmatpush1.xpose.msra.mxu0 %v6645
        %6771 = vmatprep.subr.mxu0 %v6689
        %6772 = vmatpush1.xpose.msra.mxu0 %v6644
        %6773 = vmatprep.subr.mxu0 %v6687
        %6774 = vmatpush1.xpose.msra.mxu0 %v6643
        %6775 = vmatprep.subr.mxu0 %v6685
        %6776 = vmatpush1.xpose.msra.mxu0 %v6642
        %6777 = vmatprep.subr.mxu0 %v6743
        %6778 = vmatpush2.xpose.msra.mxu0 %v6673
        %6779 = vmatprep.subr.mxu0 %v6741
        %6780 = vmatpush2.xpose.msra.mxu0 %v6672
        %6781 = vmatprep.subr.mxu0 %v6743
        %6782 = vmatpush2.xpose.msra.mxu0 %v6671
        %6783 = vmatprep.subr.mxu0 %v6741
        %6784 = vmatpush2.xpose.msra.mxu0 %v6670
        %6785 = vmatprep.subr.mxu0 %v6739
        %6786 = vmatpush2.xpose.msra.mxu0 %v6669
        %6787 = vmatprep.subr.mxu0 %v6737
        %6788 = vmatpush2.xpose.msra.mxu0 %v6668
        %6789 = vmatprep.subr.mxu0 %v6735
        %6790 = vmatpush2.xpose.msra.mxu0 %v6667
        %6791 = vmatprep.subr.mxu0 %v6733
        %6792 = vmatpush2.xpose.msra.mxu0 %v6666
        %6793 = vmatprep.subr.mxu0 %v6731
        %6794 = vmatpush2.xpose.msra.mxu0 %v6665
        %6795 = vmatprep.subr.mxu0 %v6729
        %6796 = vmatpush2.xpose.msra.mxu0 %v6664
        %6797 = vmatprep.subr.mxu0 %v6727
        %6798 = vmatpush2.xpose.msra.mxu0 %v6663
        %6799 = vmatprep.subr.mxu0 %v6725
        %6800 = vmatpush2.xpose.msra.mxu0 %v6662
        %6801 = vmatprep.subr.mxu0 %v6723
        %6802 = vmatpush2.xpose.msra.mxu0 %v6661
        %6803 = vmatprep.subr.mxu0 %v6721
        %6804 = vmatpush2.xpose.msra.mxu0 %v6660
        %6805 = vmatprep.subr.mxu0 %v6719
        %6806 = vmatpush2.xpose.msra.mxu0 %v6659
        %6807 = vmatprep.subr.mxu0 %v6717
        %6808 = vmatpush2.xpose.msra.mxu0 %v6658
        %6809 = vmatprep.mubr.f32.mxu0 %v6683
        %6810 = vmatmul.mubr.f32.gmra.mxu0 %v6674
        %v6811 = vpop.f32.mrf.mxu0
        %v6812 = vadd.f32 %v6679, %v6811
        %v6813 = vpop.f32.mrf.mxu0
        %v6814 = vadd.f32 %v6679, %v6813
        %6815 = vdwg.mxu0
        %v6818 = vcombine.low %v6812, %v6814
        %6820 = vst [vmem:[%s325] sm:$0xff] %v6818
        %s6821 = sand.u32 %s225, 1
        %s6822 = scalar_lea.sflag [#allocation3], %s6821
        %s6823 = sand.u32 %s225, 1
        %s6824 = smul.addr %s6823, 8
        %s6825 = scalar_lea.vmem [#allocation2], %s6824
        // Predicated region
        $region57: #{tpu_custom_call.1} parent=55 // pred_check
          %p6826 = pneg %p235
        $region58: #{tpu_custom_call.1} parent=55 // pred_check_branch
          %6828 = sbr.rel (%p6826) target = $region60
        $region59: #{tpu_custom_call.1} parent=55 // pred_region
          %s6830 = ssub.s32 128, 128
          %6831 = vsyncadd %s6822, %s6830
          %s6832 = smul.addr %s23, 2
          %s6833 = smul.addr %s6832, 64
          %s6834 = scalar_lea.hbm %s9, %s6833
          %s6836 = sshll.u32 %s6825, 4
          %s6837 = int_to_ptr.vmem [resolvable:$true] %s6836
          %6839 = dma.vmem_to_hbm [thread:$0]  %s6837, 128, %s6834, %s6822
        $region60: #{tpu_custom_call.1} parent=55 // pred_fallthru
          _
      $region56: #{tpu_custom_call.1} parent=5 // pred_fallthru
        _
      %p6840 = scmp.le.s32.totalorder 2, %s18
      // Predicated region
      $region61: #{tpu_custom_call.1} parent=5 // pred_check
        %p6841 = pneg %p6840
      $region62: #{tpu_custom_call.1} parent=5 // pred_check_branch
        %6843 = sbr.rel (%p6841) target = $region64
      $region63: #{tpu_custom_call.1} parent=5 // pred_region
        %s6844 = ssub.s32 %s18, 2
        // Predicated region
        $region65: #{tpu_custom_call.1} parent=63 // pred_check
          %p6845 = pneg %p241
        $region66: #{tpu_custom_call.1} parent=63 // pred_check_branch
          %6847 = sbr.rel (%p6845) target = $region68
        $region67: #{tpu_custom_call.1} parent=63 // pred_region
          %s6848 = sand.u32 %s226, 1
          %s6849 = scalar_lea.sflag [#allocation3], %s6848
          %s6850 = sand.u32 %s226, 1
          %s6851 = smul.addr %s6850, 8
          %s6852 = scalar_lea.vmem [#allocation2], %s6851
          %6853 = dma.done %s6849, 128
        $region68: #{tpu_custom_call.1} parent=63 // pred_fallthru
          _
      $region64: #{tpu_custom_call.1} parent=5 // pred_fallthru
        _
    $region6: #{tpu_custom_call.1} parent=1 // loop_footer
      %s22 = sadd.s32 1, %s18
    $region7: #{tpu_custom_call.1} parent=1 // loop_footer_branch
      %17 = sbr.rel target = $region3
    $region8: #{tpu_custom_call.1} parent=1 // loop_exit
      _
    %6854 = vsyncpa [#allocation3], 1
    %s6855 = scalar_lea.sflag [#allocation3], 1
    %6856 = vsyncpa %s6855, 1

</llo_original>
